<compile_context>
chip_gen: v7x
topology: tpu7x:2x2x1
jax: 0.10.0
libtpu: 0.0.40
codegen_flags: <defaults>
</compile_context>

<pallas_src>
import functools

import jax
import jax.numpy as jnp
from jax.experimental import pallas as pl
from jax.experimental.pallas import tpu as pltpu

LANE = 128  # channel dims padded to multiples of this (vreg lane width)


# ----------------------------- Pallas kernel --------------------------------
def _basic_block_kernel(*refs, stride, has_proj, Ho, Wo, Cip, Cop):
    if has_proj:
        (x_ref, w1_ref, b1_ref, w2_ref, b2_ref,
         wid_ref, bid_ref, o_ref, h1p_ref) = refs
    else:
        x_ref, w1_ref, b1_ref, w2_ref, b2_ref, o_ref, h1p_ref = refs
        wid_ref = bid_ref = None

    M = Ho * Wo

    # ---- conv1 (3x3, stride=s) + bn1 (scale folded into w1) + relu ---------
    acc1 = jnp.zeros((M, Cop), jnp.float32)
    for i in range(3):
        for j in range(3):
            ph = (i % stride) * stride + (j % stride)   # phase tensor index
            qi, qj = i // stride, j // stride           # offset inside phase
            xt = x_ref[ph, pl.ds(qi, Ho), pl.ds(qj, Wo), :].reshape(M, Cip)
            acc1 = acc1 + jnp.dot(xt, w1_ref[i * 3 + j],
                                  preferred_element_type=jnp.float32)
    h1 = jnp.maximum(acc1 + b1_ref[...], 0.0)           # (M, Cop) f32

    # ---- stash zero-padded h1 (bf16) in VMEM scratch for conv2 -------------
    # (Zero every step: with a "parallel" grid axis each core owns its own
    #  scratch, so a program_id==0 guard would not be safe.)
    h1p_ref[...] = jnp.zeros(h1p_ref.shape, h1p_ref.dtype)
    h1p_ref[pl.ds(1, Ho), pl.ds(1, Wo), :] = (
        h1.reshape(Ho, Wo, Cop).astype(h1p_ref.dtype))

    # ---- conv2 (3x3, stride=1) + bn2 (scale folded into w2) ----------------
    acc2 = jnp.zeros((M, Cop), jnp.float32)
    for i in range(3):
        for j in range(3):
            ht = h1p_ref[pl.ds(i, Ho), pl.ds(j, Wo), :].reshape(M, Cop)
            acc2 = acc2 + jnp.dot(ht, w2_ref[i * 3 + j],
                                  preferred_element_type=jnp.float32)
    out = acc2 + b2_ref[...]

    # ---- identity branch ----------------------------------------------------
    # x[s*ho, s*wo] lives in phase (1%s, 1%s) at window offset (1//s, 1//s)
    # of the padded/phase-decomposed input.
    q, r = 1 // stride, 1 % stride
    ph_id = r * stride + r
    xi = x_ref[ph_id, pl.ds(q, Ho), pl.ds(q, Wo), :].reshape(M, Cip)
    if has_proj:
        out = out + jnp.dot(xi, wid_ref[...], preferred_element_type=jnp.float32)
        out = out + bid_ref[...]
    else:
        out = out + xi.astype(jnp.float32)   # Cip == Cop here

    out = jnp.maximum(out, 0.0)
    o_ref[...] = out.reshape(1, Ho, Wo, Cop).astype(o_ref.dtype)


def basic_block_pallas(x_phases, w1, b1, w2, b2, wid, bid, *,
                       stride, N, Ho, Wo, out_dtype=jnp.float32):
    ss = stride * stride
    _, Hph, Wph, Cip = x_phases.shape
    Cop = w1.shape[-1]
    has_proj = wid is not None

    kernel = functools.partial(_basic_block_kernel, stride=stride,
                               has_proj=has_proj, Ho=Ho, Wo=Wo,
                               Cip=Cip, Cop=Cop)

    in_specs = [
        pl.BlockSpec((ss, Hph, Wph, Cip), lambda n: (n, 0, 0, 0)),   # phases
        pl.BlockSpec((9, Cip, Cop), lambda n: (0, 0, 0)),            # w1 (resident)
        pl.BlockSpec((1, Cop), lambda n: (0, 0)),                    # b1
        pl.BlockSpec((9, Cop, Cop), lambda n: (0, 0, 0)),            # w2 (resident)
        pl.BlockSpec((1, Cop), lambda n: (0, 0)),                    # b2
    ]
    args = [x_phases, w1, b1, w2, b2]
    if has_proj:
        in_specs += [pl.BlockSpec((Cip, Cop), lambda n: (0, 0)),     # wid (resident)
                     pl.BlockSpec((1, Cop), lambda n: (0, 0))]       # bid
        args += [wid, bid]

    return pl.pallas_call(
        kernel,
        out_shape=jax.ShapeDtypeStruct((N, Ho, Wo, Cop), out_dtype),
        grid_spec=pltpu.PrefetchScalarGridSpec(
            num_scalar_prefetch=0,
            grid=(N,),
            in_specs=in_specs,
            out_specs=pl.BlockSpec((1, Ho, Wo, Cop), lambda n: (n, 0, 0, 0)),
            scratch_shapes=[pltpu.VMEM((Ho + 2, Wo + 2, Cop), jnp.bfloat16)],
        ),
        compiler_params=pltpu.CompilerParams(
            dimension_semantics=("parallel",)),
    )(*args)


# ------------------------------ host-side prep -------------------------------
def _round_up(x, m):
    return ((x + m - 1) // m) * m


def _pad_last(a, target):
    pad = target - a.shape[-1]
    if pad:
        a = jnp.pad(a, [(0, 0)] * (a.ndim - 1) + [(0, pad)])
    return a


def _fold_bn(gamma, beta, mean, var, eps=1e-5):
    scale = gamma / jnp.sqrt(var + eps)
    bias = beta - mean * scale
    return scale, bias


def _conv_w_to_taps(w_oihw, scale, cin_p, cout_p):
    """PyTorch (Co,Ci,kh,kw) -> (kh*kw, cin_p, cout_p) bf16 with BN scale folded."""
    Co, Ci, kh, kw = w_oihw.shape
    w = jnp.transpose(w_oihw, (2, 3, 1, 0)).reshape(kh * kw, Ci, Co)
    w = w * scale.reshape(1, 1, Co)                       # fold BN scale (f32)
    w = jnp.pad(w, ((0, 0), (0, cin_p - Ci), (0, cout_p - Co)))
    return w.astype(jnp.bfloat16)


def _make_phases(x_nhwc, stride, Ho, Wo):
    """Spatially pad by 1 and split into stride*stride phase tensors.

    Returns (N*stride*stride, Hph, Wph, C); phase index ri*stride + rj, so that
    conv tap (i, j) reads phase ((i%s)*s + j%s) at window offset (i//s, j//s).
    """
    xp = jnp.pad(x_nhwc, ((0, 0), (1, 1), (1, 1), (0, 0)))
    extra = 2 // stride
    Hph, Wph = Ho + extra, Wo + extra
    phases = []
    for ri in range(stride):
        for rj in range(stride):
            ph = xp[:, ri::stride, rj::stride, :][:, :Hph, :Wph, :]
            pr, pc = Hph - ph.shape[1], Wph - ph.shape[2]
            if pr or pc:
                ph = jnp.pad(ph, ((0, 0), (0, pr), (0, pc), (0, 0)))
            phases.append(ph)
    x_ph = jnp.stack(phases, axis=1)                      # (N, s*s, Hph, Wph, C)
    N, ss, _, _, C = x_ph.shape
    return x_ph.reshape(N * ss, Hph, Wph, C)


def basic_block_forward(x_nchw, params, stride):
    """BasicBlock forward. Input/output NCHW; conv math in NHWC Pallas kernel."""
    assert stride in (1, 2), "ResNet BasicBlock uses stride 1 or 2"
    x = jnp.transpose(x_nchw, (0, 2, 3, 1))               # NHWC
    N, H, W, Ci = x.shape
    Co = params["w1"].shape[0]
    if stride == 1:
        assert Ci == Co, "stride==1 BasicBlock requires in_size == out_size"
    Ho = (H + 2 - 3) // stride + 1
    Wo = (W + 2 - 3) // stride + 1

    Cip = _round_up(Ci, LANE)
    Cop = _round_up(Co, LANE)

    # bf16 activations, zero-padded channels (lane-dense), phase-decomposed.
    x_ph = _make_phases(_pad_last(x, Cip).astype(jnp.bfloat16), stride, Ho, Wo)

    s1, b1 = _fold_bn(*params["bn1"])
    s2, b2 = _fold_bn(*params["bn2"])
    w1 = _conv_w_to_taps(params["w1"], s1, Cip, Cop)
    w2 = _conv_w_to_taps(params["w2"], s2, Cop, Cop)
    b1 = _pad_last(b1.reshape(1, -1), Cop).astype(jnp.float32)
    b2 = _pad_last(b2.reshape(1, -1), Cop).astype(jnp.float32)

    if stride != 1:
        sid, bid = _fold_bn(*params["bnid"])
        wid = _conv_w_to_taps(params["wid"], sid, Cip, Cop)[0]   # (Cip, Cop)
        bid = _pad_last(bid.reshape(1, -1), Cop).astype(jnp.float32)
    else:
        wid = bid = None

    out = basic_block_pallas(x_ph, w1, b1, w2, b2, wid, bid,
                             stride=stride, N=N, Ho=Ho, Wo=Wo)
    out = out[:, :, :, :Co]                                # drop channel pad
    return jnp.transpose(out, (0, 3, 1, 2))                # back to NCHW


# ------------------------------ params & reference ---------------------------
def init_params(key, in_size, out_size, stride):
    ks = jax.random.split(key, 8)
    p = {
        "w1": 0.1 * jax.random.normal(ks[0], (out_size, in_size, 3, 3), jnp.float32),
        "w2": 0.1 * jax.random.normal(ks[1], (out_size, out_size, 3, 3), jnp.float32),
        "bn1": (jax.random.normal(ks[2], (out_size,)) * 0.1 + 1.0,   # gamma
                jax.random.normal(ks[3], (out_size,)) * 0.1,         # beta
                jax.random.normal(ks[4], (out_size,)) * 0.1,         # running_mean
                jnp.abs(jax.random.normal(ks[5], (out_size,))) * 0.1 + 1.0),  # var
        "bn2": (jnp.ones((out_size,)), jnp.zeros((out_size,)),
                jnp.zeros((out_size,)), jnp.ones((out_size,))),
    }
    if stride != 1:
        p["wid"] = 0.1 * jax.random.normal(ks[6], (out_size, in_size, 1, 1), jnp.float32)
        p["bnid"] = (jnp.ones((out_size,)), jnp.zeros((out_size,)),
                     jnp.zeros((out_size,)), jnp.ones((out_size,)))
    return p


def _ref_conv(x_nchw, w_oihw, stride, pad):
    return jax.lax.conv_general_dilated(
        x_nchw, w_oihw, window_strides=(stride, stride),
        padding=((pad, pad), (pad, pad)),
        dimension_numbers=("NCHW", "OIHW", "NCHW"))


def _ref_bn(x_nchw, bn, eps=1e-5):
    g, b, m, v = (p.reshape(1, -1, 1, 1) for p in bn)
    return (x_nchw - m) / jnp.sqrt(v + eps) * g + b


def basic_block_reference(x_nchw, params, stride):
    if stride != 1:
        ident = _ref_bn(_ref_conv(x_nchw, params["wid"], stride, 0), params["bnid"])
    else:
        ident = x_nchw
    h = jax.nn.relu(_ref_bn(_ref_conv(x_nchw, params["w1"], stride, 1), params["bn1"]))
    h = _ref_bn(_ref_conv(h, params["w2"], 1, 1), params["bn2"])
    return jax.nn.relu(h + ident)


def _check(out, ref, tag):
    err = float(jnp.max(jnp.abs(out - ref)))
    scale = float(jnp.max(jnp.abs(ref))) + 1.0
    assert err < 5e-2 * scale, f"{tag}: max abs err {err} (scale {scale})"


# --------------------------------- main ---------------------------------------
if __name__ == "__main__":
    key = jax.random.PRNGKey(0)
    k_x, k_p, k_x1, k_p1 = jax.random.split(key, 4)

    fwd = jax.jit(basic_block_forward, static_argnums=2)

    # ---- stride-2 block with 1x1-conv projection identity --------------------
    N, C_in, H, W = 2, 4, 16, 16
    C_out, stride = 8, 2
    x = jax.random.normal(k_x, (N, C_in, H, W), jnp.float32)
    params = init_params(k_p, C_in, C_out, stride)
    out = jax.block_until_ready(fwd(x, params, stride))
    ref = basic_block_reference(x, params, stride)
    assert out.shape == (N, C_out, H // stride, W // stride), out.shape
    _check(out, ref, "stride-2")    # bf16-matmul tolerance

    # ---- stride-1 block (plain identity) -------------------------------------
    C1 = 8
    x1 = jax.random.normal(k_x1, (N, C1, H, W), jnp.float32)
    params1 = init_params(k_p1, C1, C1, 1)
    out1 = jax.block_until_ready(fwd(x1, params1, 1))
    ref1 = basic_block_reference(x1, params1, 1)
    assert out1.shape == (N, C1, H, W), out1.shape
    _check(out1, ref1, "stride-1")

    print("KERNEL_OK")
</pallas_src>

<mosaic_0001>
module attributes {stable_mosaic.version = 11 : i64} {
  func.func @_basic_block_kernel(%arg0: i32, %arg1: memref<4x9x9x128xbf16, #tpu.memory_space<vmem>>, %arg2: memref<9x128x128xbf16, #tpu.memory_space<vmem>>, %arg3: memref<1x128xf32, #tpu.memory_space<vmem>>, %arg4: memref<9x128x128xbf16, #tpu.memory_space<vmem>>, %arg5: memref<1x128xf32, #tpu.memory_space<vmem>>, %arg6: memref<128x128xbf16, #tpu.memory_space<vmem>>, %arg7: memref<1x128xf32, #tpu.memory_space<vmem>>, %arg8: memref<1x8x8x128xf32, #tpu.memory_space<vmem>>, %arg9: memref<10x10x128xbf16, #tpu.memory_space<vmem>>) attributes {dimension_semantics = [#tpu.dimension_semantics<parallel>], iteration_bounds = array<i64: 2>, scalar_prefetch = 0 : i64, scratch_operands = 1 : i64, tpu.core_type = #tpu.core_type<tc>, window_params = [{transform_indices = @transform_0, window_bounds = array<i64: 4, 9, 9, 128>}, {pipeline_mode = #tpu.pipeline_mode<synchronous>, transform_indices = @transform_1, window_bounds = array<i64: 9, 128, 128>}, {pipeline_mode = #tpu.pipeline_mode<synchronous>, transform_indices = @transform_2, window_bounds = array<i64: 1, 128>}, {pipeline_mode = #tpu.pipeline_mode<synchronous>, transform_indices = @transform_3, window_bounds = array<i64: 9, 128, 128>}, {pipeline_mode = #tpu.pipeline_mode<synchronous>, transform_indices = @transform_4, window_bounds = array<i64: 1, 128>}, {pipeline_mode = #tpu.pipeline_mode<synchronous>, transform_indices = @transform_5, window_bounds = array<i64: 128, 128>}, {pipeline_mode = #tpu.pipeline_mode<synchronous>, transform_indices = @transform_6, window_bounds = array<i64: 1, 128>}, {transform_indices = @transform_7, window_bounds = array<i64: 1, 8, 8, 128>}]} {
    %cst = arith.constant 0.000000e+00 : f32
    %0 = vector.broadcast %cst : f32 to vector<64x128xf32>
    %c0 = arith.constant 0 : index
    %c0_0 = arith.constant 0 : index
    %c0_1 = arith.constant 0 : index
    %c0_2 = arith.constant 0 : index
    %1 = vector.load %arg1[%c0, %c0_0, %c0_1, %c0_2] : memref<4x9x9x128xbf16, #tpu.memory_space<vmem>>, vector<1x8x8x128xbf16>
    %2 = vector.shape_cast %1 : vector<1x8x8x128xbf16> to vector<8x8x128xbf16>
    %3 = vector.shape_cast %2 : vector<8x8x128xbf16> to vector<64x128xbf16>
    %c0_3 = arith.constant 0 : index
    %c0_4 = arith.constant 0 : index
    %c0_5 = arith.constant 0 : index
    %4 = vector.load %arg2[%c0_3, %c0_4, %c0_5] : memref<9x128x128xbf16, #tpu.memory_space<vmem>>, vector<1x128x128xbf16>
    %5 = vector.shape_cast %4 : vector<1x128x128xbf16> to vector<128x128xbf16>
    %cst_6 = arith.constant dense<0.000000e+00> : vector<64x128xf32>
    %6 = tpu.matmul %3, %5, %cst_6 {dimension_numbers = #tpu.dot_dimension_numbers<[1], [0], [0], [1], [0, 0, 1, 1], [], []>} : vector<64x128xbf16>, vector<128x128xbf16>, vector<64x128xf32> -> vector<64x128xf32>
    %7 = arith.addf %0, %6 : vector<64x128xf32>
    %c1 = arith.constant 1 : index
    %c0_7 = arith.constant 0 : index
    %c0_8 = arith.constant 0 : index
    %c0_9 = arith.constant 0 : index
    %8 = vector.load %arg1[%c1, %c0_7, %c0_8, %c0_9] : memref<4x9x9x128xbf16, #tpu.memory_space<vmem>>, vector<1x8x8x128xbf16>
    %9 = vector.shape_cast %8 : vector<1x8x8x128xbf16> to vector<8x8x128xbf16>
    %10 = vector.shape_cast %9 : vector<8x8x128xbf16> to vector<64x128xbf16>
    %c1_10 = arith.constant 1 : index
    %c0_11 = arith.constant 0 : index
    %c0_12 = arith.constant 0 : index
    %11 = vector.load %arg2[%c1_10, %c0_11, %c0_12] : memref<9x128x128xbf16, #tpu.memory_space<vmem>>, vector<1x128x128xbf16>
    %12 = vector.shape_cast %11 : vector<1x128x128xbf16> to vector<128x128xbf16>
    %cst_13 = arith.constant dense<0.000000e+00> : vector<64x128xf32>
    %13 = tpu.matmul %10, %12, %cst_13 {dimension_numbers = #tpu.dot_dimension_numbers<[1], [0], [0], [1], [0, 0, 1, 1], [], []>} : vector<64x128xbf16>, vector<128x128xbf16>, vector<64x128xf32> -> vector<64x128xf32>
    %14 = arith.addf %7, %13 : vector<64x128xf32>
    %c0_14 = arith.constant 0 : index
    %c0_15 = arith.constant 0 : index
    %c1_16 = arith.constant 1 : index
    %c0_17 = arith.constant 0 : index
    %15 = vector.load %arg1[%c0_14, %c0_15, %c1_16, %c0_17] : memref<4x9x9x128xbf16, #tpu.memory_space<vmem>>, vector<1x8x8x128xbf16>
    %16 = vector.shape_cast %15 : vector<1x8x8x128xbf16> to vector<8x8x128xbf16>
    %17 = vector.shape_cast %16 : vector<8x8x128xbf16> to vector<64x128xbf16>
    %c2 = arith.constant 2 : index
    %c0_18 = arith.constant 0 : index
    %c0_19 = arith.constant 0 : index
    %18 = vector.load %arg2[%c2, %c0_18, %c0_19] : memref<9x128x128xbf16, #tpu.memory_space<vmem>>, vector<1x128x128xbf16>
    %19 = vector.shape_cast %18 : vector<1x128x128xbf16> to vector<128x128xbf16>
    %cst_20 = arith.constant dense<0.000000e+00> : vector<64x128xf32>
    %20 = tpu.matmul %17, %19, %cst_20 {dimension_numbers = #tpu.dot_dimension_numbers<[1], [0], [0], [1], [0, 0, 1, 1], [], []>} : vector<64x128xbf16>, vector<128x128xbf16>, vector<64x128xf32> -> vector<64x128xf32>
    %21 = arith.addf %14, %20 : vector<64x128xf32>
    %c2_21 = arith.constant 2 : index
    %c0_22 = arith.constant 0 : index
    %c0_23 = arith.constant 0 : index
    %c0_24 = arith.constant 0 : index
    %22 = vector.load %arg1[%c2_21, %c0_22, %c0_23, %c0_24] : memref<4x9x9x128xbf16, #tpu.memory_space<vmem>>, vector<1x8x8x128xbf16>
    %23 = vector.shape_cast %22 : vector<1x8x8x128xbf16> to vector<8x8x128xbf16>
    %24 = vector.shape_cast %23 : vector<8x8x128xbf16> to vector<64x128xbf16>
    %c3 = arith.constant 3 : index
    %c0_25 = arith.constant 0 : index
    %c0_26 = arith.constant 0 : index
    %25 = vector.load %arg2[%c3, %c0_25, %c0_26] : memref<9x128x128xbf16, #tpu.memory_space<vmem>>, vector<1x128x128xbf16>
    %26 = vector.shape_cast %25 : vector<1x128x128xbf16> to vector<128x128xbf16>
    %cst_27 = arith.constant dense<0.000000e+00> : vector<64x128xf32>
    %27 = tpu.matmul %24, %26, %cst_27 {dimension_numbers = #tpu.dot_dimension_numbers<[1], [0], [0], [1], [0, 0, 1, 1], [], []>} : vector<64x128xbf16>, vector<128x128xbf16>, vector<64x128xf32> -> vector<64x128xf32>
    %28 = arith.addf %21, %27 : vector<64x128xf32>
    %c3_28 = arith.constant 3 : index
    %c0_29 = arith.constant 0 : index
    %c0_30 = arith.constant 0 : index
    %c0_31 = arith.constant 0 : index
    %29 = vector.load %arg1[%c3_28, %c0_29, %c0_30, %c0_31] : memref<4x9x9x128xbf16, #tpu.memory_space<vmem>>, vector<1x8x8x128xbf16>
    %30 = vector.shape_cast %29 : vector<1x8x8x128xbf16> to vector<8x8x128xbf16>
    %31 = vector.shape_cast %30 : vector<8x8x128xbf16> to vector<64x128xbf16>
    %c4 = arith.constant 4 : index
    %c0_32 = arith.constant 0 : index
    %c0_33 = arith.constant 0 : index
    %32 = vector.load %arg2[%c4, %c0_32, %c0_33] : memref<9x128x128xbf16, #tpu.memory_space<vmem>>, vector<1x128x128xbf16>
    %33 = vector.shape_cast %32 : vector<1x128x128xbf16> to vector<128x128xbf16>
    %cst_34 = arith.constant dense<0.000000e+00> : vector<64x128xf32>
    %34 = tpu.matmul %31, %33, %cst_34 {dimension_numbers = #tpu.dot_dimension_numbers<[1], [0], [0], [1], [0, 0, 1, 1], [], []>} : vector<64x128xbf16>, vector<128x128xbf16>, vector<64x128xf32> -> vector<64x128xf32>
    %35 = arith.addf %28, %34 : vector<64x128xf32>
    %c2_35 = arith.constant 2 : index
    %c0_36 = arith.constant 0 : index
    %c1_37 = arith.constant 1 : index
    %c0_38 = arith.constant 0 : index
    %36 = vector.load %arg1[%c2_35, %c0_36, %c1_37, %c0_38] : memref<4x9x9x128xbf16, #tpu.memory_space<vmem>>, vector<1x8x8x128xbf16>
    %37 = vector.shape_cast %36 : vector<1x8x8x128xbf16> to vector<8x8x128xbf16>
    %38 = vector.shape_cast %37 : vector<8x8x128xbf16> to vector<64x128xbf16>
    %c5 = arith.constant 5 : index
    %c0_39 = arith.constant 0 : index
    %c0_40 = arith.constant 0 : index
    %39 = vector.load %arg2[%c5, %c0_39, %c0_40] : memref<9x128x128xbf16, #tpu.memory_space<vmem>>, vector<1x128x128xbf16>
    %40 = vector.shape_cast %39 : vector<1x128x128xbf16> to vector<128x128xbf16>
    %cst_41 = arith.constant dense<0.000000e+00> : vector<64x128xf32>
    %41 = tpu.matmul %38, %40, %cst_41 {dimension_numbers = #tpu.dot_dimension_numbers<[1], [0], [0], [1], [0, 0, 1, 1], [], []>} : vector<64x128xbf16>, vector<128x128xbf16>, vector<64x128xf32> -> vector<64x128xf32>
    %42 = arith.addf %35, %41 : vector<64x128xf32>
    %c0_42 = arith.constant 0 : index
    %c1_43 = arith.constant 1 : index
    %c0_44 = arith.constant 0 : index
    %c0_45 = arith.constant 0 : index
    %43 = vector.load %arg1[%c0_42, %c1_43, %c0_44, %c0_45] : memref<4x9x9x128xbf16, #tpu.memory_space<vmem>>, vector<1x8x8x128xbf16>
    %44 = vector.shape_cast %43 : vector<1x8x8x128xbf16> to vector<8x8x128xbf16>
    %45 = vector.shape_cast %44 : vector<8x8x128xbf16> to vector<64x128xbf16>
    %c6 = arith.constant 6 : index
    %c0_46 = arith.constant 0 : index
    %c0_47 = arith.constant 0 : index
    %46 = vector.load %arg2[%c6, %c0_46, %c0_47] : memref<9x128x128xbf16, #tpu.memory_space<vmem>>, vector<1x128x128xbf16>
    %47 = vector.shape_cast %46 : vector<1x128x128xbf16> to vector<128x128xbf16>
    %cst_48 = arith.constant dense<0.000000e+00> : vector<64x128xf32>
    %48 = tpu.matmul %45, %47, %cst_48 {dimension_numbers = #tpu.dot_dimension_numbers<[1], [0], [0], [1], [0, 0, 1, 1], [], []>} : vector<64x128xbf16>, vector<128x128xbf16>, vector<64x128xf32> -> vector<64x128xf32>
    %49 = arith.addf %42, %48 : vector<64x128xf32>
    %c1_49 = arith.constant 1 : index
    %c1_50 = arith.constant 1 : index
    %c0_51 = arith.constant 0 : index
    %c0_52 = arith.constant 0 : index
    %50 = vector.load %arg1[%c1_49, %c1_50, %c0_51, %c0_52] : memref<4x9x9x128xbf16, #tpu.memory_space<vmem>>, vector<1x8x8x128xbf16>
    %51 = vector.shape_cast %50 : vector<1x8x8x128xbf16> to vector<8x8x128xbf16>
    %52 = vector.shape_cast %51 : vector<8x8x128xbf16> to vector<64x128xbf16>
    %c7 = arith.constant 7 : index
    %c0_53 = arith.constant 0 : index
    %c0_54 = arith.constant 0 : index
    %53 = vector.load %arg2[%c7, %c0_53, %c0_54] : memref<9x128x128xbf16, #tpu.memory_space<vmem>>, vector<1x128x128xbf16>
    %54 = vector.shape_cast %53 : vector<1x128x128xbf16> to vector<128x128xbf16>
    %cst_55 = arith.constant dense<0.000000e+00> : vector<64x128xf32>
    %55 = tpu.matmul %52, %54, %cst_55 {dimension_numbers = #tpu.dot_dimension_numbers<[1], [0], [0], [1], [0, 0, 1, 1], [], []>} : vector<64x128xbf16>, vector<128x128xbf16>, vector<64x128xf32> -> vector<64x128xf32>
    %56 = arith.addf %49, %55 : vector<64x128xf32>
    %c0_56 = arith.constant 0 : index
    %c1_57 = arith.constant 1 : index
    %c1_58 = arith.constant 1 : index
    %c0_59 = arith.constant 0 : index
    %57 = vector.load %arg1[%c0_56, %c1_57, %c1_58, %c0_59] : memref<4x9x9x128xbf16, #tpu.memory_space<vmem>>, vector<1x8x8x128xbf16>
    %58 = vector.shape_cast %57 : vector<1x8x8x128xbf16> to vector<8x8x128xbf16>
    %59 = vector.shape_cast %58 : vector<8x8x128xbf16> to vector<64x128xbf16>
    %c8 = arith.constant 8 : index
    %c0_60 = arith.constant 0 : index
    %c0_61 = arith.constant 0 : index
    %60 = vector.load %arg2[%c8, %c0_60, %c0_61] : memref<9x128x128xbf16, #tpu.memory_space<vmem>>, vector<1x128x128xbf16>
    %61 = vector.shape_cast %60 : vector<1x128x128xbf16> to vector<128x128xbf16>
    %cst_62 = arith.constant dense<0.000000e+00> : vector<64x128xf32>
    %62 = tpu.matmul %59, %61, %cst_62 {dimension_numbers = #tpu.dot_dimension_numbers<[1], [0], [0], [1], [0, 0, 1, 1], [], []>} : vector<64x128xbf16>, vector<128x128xbf16>, vector<64x128xf32> -> vector<64x128xf32>
    %63 = arith.addf %56, %62 : vector<64x128xf32>
    %c0_63 = arith.constant 0 : index
    %c0_64 = arith.constant 0 : index
    %64 = vector.load %arg3[%c0_63, %c0_64] : memref<1x128xf32, #tpu.memory_space<vmem>>, vector<1x128xf32>
    %65 = vector.broadcast %64 : vector<1x128xf32> to vector<64x128xf32>
    %66 = arith.addf %63, %65 : vector<64x128xf32>
    %cst_65 = arith.constant 0.000000e+00 : f32
    %67 = vector.broadcast %cst_65 : f32 to vector<64x128xf32>
    %68 = arith.maximumf %66, %67 : vector<64x128xf32>
    %cst_66 = arith.constant 0.000000e+00 : bf16
    %69 = vector.broadcast %cst_66 : bf16 to vector<10x10x128xbf16>
    %c0_67 = arith.constant 0 : index
    %c0_68 = arith.constant 0 : index
    %c0_69 = arith.constant 0 : index
    %70 = vector.load %arg9[%c0_67, %c0_68, %c0_69] : memref<10x10x128xbf16, #tpu.memory_space<vmem>>, vector<10x10x128xbf16>
    tpu.vector_store %arg9[%c0_67, %c0_68, %c0_69], %69 {strides = array<i32>} : memref<10x10x128xbf16, #tpu.memory_space<vmem>>, vector<10x10x128xbf16>,
    %71 = vector.shape_cast %68 : vector<64x128xf32> to vector<8x8x128xf32>
    %72 = arith.truncf %71 : vector<8x8x128xf32> to vector<8x8x128xbf16>
    %c1_70 = arith.constant 1 : index
    %c1_71 = arith.constant 1 : index
    %c0_72 = arith.constant 0 : index
    %73 = vector.load %arg9[%c1_70, %c1_71, %c0_72] : memref<10x10x128xbf16, #tpu.memory_space<vmem>>, vector<8x8x128xbf16>
    tpu.vector_store %arg9[%c1_70, %c1_71, %c0_72], %72 {strides = array<i32>} : memref<10x10x128xbf16, #tpu.memory_space<vmem>>, vector<8x8x128xbf16>,
    %cst_73 = arith.constant 0.000000e+00 : f32
    %74 = vector.broadcast %cst_73 : f32 to vector<64x128xf32>
    %c0_74 = arith.constant 0 : index
    %c0_75 = arith.constant 0 : index
    %c0_76 = arith.constant 0 : index
    %75 = vector.load %arg9[%c0_74, %c0_75, %c0_76] : memref<10x10x128xbf16, #tpu.memory_space<vmem>>, vector<8x8x128xbf16>
    %76 = vector.shape_cast %75 : vector<8x8x128xbf16> to vector<64x128xbf16>
    %c0_77 = arith.constant 0 : index
    %c0_78 = arith.constant 0 : index
    %c0_79 = arith.constant 0 : index
    %77 = vector.load %arg4[%c0_77, %c0_78, %c0_79] : memref<9x128x128xbf16, #tpu.memory_space<vmem>>, vector<1x128x128xbf16>
    %78 = vector.shape_cast %77 : vector<1x128x128xbf16> to vector<128x128xbf16>
    %cst_80 = arith.constant dense<0.000000e+00> : vector<64x128xf32>
    %79 = tpu.matmul %76, %78, %cst_80 {dimension_numbers = #tpu.dot_dimension_numbers<[1], [0], [0], [1], [0, 0, 1, 1], [], []>} : vector<64x128xbf16>, vector<128x128xbf16>, vector<64x128xf32> -> vector<64x128xf32>
    %80 = arith.addf %74, %79 : vector<64x128xf32>
    %c0_81 = arith.constant 0 : index
    %c1_82 = arith.constant 1 : index
    %c0_83 = arith.constant 0 : index
    %81 = vector.load %arg9[%c0_81, %c1_82, %c0_83] : memref<10x10x128xbf16, #tpu.memory_space<vmem>>, vector<8x8x128xbf16>
    %82 = vector.shape_cast %81 : vector<8x8x128xbf16> to vector<64x128xbf16>
    %c1_84 = arith.constant 1 : index
    %c0_85 = arith.constant 0 : index
    %c0_86 = arith.constant 0 : index
    %83 = vector.load %arg4[%c1_84, %c0_85, %c0_86] : memref<9x128x128xbf16, #tpu.memory_space<vmem>>, vector<1x128x128xbf16>
    %84 = vector.shape_cast %83 : vector<1x128x128xbf16> to vector<128x128xbf16>
    %cst_87 = arith.constant dense<0.000000e+00> : vector<64x128xf32>
    %85 = tpu.matmul %82, %84, %cst_87 {dimension_numbers = #tpu.dot_dimension_numbers<[1], [0], [0], [1], [0, 0, 1, 1], [], []>} : vector<64x128xbf16>, vector<128x128xbf16>, vector<64x128xf32> -> vector<64x128xf32>
    %86 = arith.addf %80, %85 : vector<64x128xf32>
    %c0_88 = arith.constant 0 : index
    %c2_89 = arith.constant 2 : index
    %c0_90 = arith.constant 0 : index
    %87 = vector.load %arg9[%c0_88, %c2_89, %c0_90] : memref<10x10x128xbf16, #tpu.memory_space<vmem>>, vector<8x8x128xbf16>
    %88 = vector.shape_cast %87 : vector<8x8x128xbf16> to vector<64x128xbf16>
    %c2_91 = arith.constant 2 : index
    %c0_92 = arith.constant 0 : index
    %c0_93 = arith.constant 0 : index
    %89 = vector.load %arg4[%c2_91, %c0_92, %c0_93] : memref<9x128x128xbf16, #tpu.memory_space<vmem>>, vector<1x128x128xbf16>
    %90 = vector.shape_cast %89 : vector<1x128x128xbf16> to vector<128x128xbf16>
    %cst_94 = arith.constant dense<0.000000e+00> : vector<64x128xf32>
    %91 = tpu.matmul %88, %90, %cst_94 {dimension_numbers = #tpu.dot_dimension_numbers<[1], [0], [0], [1], [0, 0, 1, 1], [], []>} : vector<64x128xbf16>, vector<128x128xbf16>, vector<64x128xf32> -> vector<64x128xf32>
    %92 = arith.addf %86, %91 : vector<64x128xf32>
    %c1_95 = arith.constant 1 : index
    %c0_96 = arith.constant 0 : index
    %c0_97 = arith.constant 0 : index
    %93 = vector.load %arg9[%c1_95, %c0_96, %c0_97] : memref<10x10x128xbf16, #tpu.memory_space<vmem>>, vector<8x8x128xbf16>
    %94 = vector.shape_cast %93 : vector<8x8x128xbf16> to vector<64x128xbf16>
    %c3_98 = arith.constant 3 : index
    %c0_99 = arith.constant 0 : index
    %c0_100 = arith.constant 0 : index
    %95 = vector.load %arg4[%c3_98, %c0_99, %c0_100] : memref<9x128x128xbf16, #tpu.memory_space<vmem>>, vector<1x128x128xbf16>
    %96 = vector.shape_cast %95 : vector<1x128x128xbf16> to vector<128x128xbf16>
    %cst_101 = arith.constant dense<0.000000e+00> : vector<64x128xf32>
    %97 = tpu.matmul %94, %96, %cst_101 {dimension_numbers = #tpu.dot_dimension_numbers<[1], [0], [0], [1], [0, 0, 1, 1], [], []>} : vector<64x128xbf16>, vector<128x128xbf16>, vector<64x128xf32> -> vector<64x128xf32>
    %98 = arith.addf %92, %97 : vector<64x128xf32>
    %c1_102 = arith.constant 1 : index
    %c1_103 = arith.constant 1 : index
    %c0_104 = arith.constant 0 : index
    %99 = vector.load %arg9[%c1_102, %c1_103, %c0_104] : memref<10x10x128xbf16, #tpu.memory_space<vmem>>, vector<8x8x128xbf16>
    %100 = vector.shape_cast %99 : vector<8x8x128xbf16> to vector<64x128xbf16>
    %c4_105 = arith.constant 4 : index
    %c0_106 = arith.constant 0 : index
    %c0_107 = arith.constant 0 : index
    %101 = vector.load %arg4[%c4_105, %c0_106, %c0_107] : memref<9x128x128xbf16, #tpu.memory_space<vmem>>, vector<1x128x128xbf16>
    %102 = vector.shape_cast %101 : vector<1x128x128xbf16> to vector<128x128xbf16>
    %cst_108 = arith.constant dense<0.000000e+00> : vector<64x128xf32>
    %103 = tpu.matmul %100, %102, %cst_108 {dimension_numbers = #tpu.dot_dimension_numbers<[1], [0], [0], [1], [0, 0, 1, 1], [], []>} : vector<64x128xbf16>, vector<128x128xbf16>, vector<64x128xf32> -> vector<64x128xf32>
    %104 = arith.addf %98, %103 : vector<64x128xf32>
    %c1_109 = arith.constant 1 : index
    %c2_110 = arith.constant 2 : index
    %c0_111 = arith.constant 0 : index
    %105 = vector.load %arg9[%c1_109, %c2_110, %c0_111] : memref<10x10x128xbf16, #tpu.memory_space<vmem>>, vector<8x8x128xbf16>
    %106 = vector.shape_cast %105 : vector<8x8x128xbf16> to vector<64x128xbf16>
    %c5_112 = arith.constant 5 : index
    %c0_113 = arith.constant 0 : index
    %c0_114 = arith.constant 0 : index
    %107 = vector.load %arg4[%c5_112, %c0_113, %c0_114] : memref<9x128x128xbf16, #tpu.memory_space<vmem>>, vector<1x128x128xbf16>
    %108 = vector.shape_cast %107 : vector<1x128x128xbf16> to vector<128x128xbf16>
    %cst_115 = arith.constant dense<0.000000e+00> : vector<64x128xf32>
    %109 = tpu.matmul %106, %108, %cst_115 {dimension_numbers = #tpu.dot_dimension_numbers<[1], [0], [0], [1], [0, 0, 1, 1], [], []>} : vector<64x128xbf16>, vector<128x128xbf16>, vector<64x128xf32> -> vector<64x128xf32>
    %110 = arith.addf %104, %109 : vector<64x128xf32>
    %c2_116 = arith.constant 2 : index
    %c0_117 = arith.constant 0 : index
    %c0_118 = arith.constant 0 : index
    %111 = vector.load %arg9[%c2_116, %c0_117, %c0_118] : memref<10x10x128xbf16, #tpu.memory_space<vmem>>, vector<8x8x128xbf16>
    %112 = vector.shape_cast %111 : vector<8x8x128xbf16> to vector<64x128xbf16>
    %c6_119 = arith.constant 6 : index
    %c0_120 = arith.constant 0 : index
    %c0_121 = arith.constant 0 : index
    %113 = vector.load %arg4[%c6_119, %c0_120, %c0_121] : memref<9x128x128xbf16, #tpu.memory_space<vmem>>, vector<1x128x128xbf16>
    %114 = vector.shape_cast %113 : vector<1x128x128xbf16> to vector<128x128xbf16>
    %cst_122 = arith.constant dense<0.000000e+00> : vector<64x128xf32>
    %115 = tpu.matmul %112, %114, %cst_122 {dimension_numbers = #tpu.dot_dimension_numbers<[1], [0], [0], [1], [0, 0, 1, 1], [], []>} : vector<64x128xbf16>, vector<128x128xbf16>, vector<64x128xf32> -> vector<64x128xf32>
    %116 = arith.addf %110, %115 : vector<64x128xf32>
    %c2_123 = arith.constant 2 : index
    %c1_124 = arith.constant 1 : index
    %c0_125 = arith.constant 0 : index
    %117 = vector.load %arg9[%c2_123, %c1_124, %c0_125] : memref<10x10x128xbf16, #tpu.memory_space<vmem>>, vector<8x8x128xbf16>
    %118 = vector.shape_cast %117 : vector<8x8x128xbf16> to vector<64x128xbf16>
    %c7_126 = arith.constant 7 : index
    %c0_127 = arith.constant 0 : index
    %c0_128 = arith.constant 0 : index
    %119 = vector.load %arg4[%c7_126, %c0_127, %c0_128] : memref<9x128x128xbf16, #tpu.memory_space<vmem>>, vector<1x128x128xbf16>
    %120 = vector.shape_cast %119 : vector<1x128x128xbf16> to vector<128x128xbf16>
    %cst_129 = arith.constant dense<0.000000e+00> : vector<64x128xf32>
    %121 = tpu.matmul %118, %120, %cst_129 {dimension_numbers = #tpu.dot_dimension_numbers<[1], [0], [0], [1], [0, 0, 1, 1], [], []>} : vector<64x128xbf16>, vector<128x128xbf16>, vector<64x128xf32> -> vector<64x128xf32>
    %122 = arith.addf %116, %121 : vector<64x128xf32>
    %c2_130 = arith.constant 2 : index
    %c2_131 = arith.constant 2 : index
    %c0_132 = arith.constant 0 : index
    %123 = vector.load %arg9[%c2_130, %c2_131, %c0_132] : memref<10x10x128xbf16, #tpu.memory_space<vmem>>, vector<8x8x128xbf16>
    %124 = vector.shape_cast %123 : vector<8x8x128xbf16> to vector<64x128xbf16>
    %c8_133 = arith.constant 8 : index
    %c0_134 = arith.constant 0 : index
    %c0_135 = arith.constant 0 : index
    %125 = vector.load %arg4[%c8_133, %c0_134, %c0_135] : memref<9x128x128xbf16, #tpu.memory_space<vmem>>, vector<1x128x128xbf16>
    %126 = vector.shape_cast %125 : vector<1x128x128xbf16> to vector<128x128xbf16>
    %cst_136 = arith.constant dense<0.000000e+00> : vector<64x128xf32>
    %127 = tpu.matmul %124, %126, %cst_136 {dimension_numbers = #tpu.dot_dimension_numbers<[1], [0], [0], [1], [0, 0, 1, 1], [], []>} : vector<64x128xbf16>, vector<128x128xbf16>, vector<64x128xf32> -> vector<64x128xf32>
    %128 = arith.addf %122, %127 : vector<64x128xf32>
    %c0_137 = arith.constant 0 : index
    %c0_138 = arith.constant 0 : index
    %129 = vector.load %arg5[%c0_137, %c0_138] : memref<1x128xf32, #tpu.memory_space<vmem>>, vector<1x128xf32>
    %130 = vector.broadcast %129 : vector<1x128xf32> to vector<64x128xf32>
    %131 = arith.addf %128, %130 : vector<64x128xf32>
    %c3_139 = arith.constant 3 : index
    %c0_140 = arith.constant 0 : index
    %c0_141 = arith.constant 0 : index
    %c0_142 = arith.constant 0 : index
    %132 = vector.load %arg1[%c3_139, %c0_140, %c0_141, %c0_142] : memref<4x9x9x128xbf16, #tpu.memory_space<vmem>>, vector<1x8x8x128xbf16>
    %133 = vector.shape_cast %132 : vector<1x8x8x128xbf16> to vector<8x8x128xbf16>
    %134 = vector.shape_cast %133 : vector<8x8x128xbf16> to vector<64x128xbf16>
    %c0_143 = arith.constant 0 : index
    %c0_144 = arith.constant 0 : index
    %135 = vector.load %arg6[%c0_143, %c0_144] : memref<128x128xbf16, #tpu.memory_space<vmem>>, vector<128x128xbf16>
    %cst_145 = arith.constant dense<0.000000e+00> : vector<64x128xf32>
    %136 = tpu.matmul %134, %135, %cst_145 {dimension_numbers = #tpu.dot_dimension_numbers<[1], [0], [0], [1], [0, 0, 1, 1], [], []>} : vector<64x128xbf16>, vector<128x128xbf16>, vector<64x128xf32> -> vector<64x128xf32>
    %137 = arith.addf %131, %136 : vector<64x128xf32>
    %c0_146 = arith.constant 0 : index
    %c0_147 = arith.constant 0 : index
    %138 = vector.load %arg7[%c0_146, %c0_147] : memref<1x128xf32, #tpu.memory_space<vmem>>, vector<1x128xf32>
    %139 = vector.broadcast %138 : vector<1x128xf32> to vector<64x128xf32>
    %140 = arith.addf %137, %139 : vector<64x128xf32>
    %cst_148 = arith.constant 0.000000e+00 : f32
    %141 = vector.broadcast %cst_148 : f32 to vector<64x128xf32>
    %142 = arith.maximumf %140, %141 : vector<64x128xf32>
    %143 = vector.shape_cast %142 : vector<64x128xf32> to vector<1x8x8x128xf32>
    %c0_149 = arith.constant 0 : index
    %c0_150 = arith.constant 0 : index
    %c0_151 = arith.constant 0 : index
    %c0_152 = arith.constant 0 : index
    %144 = vector.load %arg8[%c0_149, %c0_150, %c0_151, %c0_152] : memref<1x8x8x128xf32, #tpu.memory_space<vmem>>, vector<1x8x8x128xf32>
    tpu.vector_store %arg8[%c0_149, %c0_150, %c0_151, %c0_152], %143 {strides = array<i32>} : memref<1x8x8x128xf32, #tpu.memory_space<vmem>>, vector<1x8x8x128xf32>,
    return
  }
  func.func @transform_0(%arg0: i32) -> (i32, i32, i32, i32) {
    %c0_i32 = arith.constant 0 : i32
    %c0_i32_0 = arith.constant 0 : i32
    %c0_i32_1 = arith.constant 0 : i32
    %c0_i32_2 = arith.constant 0 : i32
    return %arg0, %c0_i32, %c0_i32_0, %c0_i32_1 : i32, i32, i32, i32
  }
  func.func @transform_1(%arg0: i32) -> (i32, i32, i32) {
    %c0_i32 = arith.constant 0 : i32
    %c0_i32_0 = arith.constant 0 : i32
    %c0_i32_1 = arith.constant 0 : i32
    %c0_i32_2 = arith.constant 0 : i32
    return %c0_i32, %c0_i32_0, %c0_i32_1 : i32, i32, i32
  }
  func.func @transform_2(%arg0: i32) -> (i32, i32) {
    %c0_i32 = arith.constant 0 : i32
    %c0_i32_0 = arith.constant 0 : i32
    %c0_i32_1 = arith.constant 0 : i32
    return %c0_i32, %c0_i32_0 : i32, i32
  }
  func.func @transform_3(%arg0: i32) -> (i32, i32, i32) {
    %c0_i32 = arith.constant 0 : i32
    %c0_i32_0 = arith.constant 0 : i32
    %c0_i32_1 = arith.constant 0 : i32
    %c0_i32_2 = arith.constant 0 : i32
    return %c0_i32, %c0_i32_0, %c0_i32_1 : i32, i32, i32
  }
  func.func @transform_4(%arg0: i32) -> (i32, i32) {
    %c0_i32 = arith.constant 0 : i32
    %c0_i32_0 = arith.constant 0 : i32
    %c0_i32_1 = arith.constant 0 : i32
    return %c0_i32, %c0_i32_0 : i32, i32
  }
  func.func @transform_5(%arg0: i32) -> (i32, i32) {
    %c0_i32 = arith.constant 0 : i32
    %c0_i32_0 = arith.constant 0 : i32
    %c0_i32_1 = arith.constant 0 : i32
    return %c0_i32, %c0_i32_0 : i32, i32
  }
  func.func @transform_6(%arg0: i32) -> (i32, i32) {
    %c0_i32 = arith.constant 0 : i32
    %c0_i32_0 = arith.constant 0 : i32
    %c0_i32_1 = arith.constant 0 : i32
    return %c0_i32, %c0_i32_0 : i32, i32
  }
  func.func @transform_7(%arg0: i32) -> (i32, i32, i32, i32) {
    %c0_i32 = arith.constant 0 : i32
    %c0_i32_0 = arith.constant 0 : i32
    %c0_i32_1 = arith.constant 0 : i32
    %c0_i32_2 = arith.constant 0 : i32
    return %arg0, %c0_i32, %c0_i32_0, %c0_i32_1 : i32, i32, i32, i32
  }
}

</mosaic_0001>

<llo_original>
// kernel: basic_block_forward.1
$region0: #{basic_block_forward.1}
  #allocation0 [shape = 'u32[]', space=smem, size = 0x4, offset = 0x4, fixed_abs, tag = 'smem constant byte address 0x4 - core index']
  #allocation1 [shape = 'u32[144,128]{1,0:T(1,128)}', space=vmem, size = 0x12000, scoped, tag = 'internal scratch']
  #allocation2 [shape = 'bf16[10,10,128]{2,1,0:T(8,128)(2,1)}', space=vmem, size = 0xa000, scoped, tag = 'scratch operand']
  %s0 = inlined_call_operand.vmem [shape: bf16[8,9,9,128], index: 0, kind: input, shape index: {}]
  %s1 = inlined_call_operand.vmem [shape: bf16[9,128,128], index: 1, kind: input, shape index: {}]
  %s2 = inlined_call_operand.vmem [shape: f32[1,128], index: 2, kind: input, shape index: {}]
  %s3 = inlined_call_operand.vmem [shape: bf16[9,128,128], index: 3, kind: input, shape index: {}]
  %s4 = inlined_call_operand.vmem [shape: f32[1,128], index: 4, kind: input, shape index: {}]
  %s5 = inlined_call_operand.vmem [shape: bf16[128,128], index: 5, kind: input, shape index: {}]
  %s6 = inlined_call_operand.vmem [shape: f32[1,128], index: 6, kind: input, shape index: {}]
  %s7 = inlined_call_operand.vmem [shape: f32[2,8,8,128], index: 7, kind: output, shape index: {}]
  %s8 = sld [smem:[#allocation0]]
  $region61: #{basic_block_forward.1} parent=0
    _
  %s10 = ssub.s32 1, %s8
  %s11 = scalar_select 0, %s10, %s8
  loop: start=0, step=1, limit=4
  $region2: #{basic_block_forward.1} parent=0 // loop_pre_header
    _
  $region3: #{basic_block_forward.1} parent=0 // loop_header
    %s13 = sphi 0, %s17
    %p14 = scmp.ge.s32.totalorder %s13, 4
    %s23 = sphi 0, %s25
    %s26 = sphi 0, %s23
    %s27 = sphi 0, %s26
    %s43 = sphi 0, %s27
    %s47 = sphi 0, %s47
    %s49 = sphi 0, %s47
    %s50 = sphi 0, %s49
    %s64 = sphi 0, %s50
    %s68 = sphi 0, %s68
    %s70 = sphi 0, %s68
    %s71 = sphi 0, %s70
    %s85 = sphi 0, %s71
    %s89 = sphi 0, %s89
    %s91 = sphi 0, %s89
    %s92 = sphi 0, %s91
    %s106 = sphi 0, %s92
    %s110 = sphi 0, %s110
    %s112 = sphi 0, %s110
    %s113 = sphi 0, %s112
    %s127 = sphi 0, %s113
    %s131 = sphi 0, %s131
    %s133 = sphi 0, %s131
    %s134 = sphi 0, %s133
    %s148 = sphi 0, %s134
    %s152 = sphi 0, %s152
    %s154 = sphi 0, %s152
    %s155 = sphi 0, %s154
    %s169 = sphi 0, %s155
    %s175 = sphi 0, %s177
    %s178 = sphi 0, %s175
    %s179 = sphi 0, %s178
    %s195 = sphi 0, %s179
  $region4: #{basic_block_forward.1} parent=0 // loop_header_branch
    %16 = sbr.rel (%p14) target = $region8
  $region5: #{basic_block_forward.1} parent=0 // loop_body
    %s18 = ssub.s32 %s13, 1
    %s19 = ssub.s32 %s13, 2
    %s20 = sadd.s32 %s13, 1
    %s21 = ssub.s32 %s13, %s20
    %p22 = scmp.eq.s32.totalorder %s21, 0
    %s24 = sadd.s32 %s23, 1
    %s25 = scalar_select %p22, %s23, %s24
    %p28 = pneg %p22
    %p29 = scmp.eq.s32.totalorder %s13, 1
    %p30 = por %p28, %p29
    %p31 = scmp.ne.s32.totalorder %s23, %s26
    %p32 = scmp.eq.s32.totalorder %s13, 0
    %p33 = por %p31, %p32
    %p34 = scmp.ne.s32.totalorder %s23, %s26
    %p35 = scmp.eq.s32.totalorder %s18, 1
    %p36 = por %p34, %p35
    %p37 = scmp.ne.s32.totalorder %s26, %s27
    %p38 = scmp.eq.s32.totalorder %s18, 0
    %p39 = por %p37, %p38
    %p40 = scmp.ne.s32.totalorder %s26, %s27
    %p41 = scmp.eq.s32.totalorder %s19, 1
    %p42 = por %p40, %p41
    %p44 = scmp.ne.s32.totalorder %s27, %s43
    %p45 = scmp.eq.s32.totalorder %s19, 0
    %p46 = por %p44, %p45
    %s48 = sadd.s32 %s47, 1
    %p51 = scmp.eq.s32.totalorder %s13, 1
    %p52 = scmp.ne.s32.totalorder %s47, %s49
    %p53 = scmp.eq.s32.totalorder %s13, 0
    %p54 = por %p52, %p53
    %p55 = scmp.ne.s32.totalorder %s47, %s49
    %p56 = scmp.eq.s32.totalorder %s18, 1
    %p57 = por %p55, %p56
    %p58 = scmp.ne.s32.totalorder %s49, %s50
    %p59 = scmp.eq.s32.totalorder %s18, 0
    %p60 = por %p58, %p59
    %p61 = scmp.ne.s32.totalorder %s49, %s50
    %p62 = scmp.eq.s32.totalorder %s19, 1
    %p63 = por %p61, %p62
    %p65 = scmp.ne.s32.totalorder %s50, %s64
    %p66 = scmp.eq.s32.totalorder %s19, 0
    %p67 = por %p65, %p66
    %s69 = sadd.s32 %s68, 1
    %p72 = scmp.eq.s32.totalorder %s13, 1
    %p73 = scmp.ne.s32.totalorder %s68, %s70
    %p74 = scmp.eq.s32.totalorder %s13, 0
    %p75 = por %p73, %p74
    %p76 = scmp.ne.s32.totalorder %s68, %s70
    %p77 = scmp.eq.s32.totalorder %s18, 1
    %p78 = por %p76, %p77
    %p79 = scmp.ne.s32.totalorder %s70, %s71
    %p80 = scmp.eq.s32.totalorder %s18, 0
    %p81 = por %p79, %p80
    %p82 = scmp.ne.s32.totalorder %s70, %s71
    %p83 = scmp.eq.s32.totalorder %s19, 1
    %p84 = por %p82, %p83
    %p86 = scmp.ne.s32.totalorder %s71, %s85
    %p87 = scmp.eq.s32.totalorder %s19, 0
    %p88 = por %p86, %p87
    %s90 = sadd.s32 %s89, 1
    %p93 = scmp.eq.s32.totalorder %s13, 1
    %p94 = scmp.ne.s32.totalorder %s89, %s91
    %p95 = scmp.eq.s32.totalorder %s13, 0
    %p96 = por %p94, %p95
    %p97 = scmp.ne.s32.totalorder %s89, %s91
    %p98 = scmp.eq.s32.totalorder %s18, 1
    %p99 = por %p97, %p98
    %p100 = scmp.ne.s32.totalorder %s91, %s92
    %p101 = scmp.eq.s32.totalorder %s18, 0
    %p102 = por %p100, %p101
    %p103 = scmp.ne.s32.totalorder %s91, %s92
    %p104 = scmp.eq.s32.totalorder %s19, 1
    %p105 = por %p103, %p104
    %p107 = scmp.ne.s32.totalorder %s92, %s106
    %p108 = scmp.eq.s32.totalorder %s19, 0
    %p109 = por %p107, %p108
    %s111 = sadd.s32 %s110, 1
    %p114 = scmp.eq.s32.totalorder %s13, 1
    %p115 = scmp.ne.s32.totalorder %s110, %s112
    %p116 = scmp.eq.s32.totalorder %s13, 0
    %p117 = por %p115, %p116
    %p118 = scmp.ne.s32.totalorder %s110, %s112
    %p119 = scmp.eq.s32.totalorder %s18, 1
    %p120 = por %p118, %p119
    %p121 = scmp.ne.s32.totalorder %s112, %s113
    %p122 = scmp.eq.s32.totalorder %s18, 0
    %p123 = por %p121, %p122
    %p124 = scmp.ne.s32.totalorder %s112, %s113
    %p125 = scmp.eq.s32.totalorder %s19, 1
    %p126 = por %p124, %p125
    %p128 = scmp.ne.s32.totalorder %s113, %s127
    %p129 = scmp.eq.s32.totalorder %s19, 0
    %p130 = por %p128, %p129
    %s132 = sadd.s32 %s131, 1
    %p135 = scmp.eq.s32.totalorder %s13, 1
    %p136 = scmp.ne.s32.totalorder %s131, %s133
    %p137 = scmp.eq.s32.totalorder %s13, 0
    %p138 = por %p136, %p137
    %p139 = scmp.ne.s32.totalorder %s131, %s133
    %p140 = scmp.eq.s32.totalorder %s18, 1
    %p141 = por %p139, %p140
    %p142 = scmp.ne.s32.totalorder %s133, %s134
    %p143 = scmp.eq.s32.totalorder %s18, 0
    %p144 = por %p142, %p143
    %p145 = scmp.ne.s32.totalorder %s133, %s134
    %p146 = scmp.eq.s32.totalorder %s19, 1
    %p147 = por %p145, %p146
    %p149 = scmp.ne.s32.totalorder %s134, %s148
    %p150 = scmp.eq.s32.totalorder %s19, 0
    %p151 = por %p149, %p150
    %s153 = sadd.s32 %s152, 1
    %p156 = scmp.eq.s32.totalorder %s13, 1
    %p157 = scmp.ne.s32.totalorder %s152, %s154
    %p158 = scmp.eq.s32.totalorder %s13, 0
    %p159 = por %p157, %p158
    %p160 = scmp.ne.s32.totalorder %s152, %s154
    %p161 = scmp.eq.s32.totalorder %s18, 1
    %p162 = por %p160, %p161
    %p163 = scmp.ne.s32.totalorder %s154, %s155
    %p164 = scmp.eq.s32.totalorder %s18, 0
    %p165 = por %p163, %p164
    %p166 = scmp.ne.s32.totalorder %s154, %s155
    %p167 = scmp.eq.s32.totalorder %s19, 1
    %p168 = por %p166, %p167
    %p170 = scmp.ne.s32.totalorder %s155, %s169
    %p171 = scmp.eq.s32.totalorder %s19, 0
    %p172 = por %p170, %p171
    %s173 = ssub.s32 %s13, %s20
    %p174 = scmp.eq.s32.totalorder %s173, 0
    %s176 = sadd.s32 %s175, 1
    %s177 = scalar_select %p174, %s175, %s176
    %p180 = pneg %p174
    %p181 = scmp.eq.s32.totalorder %s13, 1
    %p182 = por %p180, %p181
    %p183 = scmp.ne.s32.totalorder %s175, %s178
    %p184 = scmp.eq.s32.totalorder %s13, 0
    %p185 = por %p183, %p184
    %p186 = scmp.ne.s32.totalorder %s175, %s178
    %p187 = scmp.eq.s32.totalorder %s18, 1
    %p188 = por %p186, %p187
    %p189 = scmp.ne.s32.totalorder %s178, %s179
    %p190 = scmp.eq.s32.totalorder %s18, 0
    %p191 = por %p189, %p190
    %p192 = scmp.ne.s32.totalorder %s178, %s179
    %p193 = scmp.eq.s32.totalorder %s19, 1
    %p194 = por %p192, %p193
    %p196 = scmp.ne.s32.totalorder %s179, %s195
    %p197 = scmp.eq.s32.totalorder %s19, 0
    %p198 = por %p196, %p197
    %p199 = scmp.le.s32.totalorder 1, %s13
    %p200 = scmp.lt.s32.totalorder %s13, 3
    %p201 = pnand %p199, %p200
    %p202 = pneg %p201
    // Predicated region
    $region9: #{basic_block_forward.1} parent=5 // pred_check
      _
    $region10: #{basic_block_forward.1} parent=5 // pred_check_branch
      %204 = sbr.rel (%p201) target = $region12
    $region11: #{basic_block_forward.1} parent=5 // pred_region
      %s205 = ssub.s32 %s13, 1
      // Predicated region
      $region13: #{basic_block_forward.1} parent=11 // pred_check
        %p206 = pneg %p60
      $region14: #{basic_block_forward.1} parent=11 // pred_check_branch
        %208 = sbr.rel (%p206) target = $region16
      $region15: #{basic_block_forward.1} parent=11 // pred_region
        _
      $region16: #{basic_block_forward.1} parent=11 // pred_fallthru
        _
      // Predicated region
      $region17: #{basic_block_forward.1} parent=11 // pred_check
        %p209 = pneg %p81
      $region18: #{basic_block_forward.1} parent=11 // pred_check_branch
        %211 = sbr.rel (%p209) target = $region20
      $region19: #{basic_block_forward.1} parent=11 // pred_region
        _
      $region20: #{basic_block_forward.1} parent=11 // pred_fallthru
        _
      // Predicated region
      $region21: #{basic_block_forward.1} parent=11 // pred_check
        %p212 = pneg %p102
      $region22: #{basic_block_forward.1} parent=11 // pred_check_branch
        %214 = sbr.rel (%p212) target = $region24
      $region23: #{basic_block_forward.1} parent=11 // pred_region
        _
      $region24: #{basic_block_forward.1} parent=11 // pred_fallthru
        _
      // Predicated region
      $region25: #{basic_block_forward.1} parent=11 // pred_check
        %p215 = pneg %p123
      $region26: #{basic_block_forward.1} parent=11 // pred_check_branch
        %217 = sbr.rel (%p215) target = $region28
      $region27: #{basic_block_forward.1} parent=11 // pred_region
        _
      $region28: #{basic_block_forward.1} parent=11 // pred_fallthru
        _
      // Predicated region
      $region29: #{basic_block_forward.1} parent=11 // pred_check
        %p218 = pneg %p144
      $region30: #{basic_block_forward.1} parent=11 // pred_check_branch
        %220 = sbr.rel (%p218) target = $region32
      $region31: #{basic_block_forward.1} parent=11 // pred_region
        _
      $region32: #{basic_block_forward.1} parent=11 // pred_fallthru
        _
      // Predicated region
      $region33: #{basic_block_forward.1} parent=11 // pred_check
        %p221 = pneg %p165
      $region34: #{basic_block_forward.1} parent=11 // pred_check_branch
        %223 = sbr.rel (%p221) target = $region36
      $region35: #{basic_block_forward.1} parent=11 // pred_region
        _
      $region36: #{basic_block_forward.1} parent=11 // pred_fallthru
        _
    $region12: #{basic_block_forward.1} parent=5 // pred_fallthru
      _
    %p224 = scmp.lt.s32.totalorder %s13, 2
    // Predicated region
    $region37: #{basic_block_forward.1} parent=5 // pred_check
      %p225 = pneg %p224
    $region38: #{basic_block_forward.1} parent=5 // pred_check_branch
      %227 = sbr.rel (%p225) target = $region40
    $region39: #{basic_block_forward.1} parent=5 // pred_region
      // Predicated region
      $region41: #{basic_block_forward.1} parent=39 // pred_check
        %p228 = pneg %p33
      $region42: #{basic_block_forward.1} parent=39 // pred_check_branch
        %230 = sbr.rel (%p228) target = $region44
      $region43: #{basic_block_forward.1} parent=39 // pred_region
        %s231 = smul.u32 4, %s13
        %p232 = scmp.lt.s32.totalorder %s231, 7
        %s233 = scalar_select %p232, %s231, 7
        %s234 = smul.addr %s233, 18
        %s235 = smul.addr %s234, 4
        %s236 = scalar_lea.vmem %s0, %s235
        %s237 = smul.u32 4, %s13
      $region44: #{basic_block_forward.1} parent=39 // pred_fallthru
        _
    $region40: #{basic_block_forward.1} parent=5 // pred_fallthru
      _
    %p238 = scmp.le.s32.totalorder 1, %s13
    %p239 = scmp.lt.s32.totalorder %s13, 3
    %p240 = pnand %p238, %p239
    %p241 = pneg %p240
    // Predicated region
    $region45: #{basic_block_forward.1} parent=5 // pred_check
      _
    $region46: #{basic_block_forward.1} parent=5 // pred_check_branch
      %243 = sbr.rel (%p240) target = $region48
    $region47: #{basic_block_forward.1} parent=5 // pred_region
      %s244 = ssub.s32 %s13, 1
      %s245 = smul.u32 4, %s18
      %p246 = scmp.lt.s32.totalorder %s245, 7
      %s247 = scalar_select %p246, %s245, 7
      %s248 = smul.addr %s247, 18
      %s249 = smul.addr %s248, 4
      %s250 = scalar_lea.vmem %s0, %s249
      %p251 = pneg %p39
      %p252 = pneg %p36
      %p253 = pneg %p60
      %p254 = pneg %p57
      %p255 = pneg %p81
      %p256 = pneg %p78
      %p257 = pneg %p102
      %p258 = pneg %p99
      %p259 = pneg %p123
      %p260 = pneg %p120
      %p261 = pneg %p144
      %p262 = pneg %p141
      %p263 = pneg %p165
      %p264 = pneg %p162
      %p265 = pneg %p191
      %p266 = pneg %p188
      %p267 = scmp.lt.s32.totalorder %s18, 1
      %s268 = scalar_select %p267, %s18, 1
      %s269 = smul.addr %s268, 8
      %s270 = smul.addr %s269, 8
      %s271 = scalar_lea.vmem %s7, %s270
      %s272 = smul.u32 4, %s18
      %p273 = scmp.lt.s32.totalorder %s272, 7
      %s274 = scalar_select %p273, %s272, 7
      %s275 = smul.addr %s274, 18
      %s276 = smul.addr %s275, 4
      %s277 = scalar_lea.vmem %s0, %s276
      %s278 = smul.u32 4, %s18
      %p279 = scmp.lt.s32.totalorder %s18, 1
      %s280 = scalar_select %p279, %s18, 1
      %s281 = smul.addr %s280, 8
      %s282 = smul.addr %s281, 8
      %s283 = scalar_lea.vmem %s7, %s282
      %v285 = vld [vmem:[%s277] sm:$0xf]
      %v286 = vld [vmem:[%s277 + $0x8] sm:$0xf]
      %v287 = vld [vmem:[%s277 + $0x10] sm:$0xf]
      %v288 = vld [vmem:[%s277 + $0x18] sm:$0xf]
      %v289 = vld [vmem:[%s277 + $0x20] sm:$0xf]
      %v290 = vld [vmem:[%s277 + $0x28] sm:$0xf]
      %v291 = vld [vmem:[%s277 + $0x30] sm:$0xf]
      %v292 = vld [vmem:[%s277 + $0x38] sm:$0xf]
      %v293 = vld [vmem:[%s1] sm:$0xf]
      %v294 = vld [vmem:[%s1 + $0x4] sm:$0xf]
      %v295 = vld [vmem:[%s1 + $0x8] sm:$0xf]
      %v296 = vld [vmem:[%s1 + $0xc] sm:$0xf]
      %v297 = vld [vmem:[%s1 + $0x10] sm:$0xf]
      %v298 = vld [vmem:[%s1 + $0x14] sm:$0xf]
      %v299 = vld [vmem:[%s1 + $0x18] sm:$0xf]
      %v300 = vld [vmem:[%s1 + $0x1c] sm:$0xf]
      %v301 = vld [vmem:[%s1 + $0x20] sm:$0xf]
      %v302 = vld [vmem:[%s1 + $0x24] sm:$0xf]
      %v303 = vld [vmem:[%s1 + $0x28] sm:$0xf]
      %v304 = vld [vmem:[%s1 + $0x2c] sm:$0xf]
      %v305 = vld [vmem:[%s1 + $0x30] sm:$0xf]
      %v306 = vld [vmem:[%s1 + $0x34] sm:$0xf]
      %v307 = vld [vmem:[%s1 + $0x38] sm:$0xf]
      %v308 = vld [vmem:[%s1 + $0x3c] sm:$0xf]
      %s309 = scalar_lea.vmem %s277, 72
      %v310 = vld [vmem:[%s309] sm:$0xf]
      %v311 = vld [vmem:[%s309 + $0x8] sm:$0xf]
      %v312 = vld [vmem:[%s309 + $0x10] sm:$0xf]
      %v313 = vld [vmem:[%s309 + $0x18] sm:$0xf]
      %v314 = vld [vmem:[%s309 + $0x20] sm:$0xf]
      %v315 = vld [vmem:[%s309 + $0x28] sm:$0xf]
      %v316 = vld [vmem:[%s309 + $0x30] sm:$0xf]
      %v317 = vld [vmem:[%s309 + $0x38] sm:$0xf]
      %s318 = scalar_lea.vmem %s1, 64
      %v319 = vld [vmem:[%s318] sm:$0xf]
      %v320 = vld [vmem:[%s318 + $0x4] sm:$0xf]
      %v321 = vld [vmem:[%s318 + $0x8] sm:$0xf]
      %v322 = vld [vmem:[%s318 + $0xc] sm:$0xf]
      %v323 = vld [vmem:[%s318 + $0x10] sm:$0xf]
      %v324 = vld [vmem:[%s318 + $0x14] sm:$0xf]
      %v325 = vld [vmem:[%s318 + $0x18] sm:$0xf]
      %v326 = vld [vmem:[%s318 + $0x1c] sm:$0xf]
      %v327 = vld [vmem:[%s318 + $0x20] sm:$0xf]
      %v328 = vld [vmem:[%s318 + $0x24] sm:$0xf]
      %v329 = vld [vmem:[%s318 + $0x28] sm:$0xf]
      %v330 = vld [vmem:[%s318 + $0x2c] sm:$0xf]
      %v331 = vld [vmem:[%s318 + $0x30] sm:$0xf]
      %v332 = vld [vmem:[%s318 + $0x34] sm:$0xf]
      %v333 = vld [vmem:[%s318 + $0x38] sm:$0xf]
      %v334 = vld [vmem:[%s318 + $0x3c] sm:$0xf]
      %v343 = vunpack.c.l.b16 %v310
      %v344 = vunpack.c.l.b16 %v311
      %v345 = vunpack.c.l.b16 %v312
      %v346 = vunpack.c.l.b16 %v313
      %v347 = vunpack.c.l.b16 %v314
      %v348 = vunpack.c.l.b16 %v315
      %v349 = vunpack.c.l.b16 %v316
      %v350 = vunpack.c.l.b16 %v317
      %v351 = vpack.c.b16 %v344, %v343
      %v352 = vpack.c.b16 %v346, %v345
      %v353 = vpack.c.b16 %v348, %v347
      %v354 = vpack.c.b16 %v350, %v349
      %v375 = vunpack.c.l.b16 %v319
      %v376 = vunpack.c.l.b16 %v320
      %v377 = vunpack.c.l.b16 %v321
      %v378 = vunpack.c.l.b16 %v322
      %v379 = vunpack.c.l.b16 %v323
      %v380 = vunpack.c.l.b16 %v324
      %v381 = vunpack.c.l.b16 %v325
      %v382 = vunpack.c.l.b16 %v326
      %v383 = vunpack.c.l.b16 %v327
      %v384 = vunpack.c.l.b16 %v328
      %v385 = vunpack.c.l.b16 %v329
      %v386 = vunpack.c.l.b16 %v330
      %v387 = vunpack.c.l.b16 %v331
      %v388 = vunpack.c.l.b16 %v332
      %v389 = vunpack.c.l.b16 %v333
      %v390 = vunpack.c.l.b16 %v334
      %v391 = vpack.c.b16 %v376, %v375
      %v392 = vpack.c.b16 %v378, %v377
      %v393 = vpack.c.b16 %v380, %v379
      %v394 = vpack.c.b16 %v382, %v381
      %v395 = vpack.c.b16 %v384, %v383
      %v396 = vpack.c.b16 %v386, %v385
      %v397 = vpack.c.b16 %v388, %v387
      %v398 = vpack.c.b16 %v390, %v389
      %407 = vmatprep.subr.bf16.mxu0 0
      %408 = vmatpush1.bf16.msra.mxu0 %v391
      %409 = vmatprep.subr.bf16.mxu0 0
      %410 = vmatpush1.bf16.msra.mxu0 %v392
      %411 = vmatprep.subr.bf16.mxu0 0
      %412 = vmatpush1.bf16.msra.mxu0 %v393
      %413 = vmatprep.subr.bf16.mxu0 0
      %414 = vmatpush1.bf16.msra.mxu0 %v394
      %415 = vmatprep.subr.bf16.mxu0 0
      %416 = vmatpush1.bf16.msra.mxu0 %v395
      %417 = vmatprep.subr.bf16.mxu0 0
      %418 = vmatpush1.bf16.msra.mxu0 %v396
      %419 = vmatprep.subr.bf16.mxu0 0
      %420 = vmatpush1.bf16.msra.mxu0 %v397
      %421 = vmatprep.subr.bf16.mxu0 0
      %422 = vmatpush1.bf16.msra.mxu0 %v398
      %423 = vmatprep.subr.bf16.mxu0 0
      %424 = vmatpush1.bf16.msra.mxu0 0
      %425 = vmatprep.subr.bf16.mxu0 0
      %426 = vmatpush1.bf16.msra.mxu0 0
      %427 = vmatprep.subr.bf16.mxu0 0
      %428 = vmatpush1.bf16.msra.mxu0 0
      %429 = vmatprep.subr.bf16.mxu0 0
      %430 = vmatpush1.bf16.msra.mxu0 0
      %431 = vmatprep.subr.bf16.mxu0 0
      %432 = vmatpush1.bf16.msra.mxu0 0
      %433 = vmatprep.subr.bf16.mxu0 0
      %434 = vmatpush1.bf16.msra.mxu0 0
      %435 = vmatprep.subr.bf16.mxu0 0
      %436 = vmatpush1.bf16.msra.mxu0 0
      %437 = vmatprep.subr.bf16.mxu0 0
      %438 = vmatpush1.bf16.msra.mxu0 0
      %439 = vmatprep.mubr.bf16.mxu0 0
      %440 = vmatmul.mubr.bf16.gmra.mrb[0].mxu0 %v351
      %v441 = vpop.f32.mrb[0].mxu0
      %v442 = vadd.f32 0.0, %v441
      %v443 = vpop.f32.mrb[0].mxu0
      %v444 = vpop.f32.mrb[0].mxu0
      %v445 = vadd.f32 0.0, %v444
      %v446 = vpop.f32.mrb[0].mxu0
      %447 = vmatprep.mubr.bf16.mxu0 0
      %448 = vmatmul.mubr.bf16.gmra.mrb[0].mxu0 %v352
      %v449 = vpop.f32.mrb[0].mxu0
      %v450 = vadd.f32 0.0, %v449
      %v451 = vpop.f32.mrb[0].mxu0
      %v452 = vpop.f32.mrb[0].mxu0
      %v453 = vadd.f32 0.0, %v452
      %v454 = vpop.f32.mrb[0].mxu0
      %455 = vmatprep.mubr.bf16.mxu0 0
      %456 = vmatmul.mubr.bf16.gmra.mrb[0].mxu0 %v353
      %v457 = vpop.f32.mrb[0].mxu0
      %v458 = vadd.f32 0.0, %v457
      %v459 = vpop.f32.mrb[0].mxu0
      %v460 = vpop.f32.mrb[0].mxu0
      %v461 = vadd.f32 0.0, %v460
      %v462 = vpop.f32.mrb[0].mxu0
      %463 = vmatprep.mubr.bf16.mxu0 0
      %464 = vmatmul.mubr.bf16.gmra.mrb[0].mxu0 %v354
      %v465 = vpop.f32.mrb[0].mxu0
      %v466 = vadd.f32 0.0, %v465
      %v467 = vpop.f32.mrb[0].mxu0
      %v468 = vpop.f32.mrb[0].mxu0
      %v469 = vadd.f32 0.0, %v468
      %v470 = vpop.f32.mrb[0].mxu0
      %471 = vdwg.mxu0
      %v480 = vunpack.c.l.b16 %v285
      %v481 = vunpack.c.l.b16 %v286
      %v482 = vunpack.c.l.b16 %v287
      %v483 = vunpack.c.l.b16 %v288
      %v484 = vunpack.c.l.b16 %v289
      %v485 = vunpack.c.l.b16 %v290
      %v486 = vunpack.c.l.b16 %v291
      %v487 = vunpack.c.l.b16 %v292
      %v488 = vpack.c.b16 %v481, %v480
      %v489 = vpack.c.b16 %v483, %v482
      %v490 = vpack.c.b16 %v485, %v484
      %v491 = vpack.c.b16 %v487, %v486
      %v512 = vunpack.c.l.b16 %v293
      %v513 = vunpack.c.l.b16 %v294
      %v514 = vunpack.c.l.b16 %v295
      %v515 = vunpack.c.l.b16 %v296
      %v516 = vunpack.c.l.b16 %v297
      %v517 = vunpack.c.l.b16 %v298
      %v518 = vunpack.c.l.b16 %v299
      %v519 = vunpack.c.l.b16 %v300
      %v520 = vunpack.c.l.b16 %v301
      %v521 = vunpack.c.l.b16 %v302
      %v522 = vunpack.c.l.b16 %v303
      %v523 = vunpack.c.l.b16 %v304
      %v524 = vunpack.c.l.b16 %v305
      %v525 = vunpack.c.l.b16 %v306
      %v526 = vunpack.c.l.b16 %v307
      %v527 = vunpack.c.l.b16 %v308
      %v528 = vpack.c.b16 %v513, %v512
      %v529 = vpack.c.b16 %v515, %v514
      %v530 = vpack.c.b16 %v517, %v516
      %v531 = vpack.c.b16 %v519, %v518
      %v532 = vpack.c.b16 %v521, %v520
      %v533 = vpack.c.b16 %v523, %v522
      %v534 = vpack.c.b16 %v525, %v524
      %v535 = vpack.c.b16 %v527, %v526
      %544 = vmatprep.subr.bf16.mxu0 0
      %545 = vmatpush1.bf16.msra.mxu0 %v528
      %546 = vmatprep.subr.bf16.mxu0 0
      %547 = vmatpush1.bf16.msra.mxu0 %v529
      %548 = vmatprep.subr.bf16.mxu0 0
      %549 = vmatpush1.bf16.msra.mxu0 %v530
      %550 = vmatprep.subr.bf16.mxu0 0
      %551 = vmatpush1.bf16.msra.mxu0 %v531
      %552 = vmatprep.subr.bf16.mxu0 0
      %553 = vmatpush1.bf16.msra.mxu0 %v532
      %554 = vmatprep.subr.bf16.mxu0 0
      %555 = vmatpush1.bf16.msra.mxu0 %v533
      %556 = vmatprep.subr.bf16.mxu0 0
      %557 = vmatpush1.bf16.msra.mxu0 %v534
      %558 = vmatprep.subr.bf16.mxu0 0
      %559 = vmatpush1.bf16.msra.mxu0 %v535
      %560 = vmatprep.subr.bf16.mxu0 0
      %561 = vmatpush1.bf16.msra.mxu0 0
      %562 = vmatprep.subr.bf16.mxu0 0
      %563 = vmatpush1.bf16.msra.mxu0 0
      %564 = vmatprep.subr.bf16.mxu0 0
      %565 = vmatpush1.bf16.msra.mxu0 0
      %566 = vmatprep.subr.bf16.mxu0 0
      %567 = vmatpush1.bf16.msra.mxu0 0
      %568 = vmatprep.subr.bf16.mxu0 0
      %569 = vmatpush1.bf16.msra.mxu0 0
      %570 = vmatprep.subr.bf16.mxu0 0
      %571 = vmatpush1.bf16.msra.mxu0 0
      %572 = vmatprep.subr.bf16.mxu0 0
      %573 = vmatpush1.bf16.msra.mxu0 0
      %574 = vmatprep.subr.bf16.mxu0 0
      %575 = vmatpush1.bf16.msra.mxu0 0
      %576 = vmatprep.mubr.bf16.mxu0 0
      %577 = vmatmul.mubr.bf16.gmra.mrb[0].mxu0 %v488
      %v578 = vpop.f32.mrb[0].mxu0
      %v579 = vadd.f32 %v442, %v578
      %v580 = vpop.f32.mrb[0].mxu0
      %v581 = vpop.f32.mrb[0].mxu0
      %v582 = vadd.f32 %v445, %v581
      %v583 = vpop.f32.mrb[0].mxu0
      %584 = vmatprep.mubr.bf16.mxu0 0
      %585 = vmatmul.mubr.bf16.gmra.mrb[0].mxu0 %v489
      %v586 = vpop.f32.mrb[0].mxu0
      %v587 = vadd.f32 %v450, %v586
      %v588 = vpop.f32.mrb[0].mxu0
      %v589 = vpop.f32.mrb[0].mxu0
      %v590 = vadd.f32 %v453, %v589
      %v591 = vpop.f32.mrb[0].mxu0
      %592 = vmatprep.mubr.bf16.mxu0 0
      %593 = vmatmul.mubr.bf16.gmra.mrb[0].mxu0 %v490
      %v594 = vpop.f32.mrb[0].mxu0
      %v595 = vadd.f32 %v458, %v594
      %v596 = vpop.f32.mrb[0].mxu0
      %v597 = vpop.f32.mrb[0].mxu0
      %v598 = vadd.f32 %v461, %v597
      %v599 = vpop.f32.mrb[0].mxu0
      %600 = vmatprep.mubr.bf16.mxu0 0
      %601 = vmatmul.mubr.bf16.gmra.mrb[0].mxu0 %v491
      %v602 = vpop.f32.mrb[0].mxu0
      %v603 = vadd.f32 %v466, %v602
      %v604 = vpop.f32.mrb[0].mxu0
      %v605 = vpop.f32.mrb[0].mxu0
      %v606 = vadd.f32 %v469, %v605
      %v607 = vpop.f32.mrb[0].mxu0
      %608 = vdwg.mxu0
      %v609 = vld [vmem:[%s277] sm:$0xf]
      %v610 = vld [vmem:[%s277 + $0x4] sm:$0x1]
      %v611 = vld [vmem:[%s277 + $0x8] sm:$0xf]
      %v612 = vld [vmem:[%s277 + $0xc] sm:$0x1]
      %v613 = vld [vmem:[%s277 + $0x10] sm:$0xf]
      %v614 = vld [vmem:[%s277 + $0x14] sm:$0x1]
      %v615 = vld [vmem:[%s277 + $0x18] sm:$0xf]
      %v616 = vld [vmem:[%s277 + $0x1c] sm:$0x1]
      %v617 = vld [vmem:[%s277 + $0x20] sm:$0xf]
      %v618 = vld [vmem:[%s277 + $0x24] sm:$0x1]
      %v619 = vld [vmem:[%s277 + $0x28] sm:$0xf]
      %v620 = vld [vmem:[%s277 + $0x2c] sm:$0x1]
      %v621 = vld [vmem:[%s277 + $0x30] sm:$0xf]
      %v622 = vld [vmem:[%s277 + $0x34] sm:$0x1]
      %v623 = vld [vmem:[%s277 + $0x38] sm:$0xf]
      %v624 = vld [vmem:[%s277 + $0x3c] sm:$0x1]
      %vm625 = vsmask.f32 3328
      %vm626 = vsmask.f32 7440
      %vm627 = vmor %vm625, %vm626
      %v629 = vshrl.u32 %v609, 16
      %v631 = vrot.slane %v629, 4
      %v632 = vshll.u32 %v609, 16
      %v634 = vrot.slane %v632, 5
      %v635 = vor.u32 %v631, %v634
      %v636 = vrot.slane %v635, 4
      %v638 = vshll.u32 %v610, 16
      %v640 = vrot.slane %v638, 5
      %v641 = vsel %vm627, %v636, %v640
      %v643 = vshrl.u32 %v611, 16
      %v645 = vrot.slane %v643, 4
      %v646 = vshll.u32 %v611, 16
      %v648 = vrot.slane %v646, 5
      %v649 = vor.u32 %v645, %v648
      %v650 = vrot.slane %v649, 4
      %v652 = vshll.u32 %v612, 16
      %v654 = vrot.slane %v652, 5
      %v655 = vsel %vm627, %v650, %v654
      %v657 = vshrl.u32 %v613, 16
      %v659 = vrot.slane %v657, 4
      %v660 = vshll.u32 %v613, 16
      %v662 = vrot.slane %v660, 5
      %v663 = vor.u32 %v659, %v662
      %v664 = vrot.slane %v663, 4
      %v666 = vshll.u32 %v614, 16
      %v668 = vrot.slane %v666, 5
      %v669 = vsel %vm627, %v664, %v668
      %v671 = vshrl.u32 %v615, 16
      %v673 = vrot.slane %v671, 4
      %v674 = vshll.u32 %v615, 16
      %v676 = vrot.slane %v674, 5
      %v677 = vor.u32 %v673, %v676
      %v678 = vrot.slane %v677, 4
      %v680 = vshll.u32 %v616, 16
      %v682 = vrot.slane %v680, 5
      %v683 = vsel %vm627, %v678, %v682
      %v685 = vshrl.u32 %v617, 16
      %v687 = vrot.slane %v685, 4
      %v688 = vshll.u32 %v617, 16
      %v690 = vrot.slane %v688, 5
      %v691 = vor.u32 %v687, %v690
      %v692 = vrot.slane %v691, 4
      %v694 = vshll.u32 %v618, 16
      %v696 = vrot.slane %v694, 5
      %v697 = vsel %vm627, %v692, %v696
      %v699 = vshrl.u32 %v619, 16
      %v701 = vrot.slane %v699, 4
      %v702 = vshll.u32 %v619, 16
      %v704 = vrot.slane %v702, 5
      %v705 = vor.u32 %v701, %v704
      %v706 = vrot.slane %v705, 4
      %v708 = vshll.u32 %v620, 16
      %v710 = vrot.slane %v708, 5
      %v711 = vsel %vm627, %v706, %v710
      %v713 = vshrl.u32 %v621, 16
      %v715 = vrot.slane %v713, 4
      %v716 = vshll.u32 %v621, 16
      %v718 = vrot.slane %v716, 5
      %v719 = vor.u32 %v715, %v718
      %v720 = vrot.slane %v719, 4
      %v722 = vshll.u32 %v622, 16
      %v724 = vrot.slane %v722, 5
      %v725 = vsel %vm627, %v720, %v724
      %v727 = vshrl.u32 %v623, 16
      %v729 = vrot.slane %v727, 4
      %v730 = vshll.u32 %v623, 16
      %v732 = vrot.slane %v730, 5
      %v733 = vor.u32 %v729, %v732
      %v734 = vrot.slane %v733, 4
      %v736 = vshll.u32 %v624, 16
      %v738 = vrot.slane %v736, 5
      %v739 = vsel %vm627, %v734, %v738
      %s740 = scalar_lea.vmem %s1, 128
      %v741 = vld [vmem:[%s740] sm:$0xf]
      %v742 = vld [vmem:[%s740 + $0x4] sm:$0xf]
      %v743 = vld [vmem:[%s740 + $0x8] sm:$0xf]
      %v744 = vld [vmem:[%s740 + $0xc] sm:$0xf]
      %v745 = vld [vmem:[%s740 + $0x10] sm:$0xf]
      %v746 = vld [vmem:[%s740 + $0x14] sm:$0xf]
      %v747 = vld [vmem:[%s740 + $0x18] sm:$0xf]
      %v748 = vld [vmem:[%s740 + $0x1c] sm:$0xf]
      %v749 = vld [vmem:[%s740 + $0x20] sm:$0xf]
      %v750 = vld [vmem:[%s740 + $0x24] sm:$0xf]
      %v751 = vld [vmem:[%s740 + $0x28] sm:$0xf]
      %v752 = vld [vmem:[%s740 + $0x2c] sm:$0xf]
      %v753 = vld [vmem:[%s740 + $0x30] sm:$0xf]
      %v754 = vld [vmem:[%s740 + $0x34] sm:$0xf]
      %v755 = vld [vmem:[%s740 + $0x38] sm:$0xf]
      %v756 = vld [vmem:[%s740 + $0x3c] sm:$0xf]
      %v757 = vunpack.c.l.b16 %v641
      %v758 = vunpack.c.l.b16 %v655
      %v759 = vunpack.c.l.b16 %v669
      %v760 = vunpack.c.l.b16 %v683
      %v761 = vunpack.c.l.b16 %v697
      %v762 = vunpack.c.l.b16 %v711
      %v763 = vunpack.c.l.b16 %v725
      %v764 = vunpack.c.l.b16 %v739
      %v765 = vpack.c.b16 %v758, %v757
      %v766 = vpack.c.b16 %v760, %v759
      %v767 = vpack.c.b16 %v762, %v761
      %v768 = vpack.c.b16 %v764, %v763
      %v789 = vunpack.c.l.b16 %v741
      %v790 = vunpack.c.l.b16 %v742
      %v791 = vunpack.c.l.b16 %v743
      %v792 = vunpack.c.l.b16 %v744
      %v793 = vunpack.c.l.b16 %v745
      %v794 = vunpack.c.l.b16 %v746
      %v795 = vunpack.c.l.b16 %v747
      %v796 = vunpack.c.l.b16 %v748
      %v797 = vunpack.c.l.b16 %v749
      %v798 = vunpack.c.l.b16 %v750
      %v799 = vunpack.c.l.b16 %v751
      %v800 = vunpack.c.l.b16 %v752
      %v801 = vunpack.c.l.b16 %v753
      %v802 = vunpack.c.l.b16 %v754
      %v803 = vunpack.c.l.b16 %v755
      %v804 = vunpack.c.l.b16 %v756
      %v805 = vpack.c.b16 %v790, %v789
      %v806 = vpack.c.b16 %v792, %v791
      %v807 = vpack.c.b16 %v794, %v793
      %v808 = vpack.c.b16 %v796, %v795
      %v809 = vpack.c.b16 %v798, %v797
      %v810 = vpack.c.b16 %v800, %v799
      %v811 = vpack.c.b16 %v802, %v801
      %v812 = vpack.c.b16 %v804, %v803
      %821 = vmatprep.subr.bf16.mxu0 0
      %822 = vmatpush1.bf16.msra.mxu0 %v805
      %823 = vmatprep.subr.bf16.mxu0 0
      %824 = vmatpush1.bf16.msra.mxu0 %v806
      %825 = vmatprep.subr.bf16.mxu0 0
      %826 = vmatpush1.bf16.msra.mxu0 %v807
      %827 = vmatprep.subr.bf16.mxu0 0
      %828 = vmatpush1.bf16.msra.mxu0 %v808
      %829 = vmatprep.subr.bf16.mxu0 0
      %830 = vmatpush1.bf16.msra.mxu0 %v809
      %831 = vmatprep.subr.bf16.mxu0 0
      %832 = vmatpush1.bf16.msra.mxu0 %v810
      %833 = vmatprep.subr.bf16.mxu0 0
      %834 = vmatpush1.bf16.msra.mxu0 %v811
      %835 = vmatprep.subr.bf16.mxu0 0
      %836 = vmatpush1.bf16.msra.mxu0 %v812
      %837 = vmatprep.subr.bf16.mxu0 0
      %838 = vmatpush1.bf16.msra.mxu0 0
      %839 = vmatprep.subr.bf16.mxu0 0
      %840 = vmatpush1.bf16.msra.mxu0 0
      %841 = vmatprep.subr.bf16.mxu0 0
      %842 = vmatpush1.bf16.msra.mxu0 0
      %843 = vmatprep.subr.bf16.mxu0 0
      %844 = vmatpush1.bf16.msra.mxu0 0
      %845 = vmatprep.subr.bf16.mxu0 0
      %846 = vmatpush1.bf16.msra.mxu0 0
      %847 = vmatprep.subr.bf16.mxu0 0
      %848 = vmatpush1.bf16.msra.mxu0 0
      %849 = vmatprep.subr.bf16.mxu0 0
      %850 = vmatpush1.bf16.msra.mxu0 0
      %851 = vmatprep.subr.bf16.mxu0 0
      %852 = vmatpush1.bf16.msra.mxu0 0
      %853 = vmatprep.mubr.bf16.mxu0 0
      %854 = vmatmul.mubr.bf16.gmra.mrb[0].mxu0 %v765
      %v855 = vpop.f32.mrb[0].mxu0
      %v856 = vadd.f32 0.0, %v855
      %v857 = vpop.f32.mrb[0].mxu0
      %v858 = vpop.f32.mrb[0].mxu0
      %v859 = vadd.f32 0.0, %v858
      %v860 = vpop.f32.mrb[0].mxu0
      %861 = vmatprep.mubr.bf16.mxu0 0
      %862 = vmatmul.mubr.bf16.gmra.mrb[0].mxu0 %v766
      %v863 = vpop.f32.mrb[0].mxu0
      %v864 = vadd.f32 0.0, %v863
      %v865 = vpop.f32.mrb[0].mxu0
      %v866 = vpop.f32.mrb[0].mxu0
      %v867 = vadd.f32 0.0, %v866
      %v868 = vpop.f32.mrb[0].mxu0
      %869 = vmatprep.mubr.bf16.mxu0 0
      %870 = vmatmul.mubr.bf16.gmra.mrb[0].mxu0 %v767
      %v871 = vpop.f32.mrb[0].mxu0
      %v872 = vadd.f32 0.0, %v871
      %v873 = vpop.f32.mrb[0].mxu0
      %v874 = vpop.f32.mrb[0].mxu0
      %v875 = vadd.f32 0.0, %v874
      %v876 = vpop.f32.mrb[0].mxu0
      %877 = vmatprep.mubr.bf16.mxu0 0
      %878 = vmatmul.mubr.bf16.gmra.mrb[0].mxu0 %v768
      %v879 = vpop.f32.mrb[0].mxu0
      %v880 = vadd.f32 0.0, %v879
      %v881 = vpop.f32.mrb[0].mxu0
      %v882 = vpop.f32.mrb[0].mxu0
      %v883 = vadd.f32 0.0, %v882
      %v884 = vpop.f32.mrb[0].mxu0
      %885 = vdwg.mxu0
      %v886 = vadd.f32 %v579, %v856
      %v887 = vadd.f32 %v582, %v859
      %v888 = vadd.f32 %v587, %v864
      %v889 = vadd.f32 %v590, %v867
      %v890 = vadd.f32 %v595, %v872
      %v891 = vadd.f32 %v598, %v875
      %v892 = vadd.f32 %v603, %v880
      %v893 = vadd.f32 %v606, %v883
      %s894 = scalar_lea.vmem %s277, 144
      %v895 = vld [vmem:[%s894] sm:$0xf]
      %v896 = vld [vmem:[%s894 + $0x8] sm:$0xf]
      %v897 = vld [vmem:[%s894 + $0x10] sm:$0xf]
      %v898 = vld [vmem:[%s894 + $0x18] sm:$0xf]
      %v899 = vld [vmem:[%s894 + $0x20] sm:$0xf]
      %v900 = vld [vmem:[%s894 + $0x28] sm:$0xf]
      %v901 = vld [vmem:[%s894 + $0x30] sm:$0xf]
      %v902 = vld [vmem:[%s894 + $0x38] sm:$0xf]
      %s903 = scalar_lea.vmem %s1, 192
      %v904 = vld [vmem:[%s903] sm:$0xf]
      %v905 = vld [vmem:[%s903 + $0x4] sm:$0xf]
      %v906 = vld [vmem:[%s903 + $0x8] sm:$0xf]
      %v907 = vld [vmem:[%s903 + $0xc] sm:$0xf]
      %v908 = vld [vmem:[%s903 + $0x10] sm:$0xf]
      %v909 = vld [vmem:[%s903 + $0x14] sm:$0xf]
      %v910 = vld [vmem:[%s903 + $0x18] sm:$0xf]
      %v911 = vld [vmem:[%s903 + $0x1c] sm:$0xf]
      %v912 = vld [vmem:[%s903 + $0x20] sm:$0xf]
      %v913 = vld [vmem:[%s903 + $0x24] sm:$0xf]
      %v914 = vld [vmem:[%s903 + $0x28] sm:$0xf]
      %v915 = vld [vmem:[%s903 + $0x2c] sm:$0xf]
      %v916 = vld [vmem:[%s903 + $0x30] sm:$0xf]
      %v917 = vld [vmem:[%s903 + $0x34] sm:$0xf]
      %v918 = vld [vmem:[%s903 + $0x38] sm:$0xf]
      %v919 = vld [vmem:[%s903 + $0x3c] sm:$0xf]
      %v928 = vunpack.c.l.b16 %v895
      %v929 = vunpack.c.l.b16 %v896
      %v930 = vunpack.c.l.b16 %v897
      %v931 = vunpack.c.l.b16 %v898
      %v932 = vunpack.c.l.b16 %v899
      %v933 = vunpack.c.l.b16 %v900
      %v934 = vunpack.c.l.b16 %v901
      %v935 = vunpack.c.l.b16 %v902
      %v936 = vpack.c.b16 %v929, %v928
      %v937 = vpack.c.b16 %v931, %v930
      %v938 = vpack.c.b16 %v933, %v932
      %v939 = vpack.c.b16 %v935, %v934
      %v960 = vunpack.c.l.b16 %v904
      %v961 = vunpack.c.l.b16 %v905
      %v962 = vunpack.c.l.b16 %v906
      %v963 = vunpack.c.l.b16 %v907
      %v964 = vunpack.c.l.b16 %v908
      %v965 = vunpack.c.l.b16 %v909
      %v966 = vunpack.c.l.b16 %v910
      %v967 = vunpack.c.l.b16 %v911
      %v968 = vunpack.c.l.b16 %v912
      %v969 = vunpack.c.l.b16 %v913
      %v970 = vunpack.c.l.b16 %v914
      %v971 = vunpack.c.l.b16 %v915
      %v972 = vunpack.c.l.b16 %v916
      %v973 = vunpack.c.l.b16 %v917
      %v974 = vunpack.c.l.b16 %v918
      %v975 = vunpack.c.l.b16 %v919
      %v976 = vpack.c.b16 %v961, %v960
      %v977 = vpack.c.b16 %v963, %v962
      %v978 = vpack.c.b16 %v965, %v964
      %v979 = vpack.c.b16 %v967, %v966
      %v980 = vpack.c.b16 %v969, %v968
      %v981 = vpack.c.b16 %v971, %v970
      %v982 = vpack.c.b16 %v973, %v972
      %v983 = vpack.c.b16 %v975, %v974
      %992 = vmatprep.subr.bf16.mxu0 0
      %993 = vmatpush1.bf16.msra.mxu0 %v976
      %994 = vmatprep.subr.bf16.mxu0 0
      %995 = vmatpush1.bf16.msra.mxu0 %v977
      %996 = vmatprep.subr.bf16.mxu0 0
      %997 = vmatpush1.bf16.msra.mxu0 %v978
      %998 = vmatprep.subr.bf16.mxu0 0
      %999 = vmatpush1.bf16.msra.mxu0 %v979
      %1000 = vmatprep.subr.bf16.mxu0 0
      %1001 = vmatpush1.bf16.msra.mxu0 %v980
      %1002 = vmatprep.subr.bf16.mxu0 0
      %1003 = vmatpush1.bf16.msra.mxu0 %v981
      %1004 = vmatprep.subr.bf16.mxu0 0
      %1005 = vmatpush1.bf16.msra.mxu0 %v982
      %1006 = vmatprep.subr.bf16.mxu0 0
      %1007 = vmatpush1.bf16.msra.mxu0 %v983
      %1008 = vmatprep.subr.bf16.mxu0 0
      %1009 = vmatpush1.bf16.msra.mxu0 0
      %1010 = vmatprep.subr.bf16.mxu0 0
      %1011 = vmatpush1.bf16.msra.mxu0 0
      %1012 = vmatprep.subr.bf16.mxu0 0
      %1013 = vmatpush1.bf16.msra.mxu0 0
      %1014 = vmatprep.subr.bf16.mxu0 0
      %1015 = vmatpush1.bf16.msra.mxu0 0
      %1016 = vmatprep.subr.bf16.mxu0 0
      %1017 = vmatpush1.bf16.msra.mxu0 0
      %1018 = vmatprep.subr.bf16.mxu0 0
      %1019 = vmatpush1.bf16.msra.mxu0 0
      %1020 = vmatprep.subr.bf16.mxu0 0
      %1021 = vmatpush1.bf16.msra.mxu0 0
      %1022 = vmatprep.subr.bf16.mxu0 0
      %1023 = vmatpush1.bf16.msra.mxu0 0
      %1024 = vmatprep.mubr.bf16.mxu0 0
      %1025 = vmatmul.mubr.bf16.gmra.mrb[0].mxu0 %v936
      %v1026 = vpop.f32.mrb[0].mxu0
      %v1027 = vadd.f32 0.0, %v1026
      %v1028 = vpop.f32.mrb[0].mxu0
      %v1029 = vpop.f32.mrb[0].mxu0
      %v1030 = vadd.f32 0.0, %v1029
      %v1031 = vpop.f32.mrb[0].mxu0
      %1032 = vmatprep.mubr.bf16.mxu0 0
      %1033 = vmatmul.mubr.bf16.gmra.mrb[0].mxu0 %v937
      %v1034 = vpop.f32.mrb[0].mxu0
      %v1035 = vadd.f32 0.0, %v1034
      %v1036 = vpop.f32.mrb[0].mxu0
      %v1037 = vpop.f32.mrb[0].mxu0
      %v1038 = vadd.f32 0.0, %v1037
      %v1039 = vpop.f32.mrb[0].mxu0
      %1040 = vmatprep.mubr.bf16.mxu0 0
      %1041 = vmatmul.mubr.bf16.gmra.mrb[0].mxu0 %v938
      %v1042 = vpop.f32.mrb[0].mxu0
      %v1043 = vadd.f32 0.0, %v1042
      %v1044 = vpop.f32.mrb[0].mxu0
      %v1045 = vpop.f32.mrb[0].mxu0
      %v1046 = vadd.f32 0.0, %v1045
      %v1047 = vpop.f32.mrb[0].mxu0
      %1048 = vmatprep.mubr.bf16.mxu0 0
      %1049 = vmatmul.mubr.bf16.gmra.mrb[0].mxu0 %v939
      %v1050 = vpop.f32.mrb[0].mxu0
      %v1051 = vadd.f32 0.0, %v1050
      %v1052 = vpop.f32.mrb[0].mxu0
      %v1053 = vpop.f32.mrb[0].mxu0
      %v1054 = vadd.f32 0.0, %v1053
      %v1055 = vpop.f32.mrb[0].mxu0
      %1056 = vdwg.mxu0
      %v1057 = vadd.f32 %v886, %v1027
      %v1058 = vadd.f32 %v887, %v1030
      %v1059 = vadd.f32 %v888, %v1035
      %v1060 = vadd.f32 %v889, %v1038
      %v1061 = vadd.f32 %v890, %v1043
      %v1062 = vadd.f32 %v891, %v1046
      %v1063 = vadd.f32 %v892, %v1051
      %v1064 = vadd.f32 %v893, %v1054
      %s1065 = scalar_lea.vmem %s277, 216
      %v1066 = vld [vmem:[%s1065] sm:$0xf]
      %v1067 = vld [vmem:[%s1065 + $0x8] sm:$0xf]
      %v1068 = vld [vmem:[%s1065 + $0x10] sm:$0xf]
      %v1069 = vld [vmem:[%s1065 + $0x18] sm:$0xf]
      %v1070 = vld [vmem:[%s1065 + $0x20] sm:$0xf]
      %v1071 = vld [vmem:[%s1065 + $0x28] sm:$0xf]
      %v1072 = vld [vmem:[%s1065 + $0x30] sm:$0xf]
      %v1073 = vld [vmem:[%s1065 + $0x38] sm:$0xf]
      %s1074 = scalar_lea.vmem %s1, 256
      %v1075 = vld [vmem:[%s1074] sm:$0xf]
      %v1076 = vld [vmem:[%s1074 + $0x4] sm:$0xf]
      %v1077 = vld [vmem:[%s1074 + $0x8] sm:$0xf]
      %v1078 = vld [vmem:[%s1074 + $0xc] sm:$0xf]
      %v1079 = vld [vmem:[%s1074 + $0x10] sm:$0xf]
      %v1080 = vld [vmem:[%s1074 + $0x14] sm:$0xf]
      %v1081 = vld [vmem:[%s1074 + $0x18] sm:$0xf]
      %v1082 = vld [vmem:[%s1074 + $0x1c] sm:$0xf]
      %v1083 = vld [vmem:[%s1074 + $0x20] sm:$0xf]
      %v1084 = vld [vmem:[%s1074 + $0x24] sm:$0xf]
      %v1085 = vld [vmem:[%s1074 + $0x28] sm:$0xf]
      %v1086 = vld [vmem:[%s1074 + $0x2c] sm:$0xf]
      %v1087 = vld [vmem:[%s1074 + $0x30] sm:$0xf]
      %v1088 = vld [vmem:[%s1074 + $0x34] sm:$0xf]
      %v1089 = vld [vmem:[%s1074 + $0x38] sm:$0xf]
      %v1090 = vld [vmem:[%s1074 + $0x3c] sm:$0xf]
      %v1099 = vunpack.c.l.b16 %v1066
      %v1100 = vunpack.c.l.b16 %v1067
      %v1101 = vunpack.c.l.b16 %v1068
      %v1102 = vunpack.c.l.b16 %v1069
      %v1103 = vunpack.c.l.b16 %v1070
      %v1104 = vunpack.c.l.b16 %v1071
      %v1105 = vunpack.c.l.b16 %v1072
      %v1106 = vunpack.c.l.b16 %v1073
      %v1107 = vpack.c.b16 %v1100, %v1099
      %v1108 = vpack.c.b16 %v1102, %v1101
      %v1109 = vpack.c.b16 %v1104, %v1103
      %v1110 = vpack.c.b16 %v1106, %v1105
      %v1131 = vunpack.c.l.b16 %v1075
      %v1132 = vunpack.c.l.b16 %v1076
      %v1133 = vunpack.c.l.b16 %v1077
      %v1134 = vunpack.c.l.b16 %v1078
      %v1135 = vunpack.c.l.b16 %v1079
      %v1136 = vunpack.c.l.b16 %v1080
      %v1137 = vunpack.c.l.b16 %v1081
      %v1138 = vunpack.c.l.b16 %v1082
      %v1139 = vunpack.c.l.b16 %v1083
      %v1140 = vunpack.c.l.b16 %v1084
      %v1141 = vunpack.c.l.b16 %v1085
      %v1142 = vunpack.c.l.b16 %v1086
      %v1143 = vunpack.c.l.b16 %v1087
      %v1144 = vunpack.c.l.b16 %v1088
      %v1145 = vunpack.c.l.b16 %v1089
      %v1146 = vunpack.c.l.b16 %v1090
      %v1147 = vpack.c.b16 %v1132, %v1131
      %v1148 = vpack.c.b16 %v1134, %v1133
      %v1149 = vpack.c.b16 %v1136, %v1135
      %v1150 = vpack.c.b16 %v1138, %v1137
      %v1151 = vpack.c.b16 %v1140, %v1139
      %v1152 = vpack.c.b16 %v1142, %v1141
      %v1153 = vpack.c.b16 %v1144, %v1143
      %v1154 = vpack.c.b16 %v1146, %v1145
      %1163 = vmatprep.subr.bf16.mxu0 0
      %1164 = vmatpush1.bf16.msra.mxu0 %v1147
      %1165 = vmatprep.subr.bf16.mxu0 0
      %1166 = vmatpush1.bf16.msra.mxu0 %v1148
      %1167 = vmatprep.subr.bf16.mxu0 0
      %1168 = vmatpush1.bf16.msra.mxu0 %v1149
      %1169 = vmatprep.subr.bf16.mxu0 0
      %1170 = vmatpush1.bf16.msra.mxu0 %v1150
      %1171 = vmatprep.subr.bf16.mxu0 0
      %1172 = vmatpush1.bf16.msra.mxu0 %v1151
      %1173 = vmatprep.subr.bf16.mxu0 0
      %1174 = vmatpush1.bf16.msra.mxu0 %v1152
      %1175 = vmatprep.subr.bf16.mxu0 0
      %1176 = vmatpush1.bf16.msra.mxu0 %v1153
      %1177 = vmatprep.subr.bf16.mxu0 0
      %1178 = vmatpush1.bf16.msra.mxu0 %v1154
      %1179 = vmatprep.subr.bf16.mxu0 0
      %1180 = vmatpush1.bf16.msra.mxu0 0
      %1181 = vmatprep.subr.bf16.mxu0 0
      %1182 = vmatpush1.bf16.msra.mxu0 0
      %1183 = vmatprep.subr.bf16.mxu0 0
      %1184 = vmatpush1.bf16.msra.mxu0 0
      %1185 = vmatprep.subr.bf16.mxu0 0
      %1186 = vmatpush1.bf16.msra.mxu0 0
      %1187 = vmatprep.subr.bf16.mxu0 0
      %1188 = vmatpush1.bf16.msra.mxu0 0
      %1189 = vmatprep.subr.bf16.mxu0 0
      %1190 = vmatpush1.bf16.msra.mxu0 0
      %1191 = vmatprep.subr.bf16.mxu0 0
      %1192 = vmatpush1.bf16.msra.mxu0 0
      %1193 = vmatprep.subr.bf16.mxu0 0
      %1194 = vmatpush1.bf16.msra.mxu0 0
      %1195 = vmatprep.mubr.bf16.mxu0 0
      %1196 = vmatmul.mubr.bf16.gmra.mrb[0].mxu0 %v1107
      %v1197 = vpop.f32.mrb[0].mxu0
      %v1198 = vadd.f32 0.0, %v1197
      %v1199 = vpop.f32.mrb[0].mxu0
      %v1200 = vpop.f32.mrb[0].mxu0
      %v1201 = vadd.f32 0.0, %v1200
      %v1202 = vpop.f32.mrb[0].mxu0
      %1203 = vmatprep.mubr.bf16.mxu0 0
      %1204 = vmatmul.mubr.bf16.gmra.mrb[0].mxu0 %v1108
      %v1205 = vpop.f32.mrb[0].mxu0
      %v1206 = vadd.f32 0.0, %v1205
      %v1207 = vpop.f32.mrb[0].mxu0
      %v1208 = vpop.f32.mrb[0].mxu0
      %v1209 = vadd.f32 0.0, %v1208
      %v1210 = vpop.f32.mrb[0].mxu0
      %1211 = vmatprep.mubr.bf16.mxu0 0
      %1212 = vmatmul.mubr.bf16.gmra.mrb[0].mxu0 %v1109
      %v1213 = vpop.f32.mrb[0].mxu0
      %v1214 = vadd.f32 0.0, %v1213
      %v1215 = vpop.f32.mrb[0].mxu0
      %v1216 = vpop.f32.mrb[0].mxu0
      %v1217 = vadd.f32 0.0, %v1216
      %v1218 = vpop.f32.mrb[0].mxu0
      %1219 = vmatprep.mubr.bf16.mxu0 0
      %1220 = vmatmul.mubr.bf16.gmra.mrb[0].mxu0 %v1110
      %v1221 = vpop.f32.mrb[0].mxu0
      %v1222 = vadd.f32 0.0, %v1221
      %v1223 = vpop.f32.mrb[0].mxu0
      %v1224 = vpop.f32.mrb[0].mxu0
      %v1225 = vadd.f32 0.0, %v1224
      %v1226 = vpop.f32.mrb[0].mxu0
      %1227 = vdwg.mxu0
      %v1228 = vadd.f32 %v1057, %v1198
      %v1229 = vadd.f32 %v1058, %v1201
      %v1230 = vadd.f32 %v1059, %v1206
      %v1231 = vadd.f32 %v1060, %v1209
      %v1232 = vadd.f32 %v1061, %v1214
      %v1233 = vadd.f32 %v1062, %v1217
      %v1234 = vadd.f32 %v1063, %v1222
      %v1235 = vadd.f32 %v1064, %v1225
      %v1236 = vld [vmem:[%s894] sm:$0xf]
      %v1237 = vld [vmem:[%s894 + $0x4] sm:$0x1]
      %v1238 = vld [vmem:[%s894 + $0x8] sm:$0xf]
      %v1239 = vld [vmem:[%s894 + $0xc] sm:$0x1]
      %v1240 = vld [vmem:[%s894 + $0x10] sm:$0xf]
      %v1241 = vld [vmem:[%s894 + $0x14] sm:$0x1]
      %v1242 = vld [vmem:[%s894 + $0x18] sm:$0xf]
      %v1243 = vld [vmem:[%s894 + $0x1c] sm:$0x1]
      %v1244 = vld [vmem:[%s894 + $0x20] sm:$0xf]
      %v1245 = vld [vmem:[%s894 + $0x24] sm:$0x1]
      %v1246 = vld [vmem:[%s894 + $0x28] sm:$0xf]
      %v1247 = vld [vmem:[%s894 + $0x2c] sm:$0x1]
      %v1248 = vld [vmem:[%s894 + $0x30] sm:$0xf]
      %v1249 = vld [vmem:[%s894 + $0x34] sm:$0x1]
      %v1250 = vld [vmem:[%s894 + $0x38] sm:$0xf]
      %v1251 = vld [vmem:[%s894 + $0x3c] sm:$0x1]
      %v1253 = vshrl.u32 %v1236, 16
      %v1255 = vrot.slane %v1253, 4
      %v1256 = vshll.u32 %v1236, 16
      %v1258 = vrot.slane %v1256, 5
      %v1259 = vor.u32 %v1255, %v1258
      %v1260 = vrot.slane %v1259, 4
      %v1262 = vshll.u32 %v1237, 16
      %v1264 = vrot.slane %v1262, 5
      %v1265 = vsel %vm627, %v1260, %v1264
      %v1267 = vshrl.u32 %v1238, 16
      %v1269 = vrot.slane %v1267, 4
      %v1270 = vshll.u32 %v1238, 16
      %v1272 = vrot.slane %v1270, 5
      %v1273 = vor.u32 %v1269, %v1272
      %v1274 = vrot.slane %v1273, 4
      %v1276 = vshll.u32 %v1239, 16
      %v1278 = vrot.slane %v1276, 5
      %v1279 = vsel %vm627, %v1274, %v1278
      %v1281 = vshrl.u32 %v1240, 16
      %v1283 = vrot.slane %v1281, 4
      %v1284 = vshll.u32 %v1240, 16
      %v1286 = vrot.slane %v1284, 5
      %v1287 = vor.u32 %v1283, %v1286
      %v1288 = vrot.slane %v1287, 4
      %v1290 = vshll.u32 %v1241, 16
      %v1292 = vrot.slane %v1290, 5
      %v1293 = vsel %vm627, %v1288, %v1292
      %v1295 = vshrl.u32 %v1242, 16
      %v1297 = vrot.slane %v1295, 4
      %v1298 = vshll.u32 %v1242, 16
      %v1300 = vrot.slane %v1298, 5
      %v1301 = vor.u32 %v1297, %v1300
      %v1302 = vrot.slane %v1301, 4
      %v1304 = vshll.u32 %v1243, 16
      %v1306 = vrot.slane %v1304, 5
      %v1307 = vsel %vm627, %v1302, %v1306
      %v1309 = vshrl.u32 %v1244, 16
      %v1311 = vrot.slane %v1309, 4
      %v1312 = vshll.u32 %v1244, 16
      %v1314 = vrot.slane %v1312, 5
      %v1315 = vor.u32 %v1311, %v1314
      %v1316 = vrot.slane %v1315, 4
      %v1318 = vshll.u32 %v1245, 16
      %v1320 = vrot.slane %v1318, 5
      %v1321 = vsel %vm627, %v1316, %v1320
      %v1323 = vshrl.u32 %v1246, 16
      %v1325 = vrot.slane %v1323, 4
      %v1326 = vshll.u32 %v1246, 16
      %v1328 = vrot.slane %v1326, 5
      %v1329 = vor.u32 %v1325, %v1328
      %v1330 = vrot.slane %v1329, 4
      %v1332 = vshll.u32 %v1247, 16
      %v1334 = vrot.slane %v1332, 5
      %v1335 = vsel %vm627, %v1330, %v1334
      %v1337 = vshrl.u32 %v1248, 16
      %v1339 = vrot.slane %v1337, 4
      %v1340 = vshll.u32 %v1248, 16
      %v1342 = vrot.slane %v1340, 5
      %v1343 = vor.u32 %v1339, %v1342
      %v1344 = vrot.slane %v1343, 4
      %v1346 = vshll.u32 %v1249, 16
      %v1348 = vrot.slane %v1346, 5
      %v1349 = vsel %vm627, %v1344, %v1348
      %v1351 = vshrl.u32 %v1250, 16
      %v1353 = vrot.slane %v1351, 4
      %v1354 = vshll.u32 %v1250, 16
      %v1356 = vrot.slane %v1354, 5
      %v1357 = vor.u32 %v1353, %v1356
      %v1358 = vrot.slane %v1357, 4
      %v1360 = vshll.u32 %v1251, 16
      %v1362 = vrot.slane %v1360, 5
      %v1363 = vsel %vm627, %v1358, %v1362
      %s1364 = scalar_lea.vmem %s1, 320
      %v1365 = vld [vmem:[%s1364] sm:$0xf]
      %v1366 = vld [vmem:[%s1364 + $0x4] sm:$0xf]
      %v1367 = vld [vmem:[%s1364 + $0x8] sm:$0xf]
      %v1368 = vld [vmem:[%s1364 + $0xc] sm:$0xf]
      %v1369 = vld [vmem:[%s1364 + $0x10] sm:$0xf]
      %v1370 = vld [vmem:[%s1364 + $0x14] sm:$0xf]
      %v1371 = vld [vmem:[%s1364 + $0x18] sm:$0xf]
      %v1372 = vld [vmem:[%s1364 + $0x1c] sm:$0xf]
      %v1373 = vld [vmem:[%s1364 + $0x20] sm:$0xf]
      %v1374 = vld [vmem:[%s1364 + $0x24] sm:$0xf]
      %v1375 = vld [vmem:[%s1364 + $0x28] sm:$0xf]
      %v1376 = vld [vmem:[%s1364 + $0x2c] sm:$0xf]
      %v1377 = vld [vmem:[%s1364 + $0x30] sm:$0xf]
      %v1378 = vld [vmem:[%s1364 + $0x34] sm:$0xf]
      %v1379 = vld [vmem:[%s1364 + $0x38] sm:$0xf]
      %v1380 = vld [vmem:[%s1364 + $0x3c] sm:$0xf]
      %v1381 = vunpack.c.l.b16 %v1265
      %v1382 = vunpack.c.l.b16 %v1279
      %v1383 = vunpack.c.l.b16 %v1293
      %v1384 = vunpack.c.l.b16 %v1307
      %v1385 = vunpack.c.l.b16 %v1321
      %v1386 = vunpack.c.l.b16 %v1335
      %v1387 = vunpack.c.l.b16 %v1349
      %v1388 = vunpack.c.l.b16 %v1363
      %v1389 = vpack.c.b16 %v1382, %v1381
      %v1390 = vpack.c.b16 %v1384, %v1383
      %v1391 = vpack.c.b16 %v1386, %v1385
      %v1392 = vpack.c.b16 %v1388, %v1387
      %v1413 = vunpack.c.l.b16 %v1365
      %v1414 = vunpack.c.l.b16 %v1366
      %v1415 = vunpack.c.l.b16 %v1367
      %v1416 = vunpack.c.l.b16 %v1368
      %v1417 = vunpack.c.l.b16 %v1369
      %v1418 = vunpack.c.l.b16 %v1370
      %v1419 = vunpack.c.l.b16 %v1371
      %v1420 = vunpack.c.l.b16 %v1372
      %v1421 = vunpack.c.l.b16 %v1373
      %v1422 = vunpack.c.l.b16 %v1374
      %v1423 = vunpack.c.l.b16 %v1375
      %v1424 = vunpack.c.l.b16 %v1376
      %v1425 = vunpack.c.l.b16 %v1377
      %v1426 = vunpack.c.l.b16 %v1378
      %v1427 = vunpack.c.l.b16 %v1379
      %v1428 = vunpack.c.l.b16 %v1380
      %v1429 = vpack.c.b16 %v1414, %v1413
      %v1430 = vpack.c.b16 %v1416, %v1415
      %v1431 = vpack.c.b16 %v1418, %v1417
      %v1432 = vpack.c.b16 %v1420, %v1419
      %v1433 = vpack.c.b16 %v1422, %v1421
      %v1434 = vpack.c.b16 %v1424, %v1423
      %v1435 = vpack.c.b16 %v1426, %v1425
      %v1436 = vpack.c.b16 %v1428, %v1427
      %1445 = vmatprep.subr.bf16.mxu0 0
      %1446 = vmatpush1.bf16.msra.mxu0 %v1429
      %1447 = vmatprep.subr.bf16.mxu0 0
      %1448 = vmatpush1.bf16.msra.mxu0 %v1430
      %1449 = vmatprep.subr.bf16.mxu0 0
      %1450 = vmatpush1.bf16.msra.mxu0 %v1431
      %1451 = vmatprep.subr.bf16.mxu0 0
      %1452 = vmatpush1.bf16.msra.mxu0 %v1432
      %1453 = vmatprep.subr.bf16.mxu0 0
      %1454 = vmatpush1.bf16.msra.mxu0 %v1433
      %1455 = vmatprep.subr.bf16.mxu0 0
      %1456 = vmatpush1.bf16.msra.mxu0 %v1434
      %1457 = vmatprep.subr.bf16.mxu0 0
      %1458 = vmatpush1.bf16.msra.mxu0 %v1435
      %1459 = vmatprep.subr.bf16.mxu0 0
      %1460 = vmatpush1.bf16.msra.mxu0 %v1436
      %1461 = vmatprep.subr.bf16.mxu0 0
      %1462 = vmatpush1.bf16.msra.mxu0 0
      %1463 = vmatprep.subr.bf16.mxu0 0
      %1464 = vmatpush1.bf16.msra.mxu0 0
      %1465 = vmatprep.subr.bf16.mxu0 0
      %1466 = vmatpush1.bf16.msra.mxu0 0
      %1467 = vmatprep.subr.bf16.mxu0 0
      %1468 = vmatpush1.bf16.msra.mxu0 0
      %1469 = vmatprep.subr.bf16.mxu0 0
      %1470 = vmatpush1.bf16.msra.mxu0 0
      %1471 = vmatprep.subr.bf16.mxu0 0
      %1472 = vmatpush1.bf16.msra.mxu0 0
      %1473 = vmatprep.subr.bf16.mxu0 0
      %1474 = vmatpush1.bf16.msra.mxu0 0
      %1475 = vmatprep.subr.bf16.mxu0 0
      %1476 = vmatpush1.bf16.msra.mxu0 0
      %1477 = vmatprep.mubr.bf16.mxu0 0
      %1478 = vmatmul.mubr.bf16.gmra.mrb[0].mxu0 %v1389
      %v1479 = vpop.f32.mrb[0].mxu0
      %v1480 = vadd.f32 0.0, %v1479
      %v1481 = vpop.f32.mrb[0].mxu0
      %v1482 = vpop.f32.mrb[0].mxu0
      %v1483 = vadd.f32 0.0, %v1482
      %v1484 = vpop.f32.mrb[0].mxu0
      %1485 = vmatprep.mubr.bf16.mxu0 0
      %1486 = vmatmul.mubr.bf16.gmra.mrb[0].mxu0 %v1390
      %v1487 = vpop.f32.mrb[0].mxu0
      %v1488 = vadd.f32 0.0, %v1487
      %v1489 = vpop.f32.mrb[0].mxu0
      %v1490 = vpop.f32.mrb[0].mxu0
      %v1491 = vadd.f32 0.0, %v1490
      %v1492 = vpop.f32.mrb[0].mxu0
      %1493 = vmatprep.mubr.bf16.mxu0 0
      %1494 = vmatmul.mubr.bf16.gmra.mrb[0].mxu0 %v1391
      %v1495 = vpop.f32.mrb[0].mxu0
      %v1496 = vadd.f32 0.0, %v1495
      %v1497 = vpop.f32.mrb[0].mxu0
      %v1498 = vpop.f32.mrb[0].mxu0
      %v1499 = vadd.f32 0.0, %v1498
      %v1500 = vpop.f32.mrb[0].mxu0
      %1501 = vmatprep.mubr.bf16.mxu0 0
      %1502 = vmatmul.mubr.bf16.gmra.mrb[0].mxu0 %v1392
      %v1503 = vpop.f32.mrb[0].mxu0
      %v1504 = vadd.f32 0.0, %v1503
      %v1505 = vpop.f32.mrb[0].mxu0
      %v1506 = vpop.f32.mrb[0].mxu0
      %v1507 = vadd.f32 0.0, %v1506
      %v1508 = vpop.f32.mrb[0].mxu0
      %1509 = vdwg.mxu0
      %v1510 = vadd.f32 %v1228, %v1480
      %v1511 = vadd.f32 %v1229, %v1483
      %v1512 = vadd.f32 %v1230, %v1488
      %v1513 = vadd.f32 %v1231, %v1491
      %v1514 = vadd.f32 %v1232, %v1496
      %v1515 = vadd.f32 %v1233, %v1499
      %v1516 = vadd.f32 %v1234, %v1504
      %v1517 = vadd.f32 %v1235, %v1507
      %s1518 = scalar_lea.vmem %s277, 8
      %v1519 = vld [vmem:[%s1518] sm:$0xf]
      %v1520 = vld [vmem:[%s1518 + $0x8] sm:$0xf]
      %v1521 = vld [vmem:[%s1518 + $0x10] sm:$0xf]
      %v1522 = vld [vmem:[%s1518 + $0x18] sm:$0xf]
      %v1523 = vld [vmem:[%s1518 + $0x20] sm:$0xf]
      %v1524 = vld [vmem:[%s1518 + $0x28] sm:$0xf]
      %v1525 = vld [vmem:[%s1518 + $0x30] sm:$0xf]
      %v1526 = vld [vmem:[%s1518 + $0x38] sm:$0xf]
      %s1527 = scalar_lea.vmem %s1, 384
      %v1528 = vld [vmem:[%s1527] sm:$0xf]
      %v1529 = vld [vmem:[%s1527 + $0x4] sm:$0xf]
      %v1530 = vld [vmem:[%s1527 + $0x8] sm:$0xf]
      %v1531 = vld [vmem:[%s1527 + $0xc] sm:$0xf]
      %v1532 = vld [vmem:[%s1527 + $0x10] sm:$0xf]
      %v1533 = vld [vmem:[%s1527 + $0x14] sm:$0xf]
      %v1534 = vld [vmem:[%s1527 + $0x18] sm:$0xf]
      %v1535 = vld [vmem:[%s1527 + $0x1c] sm:$0xf]
      %v1536 = vld [vmem:[%s1527 + $0x20] sm:$0xf]
      %v1537 = vld [vmem:[%s1527 + $0x24] sm:$0xf]
      %v1538 = vld [vmem:[%s1527 + $0x28] sm:$0xf]
      %v1539 = vld [vmem:[%s1527 + $0x2c] sm:$0xf]
      %v1540 = vld [vmem:[%s1527 + $0x30] sm:$0xf]
      %v1541 = vld [vmem:[%s1527 + $0x34] sm:$0xf]
      %v1542 = vld [vmem:[%s1527 + $0x38] sm:$0xf]
      %v1543 = vld [vmem:[%s1527 + $0x3c] sm:$0xf]
      %v1552 = vunpack.c.l.b16 %v1519
      %v1553 = vunpack.c.l.b16 %v1520
      %v1554 = vunpack.c.l.b16 %v1521
      %v1555 = vunpack.c.l.b16 %v1522
      %v1556 = vunpack.c.l.b16 %v1523
      %v1557 = vunpack.c.l.b16 %v1524
      %v1558 = vunpack.c.l.b16 %v1525
      %v1559 = vunpack.c.l.b16 %v1526
      %v1560 = vpack.c.b16 %v1553, %v1552
      %v1561 = vpack.c.b16 %v1555, %v1554
      %v1562 = vpack.c.b16 %v1557, %v1556
      %v1563 = vpack.c.b16 %v1559, %v1558
      %v1584 = vunpack.c.l.b16 %v1528
      %v1585 = vunpack.c.l.b16 %v1529
      %v1586 = vunpack.c.l.b16 %v1530
      %v1587 = vunpack.c.l.b16 %v1531
      %v1588 = vunpack.c.l.b16 %v1532
      %v1589 = vunpack.c.l.b16 %v1533
      %v1590 = vunpack.c.l.b16 %v1534
      %v1591 = vunpack.c.l.b16 %v1535
      %v1592 = vunpack.c.l.b16 %v1536
      %v1593 = vunpack.c.l.b16 %v1537
      %v1594 = vunpack.c.l.b16 %v1538
      %v1595 = vunpack.c.l.b16 %v1539
      %v1596 = vunpack.c.l.b16 %v1540
      %v1597 = vunpack.c.l.b16 %v1541
      %v1598 = vunpack.c.l.b16 %v1542
      %v1599 = vunpack.c.l.b16 %v1543
      %v1600 = vpack.c.b16 %v1585, %v1584
      %v1601 = vpack.c.b16 %v1587, %v1586
      %v1602 = vpack.c.b16 %v1589, %v1588
      %v1603 = vpack.c.b16 %v1591, %v1590
      %v1604 = vpack.c.b16 %v1593, %v1592
      %v1605 = vpack.c.b16 %v1595, %v1594
      %v1606 = vpack.c.b16 %v1597, %v1596
      %v1607 = vpack.c.b16 %v1599, %v1598
      %1616 = vmatprep.subr.bf16.mxu0 0
      %1617 = vmatpush1.bf16.msra.mxu0 %v1600
      %1618 = vmatprep.subr.bf16.mxu0 0
      %1619 = vmatpush1.bf16.msra.mxu0 %v1601
      %1620 = vmatprep.subr.bf16.mxu0 0
      %1621 = vmatpush1.bf16.msra.mxu0 %v1602
      %1622 = vmatprep.subr.bf16.mxu0 0
      %1623 = vmatpush1.bf16.msra.mxu0 %v1603
      %1624 = vmatprep.subr.bf16.mxu0 0
      %1625 = vmatpush1.bf16.msra.mxu0 %v1604
      %1626 = vmatprep.subr.bf16.mxu0 0
      %1627 = vmatpush1.bf16.msra.mxu0 %v1605
      %1628 = vmatprep.subr.bf16.mxu0 0
      %1629 = vmatpush1.bf16.msra.mxu0 %v1606
      %1630 = vmatprep.subr.bf16.mxu0 0
      %1631 = vmatpush1.bf16.msra.mxu0 %v1607
      %1632 = vmatprep.subr.bf16.mxu0 0
      %1633 = vmatpush1.bf16.msra.mxu0 0
      %1634 = vmatprep.subr.bf16.mxu0 0
      %1635 = vmatpush1.bf16.msra.mxu0 0
      %1636 = vmatprep.subr.bf16.mxu0 0
      %1637 = vmatpush1.bf16.msra.mxu0 0
      %1638 = vmatprep.subr.bf16.mxu0 0
      %1639 = vmatpush1.bf16.msra.mxu0 0
      %1640 = vmatprep.subr.bf16.mxu0 0
      %1641 = vmatpush1.bf16.msra.mxu0 0
      %1642 = vmatprep.subr.bf16.mxu0 0
      %1643 = vmatpush1.bf16.msra.mxu0 0
      %1644 = vmatprep.subr.bf16.mxu0 0
      %1645 = vmatpush1.bf16.msra.mxu0 0
      %1646 = vmatprep.subr.bf16.mxu0 0
      %1647 = vmatpush1.bf16.msra.mxu0 0
      %1648 = vmatprep.mubr.bf16.mxu0 0
      %1649 = vmatmul.mubr.bf16.gmra.mrb[0].mxu0 %v1560
      %v1650 = vpop.f32.mrb[0].mxu0
      %v1651 = vadd.f32 0.0, %v1650
      %v1652 = vpop.f32.mrb[0].mxu0
      %v1653 = vpop.f32.mrb[0].mxu0
      %v1654 = vadd.f32 0.0, %v1653
      %v1655 = vpop.f32.mrb[0].mxu0
      %1656 = vmatprep.mubr.bf16.mxu0 0
      %1657 = vmatmul.mubr.bf16.gmra.mrb[0].mxu0 %v1561
      %v1658 = vpop.f32.mrb[0].mxu0
      %v1659 = vadd.f32 0.0, %v1658
      %v1660 = vpop.f32.mrb[0].mxu0
      %v1661 = vpop.f32.mrb[0].mxu0
      %v1662 = vadd.f32 0.0, %v1661
      %v1663 = vpop.f32.mrb[0].mxu0
      %1664 = vmatprep.mubr.bf16.mxu0 0
      %1665 = vmatmul.mubr.bf16.gmra.mrb[0].mxu0 %v1562
      %v1666 = vpop.f32.mrb[0].mxu0
      %v1667 = vadd.f32 0.0, %v1666
      %v1668 = vpop.f32.mrb[0].mxu0
      %v1669 = vpop.f32.mrb[0].mxu0
      %v1670 = vadd.f32 0.0, %v1669
      %v1671 = vpop.f32.mrb[0].mxu0
      %1672 = vmatprep.mubr.bf16.mxu0 0
      %1673 = vmatmul.mubr.bf16.gmra.mrb[0].mxu0 %v1563
      %v1674 = vpop.f32.mrb[0].mxu0
      %v1675 = vadd.f32 0.0, %v1674
      %v1676 = vpop.f32.mrb[0].mxu0
      %v1677 = vpop.f32.mrb[0].mxu0
      %v1678 = vadd.f32 0.0, %v1677
      %v1679 = vpop.f32.mrb[0].mxu0
      %1680 = vdwg.mxu0
      %v1681 = vadd.f32 %v1510, %v1651
      %v1682 = vadd.f32 %v1511, %v1654
      %v1683 = vadd.f32 %v1512, %v1659
      %v1684 = vadd.f32 %v1513, %v1662
      %v1685 = vadd.f32 %v1514, %v1667
      %v1686 = vadd.f32 %v1515, %v1670
      %v1687 = vadd.f32 %v1516, %v1675
      %v1688 = vadd.f32 %v1517, %v1678
      %s1689 = scalar_lea.vmem %s277, 80
      %v1690 = vld [vmem:[%s1689] sm:$0xf]
      %v1691 = vld [vmem:[%s1689 + $0x8] sm:$0xf]
      %v1692 = vld [vmem:[%s1689 + $0x10] sm:$0xf]
      %v1693 = vld [vmem:[%s1689 + $0x18] sm:$0xf]
      %v1694 = vld [vmem:[%s1689 + $0x20] sm:$0xf]
      %v1695 = vld [vmem:[%s1689 + $0x28] sm:$0xf]
      %v1696 = vld [vmem:[%s1689 + $0x30] sm:$0xf]
      %v1697 = vld [vmem:[%s1689 + $0x38] sm:$0xf]
      %s1698 = scalar_lea.vmem %s1, 448
      %v1699 = vld [vmem:[%s1698] sm:$0xf]
      %v1700 = vld [vmem:[%s1698 + $0x4] sm:$0xf]
      %v1701 = vld [vmem:[%s1698 + $0x8] sm:$0xf]
      %v1702 = vld [vmem:[%s1698 + $0xc] sm:$0xf]
      %v1703 = vld [vmem:[%s1698 + $0x10] sm:$0xf]
      %v1704 = vld [vmem:[%s1698 + $0x14] sm:$0xf]
      %v1705 = vld [vmem:[%s1698 + $0x18] sm:$0xf]
      %v1706 = vld [vmem:[%s1698 + $0x1c] sm:$0xf]
      %v1707 = vld [vmem:[%s1698 + $0x20] sm:$0xf]
      %v1708 = vld [vmem:[%s1698 + $0x24] sm:$0xf]
      %v1709 = vld [vmem:[%s1698 + $0x28] sm:$0xf]
      %v1710 = vld [vmem:[%s1698 + $0x2c] sm:$0xf]
      %v1711 = vld [vmem:[%s1698 + $0x30] sm:$0xf]
      %v1712 = vld [vmem:[%s1698 + $0x34] sm:$0xf]
      %v1713 = vld [vmem:[%s1698 + $0x38] sm:$0xf]
      %v1714 = vld [vmem:[%s1698 + $0x3c] sm:$0xf]
      %v1723 = vunpack.c.l.b16 %v1690
      %v1724 = vunpack.c.l.b16 %v1691
      %v1725 = vunpack.c.l.b16 %v1692
      %v1726 = vunpack.c.l.b16 %v1693
      %v1727 = vunpack.c.l.b16 %v1694
      %v1728 = vunpack.c.l.b16 %v1695
      %v1729 = vunpack.c.l.b16 %v1696
      %v1730 = vunpack.c.l.b16 %v1697
      %v1731 = vpack.c.b16 %v1724, %v1723
      %v1732 = vpack.c.b16 %v1726, %v1725
      %v1733 = vpack.c.b16 %v1728, %v1727
      %v1734 = vpack.c.b16 %v1730, %v1729
      %v1755 = vunpack.c.l.b16 %v1699
      %v1756 = vunpack.c.l.b16 %v1700
      %v1757 = vunpack.c.l.b16 %v1701
      %v1758 = vunpack.c.l.b16 %v1702
      %v1759 = vunpack.c.l.b16 %v1703
      %v1760 = vunpack.c.l.b16 %v1704
      %v1761 = vunpack.c.l.b16 %v1705
      %v1762 = vunpack.c.l.b16 %v1706
      %v1763 = vunpack.c.l.b16 %v1707
      %v1764 = vunpack.c.l.b16 %v1708
      %v1765 = vunpack.c.l.b16 %v1709
      %v1766 = vunpack.c.l.b16 %v1710
      %v1767 = vunpack.c.l.b16 %v1711
      %v1768 = vunpack.c.l.b16 %v1712
      %v1769 = vunpack.c.l.b16 %v1713
      %v1770 = vunpack.c.l.b16 %v1714
      %v1771 = vpack.c.b16 %v1756, %v1755
      %v1772 = vpack.c.b16 %v1758, %v1757
      %v1773 = vpack.c.b16 %v1760, %v1759
      %v1774 = vpack.c.b16 %v1762, %v1761
      %v1775 = vpack.c.b16 %v1764, %v1763
      %v1776 = vpack.c.b16 %v1766, %v1765
      %v1777 = vpack.c.b16 %v1768, %v1767
      %v1778 = vpack.c.b16 %v1770, %v1769
      %1787 = vmatprep.subr.bf16.mxu0 0
      %1788 = vmatpush1.bf16.msra.mxu0 %v1771
      %1789 = vmatprep.subr.bf16.mxu0 0
      %1790 = vmatpush1.bf16.msra.mxu0 %v1772
      %1791 = vmatprep.subr.bf16.mxu0 0
      %1792 = vmatpush1.bf16.msra.mxu0 %v1773
      %1793 = vmatprep.subr.bf16.mxu0 0
      %1794 = vmatpush1.bf16.msra.mxu0 %v1774
      %1795 = vmatprep.subr.bf16.mxu0 0
      %1796 = vmatpush1.bf16.msra.mxu0 %v1775
      %1797 = vmatprep.subr.bf16.mxu0 0
      %1798 = vmatpush1.bf16.msra.mxu0 %v1776
      %1799 = vmatprep.subr.bf16.mxu0 0
      %1800 = vmatpush1.bf16.msra.mxu0 %v1777
      %1801 = vmatprep.subr.bf16.mxu0 0
      %1802 = vmatpush1.bf16.msra.mxu0 %v1778
      %1803 = vmatprep.subr.bf16.mxu0 0
      %1804 = vmatpush1.bf16.msra.mxu0 0
      %1805 = vmatprep.subr.bf16.mxu0 0
      %1806 = vmatpush1.bf16.msra.mxu0 0
      %1807 = vmatprep.subr.bf16.mxu0 0
      %1808 = vmatpush1.bf16.msra.mxu0 0
      %1809 = vmatprep.subr.bf16.mxu0 0
      %1810 = vmatpush1.bf16.msra.mxu0 0
      %1811 = vmatprep.subr.bf16.mxu0 0
      %1812 = vmatpush1.bf16.msra.mxu0 0
      %1813 = vmatprep.subr.bf16.mxu0 0
      %1814 = vmatpush1.bf16.msra.mxu0 0
      %1815 = vmatprep.subr.bf16.mxu0 0
      %1816 = vmatpush1.bf16.msra.mxu0 0
      %1817 = vmatprep.subr.bf16.mxu0 0
      %1818 = vmatpush1.bf16.msra.mxu0 0
      %1819 = vmatprep.mubr.bf16.mxu0 0
      %1820 = vmatmul.mubr.bf16.gmra.mrb[0].mxu0 %v1731
      %v1821 = vpop.f32.mrb[0].mxu0
      %v1822 = vadd.f32 0.0, %v1821
      %v1823 = vpop.f32.mrb[0].mxu0
      %v1824 = vpop.f32.mrb[0].mxu0
      %v1825 = vadd.f32 0.0, %v1824
      %v1826 = vpop.f32.mrb[0].mxu0
      %1827 = vmatprep.mubr.bf16.mxu0 0
      %1828 = vmatmul.mubr.bf16.gmra.mrb[0].mxu0 %v1732
      %v1829 = vpop.f32.mrb[0].mxu0
      %v1830 = vadd.f32 0.0, %v1829
      %v1831 = vpop.f32.mrb[0].mxu0
      %v1832 = vpop.f32.mrb[0].mxu0
      %v1833 = vadd.f32 0.0, %v1832
      %v1834 = vpop.f32.mrb[0].mxu0
      %1835 = vmatprep.mubr.bf16.mxu0 0
      %1836 = vmatmul.mubr.bf16.gmra.mrb[0].mxu0 %v1733
      %v1837 = vpop.f32.mrb[0].mxu0
      %v1838 = vadd.f32 0.0, %v1837
      %v1839 = vpop.f32.mrb[0].mxu0
      %v1840 = vpop.f32.mrb[0].mxu0
      %v1841 = vadd.f32 0.0, %v1840
      %v1842 = vpop.f32.mrb[0].mxu0
      %1843 = vmatprep.mubr.bf16.mxu0 0
      %1844 = vmatmul.mubr.bf16.gmra.mrb[0].mxu0 %v1734
      %v1845 = vpop.f32.mrb[0].mxu0
      %v1846 = vadd.f32 0.0, %v1845
      %v1847 = vpop.f32.mrb[0].mxu0
      %v1848 = vpop.f32.mrb[0].mxu0
      %v1849 = vadd.f32 0.0, %v1848
      %v1850 = vpop.f32.mrb[0].mxu0
      %1851 = vdwg.mxu0
      %v1852 = vadd.f32 %v1681, %v1822
      %v1853 = vadd.f32 %v1682, %v1825
      %v1854 = vadd.f32 %v1683, %v1830
      %v1855 = vadd.f32 %v1684, %v1833
      %v1856 = vadd.f32 %v1685, %v1838
      %v1857 = vadd.f32 %v1686, %v1841
      %v1858 = vadd.f32 %v1687, %v1846
      %v1859 = vadd.f32 %v1688, %v1849
      %v1860 = vld [vmem:[%s1518] sm:$0xf]
      %v1861 = vld [vmem:[%s1518 + $0x4] sm:$0x1]
      %v1862 = vld [vmem:[%s1518 + $0x8] sm:$0xf]
      %v1863 = vld [vmem:[%s1518 + $0xc] sm:$0x1]
      %v1864 = vld [vmem:[%s1518 + $0x10] sm:$0xf]
      %v1865 = vld [vmem:[%s1518 + $0x14] sm:$0x1]
      %v1866 = vld [vmem:[%s1518 + $0x18] sm:$0xf]
      %v1867 = vld [vmem:[%s1518 + $0x1c] sm:$0x1]
      %v1868 = vld [vmem:[%s1518 + $0x20] sm:$0xf]
      %v1869 = vld [vmem:[%s1518 + $0x24] sm:$0x1]
      %v1870 = vld [vmem:[%s1518 + $0x28] sm:$0xf]
      %v1871 = vld [vmem:[%s1518 + $0x2c] sm:$0x1]
      %v1872 = vld [vmem:[%s1518 + $0x30] sm:$0xf]
      %v1873 = vld [vmem:[%s1518 + $0x34] sm:$0x1]
      %v1874 = vld [vmem:[%s1518 + $0x38] sm:$0xf]
      %v1875 = vld [vmem:[%s1518 + $0x3c] sm:$0x1]
      %v1877 = vshrl.u32 %v1860, 16
      %v1879 = vrot.slane %v1877, 4
      %v1880 = vshll.u32 %v1860, 16
      %v1882 = vrot.slane %v1880, 5
      %v1883 = vor.u32 %v1879, %v1882
      %v1884 = vrot.slane %v1883, 4
      %v1886 = vshll.u32 %v1861, 16
      %v1888 = vrot.slane %v1886, 5
      %v1889 = vsel %vm627, %v1884, %v1888
      %v1891 = vshrl.u32 %v1862, 16
      %v1893 = vrot.slane %v1891, 4
      %v1894 = vshll.u32 %v1862, 16
      %v1896 = vrot.slane %v1894, 5
      %v1897 = vor.u32 %v1893, %v1896
      %v1898 = vrot.slane %v1897, 4
      %v1900 = vshll.u32 %v1863, 16
      %v1902 = vrot.slane %v1900, 5
      %v1903 = vsel %vm627, %v1898, %v1902
      %v1905 = vshrl.u32 %v1864, 16
      %v1907 = vrot.slane %v1905, 4
      %v1908 = vshll.u32 %v1864, 16
      %v1910 = vrot.slane %v1908, 5
      %v1911 = vor.u32 %v1907, %v1910
      %v1912 = vrot.slane %v1911, 4
      %v1914 = vshll.u32 %v1865, 16
      %v1916 = vrot.slane %v1914, 5
      %v1917 = vsel %vm627, %v1912, %v1916
      %v1919 = vshrl.u32 %v1866, 16
      %v1921 = vrot.slane %v1919, 4
      %v1922 = vshll.u32 %v1866, 16
      %v1924 = vrot.slane %v1922, 5
      %v1925 = vor.u32 %v1921, %v1924
      %v1926 = vrot.slane %v1925, 4
      %v1928 = vshll.u32 %v1867, 16
      %v1930 = vrot.slane %v1928, 5
      %v1931 = vsel %vm627, %v1926, %v1930
      %v1933 = vshrl.u32 %v1868, 16
      %v1935 = vrot.slane %v1933, 4
      %v1936 = vshll.u32 %v1868, 16
      %v1938 = vrot.slane %v1936, 5
      %v1939 = vor.u32 %v1935, %v1938
      %v1940 = vrot.slane %v1939, 4
      %v1942 = vshll.u32 %v1869, 16
      %v1944 = vrot.slane %v1942, 5
      %v1945 = vsel %vm627, %v1940, %v1944
      %v1947 = vshrl.u32 %v1870, 16
      %v1949 = vrot.slane %v1947, 4
      %v1950 = vshll.u32 %v1870, 16
      %v1952 = vrot.slane %v1950, 5
      %v1953 = vor.u32 %v1949, %v1952
      %v1954 = vrot.slane %v1953, 4
      %v1956 = vshll.u32 %v1871, 16
      %v1958 = vrot.slane %v1956, 5
      %v1959 = vsel %vm627, %v1954, %v1958
      %v1961 = vshrl.u32 %v1872, 16
      %v1963 = vrot.slane %v1961, 4
      %v1964 = vshll.u32 %v1872, 16
      %v1966 = vrot.slane %v1964, 5
      %v1967 = vor.u32 %v1963, %v1966
      %v1968 = vrot.slane %v1967, 4
      %v1970 = vshll.u32 %v1873, 16
      %v1972 = vrot.slane %v1970, 5
      %v1973 = vsel %vm627, %v1968, %v1972
      %v1975 = vshrl.u32 %v1874, 16
      %v1977 = vrot.slane %v1975, 4
      %v1978 = vshll.u32 %v1874, 16
      %v1980 = vrot.slane %v1978, 5
      %v1981 = vor.u32 %v1977, %v1980
      %v1982 = vrot.slane %v1981, 4
      %v1984 = vshll.u32 %v1875, 16
      %v1986 = vrot.slane %v1984, 5
      %v1987 = vsel %vm627, %v1982, %v1986
      %s1988 = scalar_lea.vmem %s1, 512
      %v1989 = vld [vmem:[%s1988] sm:$0xf]
      %v1990 = vld [vmem:[%s1988 + $0x4] sm:$0xf]
      %v1991 = vld [vmem:[%s1988 + $0x8] sm:$0xf]
      %v1992 = vld [vmem:[%s1988 + $0xc] sm:$0xf]
      %v1993 = vld [vmem:[%s1988 + $0x10] sm:$0xf]
      %v1994 = vld [vmem:[%s1988 + $0x14] sm:$0xf]
      %v1995 = vld [vmem:[%s1988 + $0x18] sm:$0xf]
      %v1996 = vld [vmem:[%s1988 + $0x1c] sm:$0xf]
      %v1997 = vld [vmem:[%s1988 + $0x20] sm:$0xf]
      %v1998 = vld [vmem:[%s1988 + $0x24] sm:$0xf]
      %v1999 = vld [vmem:[%s1988 + $0x28] sm:$0xf]
      %v2000 = vld [vmem:[%s1988 + $0x2c] sm:$0xf]
      %v2001 = vld [vmem:[%s1988 + $0x30] sm:$0xf]
      %v2002 = vld [vmem:[%s1988 + $0x34] sm:$0xf]
      %v2003 = vld [vmem:[%s1988 + $0x38] sm:$0xf]
      %v2004 = vld [vmem:[%s1988 + $0x3c] sm:$0xf]
      %v2005 = vunpack.c.l.b16 %v1889
      %v2006 = vunpack.c.l.b16 %v1903
      %v2007 = vunpack.c.l.b16 %v1917
      %v2008 = vunpack.c.l.b16 %v1931
      %v2009 = vunpack.c.l.b16 %v1945
      %v2010 = vunpack.c.l.b16 %v1959
      %v2011 = vunpack.c.l.b16 %v1973
      %v2012 = vunpack.c.l.b16 %v1987
      %v2013 = vpack.c.b16 %v2006, %v2005
      %v2014 = vpack.c.b16 %v2008, %v2007
      %v2015 = vpack.c.b16 %v2010, %v2009
      %v2016 = vpack.c.b16 %v2012, %v2011
      %v2037 = vunpack.c.l.b16 %v1989
      %v2038 = vunpack.c.l.b16 %v1990
      %v2039 = vunpack.c.l.b16 %v1991
      %v2040 = vunpack.c.l.b16 %v1992
      %v2041 = vunpack.c.l.b16 %v1993
      %v2042 = vunpack.c.l.b16 %v1994
      %v2043 = vunpack.c.l.b16 %v1995
      %v2044 = vunpack.c.l.b16 %v1996
      %v2045 = vunpack.c.l.b16 %v1997
      %v2046 = vunpack.c.l.b16 %v1998
      %v2047 = vunpack.c.l.b16 %v1999
      %v2048 = vunpack.c.l.b16 %v2000
      %v2049 = vunpack.c.l.b16 %v2001
      %v2050 = vunpack.c.l.b16 %v2002
      %v2051 = vunpack.c.l.b16 %v2003
      %v2052 = vunpack.c.l.b16 %v2004
      %v2053 = vpack.c.b16 %v2038, %v2037
      %v2054 = vpack.c.b16 %v2040, %v2039
      %v2055 = vpack.c.b16 %v2042, %v2041
      %v2056 = vpack.c.b16 %v2044, %v2043
      %v2057 = vpack.c.b16 %v2046, %v2045
      %v2058 = vpack.c.b16 %v2048, %v2047
      %v2059 = vpack.c.b16 %v2050, %v2049
      %v2060 = vpack.c.b16 %v2052, %v2051
      %2069 = vmatprep.subr.bf16.mxu0 0
      %2070 = vmatpush1.bf16.msra.mxu0 %v2053
      %2071 = vmatprep.subr.bf16.mxu0 0
      %2072 = vmatpush1.bf16.msra.mxu0 %v2054
      %2073 = vmatprep.subr.bf16.mxu0 0
      %2074 = vmatpush1.bf16.msra.mxu0 %v2055
      %2075 = vmatprep.subr.bf16.mxu0 0
      %2076 = vmatpush1.bf16.msra.mxu0 %v2056
      %2077 = vmatprep.subr.bf16.mxu0 0
      %2078 = vmatpush1.bf16.msra.mxu0 %v2057
      %2079 = vmatprep.subr.bf16.mxu0 0
      %2080 = vmatpush1.bf16.msra.mxu0 %v2058
      %2081 = vmatprep.subr.bf16.mxu0 0
      %2082 = vmatpush1.bf16.msra.mxu0 %v2059
      %2083 = vmatprep.subr.bf16.mxu0 0
      %2084 = vmatpush1.bf16.msra.mxu0 %v2060
      %2085 = vmatprep.subr.bf16.mxu0 0
      %2086 = vmatpush1.bf16.msra.mxu0 0
      %2087 = vmatprep.subr.bf16.mxu0 0
      %2088 = vmatpush1.bf16.msra.mxu0 0
      %2089 = vmatprep.subr.bf16.mxu0 0
      %2090 = vmatpush1.bf16.msra.mxu0 0
      %2091 = vmatprep.subr.bf16.mxu0 0
      %2092 = vmatpush1.bf16.msra.mxu0 0
      %2093 = vmatprep.subr.bf16.mxu0 0
      %2094 = vmatpush1.bf16.msra.mxu0 0
      %2095 = vmatprep.subr.bf16.mxu0 0
      %2096 = vmatpush1.bf16.msra.mxu0 0
      %2097 = vmatprep.subr.bf16.mxu0 0
      %2098 = vmatpush1.bf16.msra.mxu0 0
      %2099 = vmatprep.subr.bf16.mxu0 0
      %2100 = vmatpush1.bf16.msra.mxu0 0
      %2101 = vmatprep.mubr.bf16.mxu0 0
      %2102 = vmatmul.mubr.bf16.gmra.mrb[0].mxu0 %v2013
      %v2103 = vpop.f32.mrb[0].mxu0
      %v2104 = vadd.f32 0.0, %v2103
      %v2105 = vpop.f32.mrb[0].mxu0
      %v2106 = vpop.f32.mrb[0].mxu0
      %v2107 = vadd.f32 0.0, %v2106
      %v2108 = vpop.f32.mrb[0].mxu0
      %2109 = vmatprep.mubr.bf16.mxu0 0
      %2110 = vmatmul.mubr.bf16.gmra.mrb[0].mxu0 %v2014
      %v2111 = vpop.f32.mrb[0].mxu0
      %v2112 = vadd.f32 0.0, %v2111
      %v2113 = vpop.f32.mrb[0].mxu0
      %v2114 = vpop.f32.mrb[0].mxu0
      %v2115 = vadd.f32 0.0, %v2114
      %v2116 = vpop.f32.mrb[0].mxu0
      %2117 = vmatprep.mubr.bf16.mxu0 0
      %2118 = vmatmul.mubr.bf16.gmra.mrb[0].mxu0 %v2015
      %v2119 = vpop.f32.mrb[0].mxu0
      %v2120 = vadd.f32 0.0, %v2119
      %v2121 = vpop.f32.mrb[0].mxu0
      %v2122 = vpop.f32.mrb[0].mxu0
      %v2123 = vadd.f32 0.0, %v2122
      %v2124 = vpop.f32.mrb[0].mxu0
      %2125 = vmatprep.mubr.bf16.mxu0 0
      %2126 = vmatmul.mubr.bf16.gmra.mrb[0].mxu0 %v2016
      %v2127 = vpop.f32.mrb[0].mxu0
      %v2128 = vadd.f32 0.0, %v2127
      %v2129 = vpop.f32.mrb[0].mxu0
      %v2130 = vpop.f32.mrb[0].mxu0
      %v2131 = vadd.f32 0.0, %v2130
      %v2132 = vpop.f32.mrb[0].mxu0
      %2133 = vdwg.mxu0
      %v2134 = vadd.f32 %v1852, %v2104
      %v2135 = vadd.f32 %v1853, %v2107
      %v2136 = vadd.f32 %v1854, %v2112
      %v2137 = vadd.f32 %v1855, %v2115
      %v2138 = vadd.f32 %v1856, %v2120
      %v2139 = vadd.f32 %v1857, %v2123
      %v2140 = vadd.f32 %v1858, %v2128
      %v2141 = vadd.f32 %v1859, %v2131
      %v2142 = vld [vmem:[%s2] sm:$0x1]
      %v2144 = vlaneseq
      %v2145 = vshrl.u32 %v2144, 7
      %v2146 = vsub.s32 0, %v2145
      %v2147 = vrot.slane %v2142, %v2146
      %v2149 = vadd.f32 %v2134, %v2147
      %v2150 = vadd.f32 %v2135, %v2147
      %v2151 = vadd.f32 %v2136, %v2147
      %v2152 = vadd.f32 %v2137, %v2147
      %v2153 = vadd.f32 %v2138, %v2147
      %v2154 = vadd.f32 %v2139, %v2147
      %v2155 = vadd.f32 %v2140, %v2147
      %v2156 = vadd.f32 %v2141, %v2147
      %v2157 = vmax.f32 %v2149, 0.0
      %v2158 = vmax.f32 %v2150, 0.0
      %v2159 = vmax.f32 %v2151, 0.0
      %v2160 = vmax.f32 %v2152, 0.0
      %v2161 = vmax.f32 %v2153, 0.0
      %v2162 = vmax.f32 %v2154, 0.0
      %v2163 = vmax.f32 %v2155, 0.0
      %v2164 = vmax.f32 %v2156, 0.0
      %2165 = vst [vmem:[#allocation2] sm:$0xf] 0
      %2166 = vst [vmem:[#allocation2 + $0x4] sm:$0x1] 0
      %2167 = vst [vmem:[#allocation2 + $0x8] sm:$0xf] 0
      %2168 = vst [vmem:[#allocation2 + $0xc] sm:$0x1] 0
      %2169 = vst [vmem:[#allocation2 + $0x10] sm:$0xf] 0
      %2170 = vst [vmem:[#allocation2 + $0x14] sm:$0x1] 0
      %2171 = vst [vmem:[#allocation2 + $0x18] sm:$0xf] 0
      %2172 = vst [vmem:[#allocation2 + $0x1c] sm:$0x1] 0
      %2173 = vst [vmem:[#allocation2 + $0x20] sm:$0xf] 0
      %2174 = vst [vmem:[#allocation2 + $0x24] sm:$0x1] 0
      %2175 = vst [vmem:[#allocation2 + $0x28] sm:$0xf] 0
      %2176 = vst [vmem:[#allocation2 + $0x2c] sm:$0x1] 0
      %2177 = vst [vmem:[#allocation2 + $0x30] sm:$0xf] 0
      %2178 = vst [vmem:[#allocation2 + $0x34] sm:$0x1] 0
      %2179 = vst [vmem:[#allocation2 + $0x38] sm:$0xf] 0
      %2180 = vst [vmem:[#allocation2 + $0x3c] sm:$0x1] 0
      %2181 = vst [vmem:[#allocation2 + $0x40] sm:$0xf] 0
      %2182 = vst [vmem:[#allocation2 + $0x44] sm:$0x1] 0
      %2183 = vst [vmem:[#allocation2 + $0x48] sm:$0xf] 0
      %2184 = vst [vmem:[#allocation2 + $0x4c] sm:$0x1] 0
      %v2185 = vpack.c.bf16 %v2157, %v2157
      %v2186 = vpack.c.bf16 %v2158, %v2158
      %v2187 = vpack.c.bf16 %v2159, %v2159
      %v2188 = vpack.c.bf16 %v2160, %v2160
      %v2189 = vpack.c.bf16 %v2161, %v2161
      %v2190 = vpack.c.bf16 %v2162, %v2162
      %v2191 = vpack.c.bf16 %v2163, %v2163
      %v2192 = vpack.c.bf16 %v2164, %v2164
      %v2201 = vunpack.c.l.b16 %v2185
      %v2202 = vunpack.c.l.b16 %v2186
      %v2203 = vunpack.c.l.b16 %v2187
      %v2204 = vunpack.c.l.b16 %v2188
      %v2205 = vunpack.c.l.b16 %v2189
      %v2206 = vunpack.c.l.b16 %v2190
      %v2207 = vunpack.c.l.b16 %v2191
      %v2208 = vunpack.c.l.b16 %v2192
      %v2209 = vpack.c.b16 %v2201, %v2201
      %v2210 = vpack.c.b16 %v2202, %v2202
      %v2211 = vpack.c.b16 %v2203, %v2203
      %v2212 = vpack.c.b16 %v2204, %v2204
      %v2213 = vpack.c.b16 %v2205, %v2205
      %v2214 = vpack.c.b16 %v2206, %v2206
      %v2215 = vpack.c.b16 %v2207, %v2207
      %v2216 = vpack.c.b16 %v2208, %v2208
      %v2218 = vshrl.u32 %v2209, 16
      %v2220 = vrot.slane %v2218, 7
      %v2221 = vshll.u32 %v2209, 16
      %v2223 = vor.u32 %v2220, %v2221
      %v2224 = vrot.slane %v2220, 4
      %v2226 = vshrl.u32 %v2210, 16
      %v2228 = vrot.slane %v2226, 7
      %v2229 = vshll.u32 %v2210, 16
      %v2231 = vor.u32 %v2228, %v2229
      %v2232 = vrot.slane %v2228, 4
      %v2234 = vshrl.u32 %v2211, 16
      %v2236 = vrot.slane %v2234, 7
      %v2237 = vshll.u32 %v2211, 16
      %v2239 = vor.u32 %v2236, %v2237
      %v2240 = vrot.slane %v2236, 4
      %v2242 = vshrl.u32 %v2212, 16
      %v2244 = vrot.slane %v2242, 7
      %v2245 = vshll.u32 %v2212, 16
      %v2247 = vor.u32 %v2244, %v2245
      %v2248 = vrot.slane %v2244, 4
      %v2250 = vshrl.u32 %v2213, 16
      %v2252 = vrot.slane %v2250, 7
      %v2253 = vshll.u32 %v2213, 16
      %v2255 = vor.u32 %v2252, %v2253
      %v2256 = vrot.slane %v2252, 4
      %v2258 = vshrl.u32 %v2214, 16
      %v2260 = vrot.slane %v2258, 7
      %v2261 = vshll.u32 %v2214, 16
      %v2263 = vor.u32 %v2260, %v2261
      %v2264 = vrot.slane %v2260, 4
      %v2266 = vshrl.u32 %v2215, 16
      %v2268 = vrot.slane %v2266, 7
      %v2269 = vshll.u32 %v2215, 16
      %v2271 = vor.u32 %v2268, %v2269
      %v2272 = vrot.slane %v2268, 4
      %v2274 = vshrl.u32 %v2216, 16
      %v2276 = vrot.slane %v2274, 7
      %v2277 = vshll.u32 %v2216, 16
      %v2279 = vor.u32 %v2276, %v2277
      %v2280 = vrot.slane %v2276, 4
      %s2297 = scalar_lea.vmem [#allocation2], 8
      %vm2298 = vcmask 1043456
      %vm2299 = vsmask.f32 7938
      %vm2300 = vmand %vm2298, %vm2299
      %v2301 = vld [vmem:[%s2297] sm:$0xf]
      %v2302 = vsel %vm2300, %v2223, %v2301
      %2303 = vst [vmem:[%s2297] sm:$0xf] %v2302
      %vm2304 = vcmask 1040384
      %vm2305 = vsmask.f32 256
      %vm2306 = vmand %vm2304, %vm2305
      %v2307 = vld [vmem:[%s2297 + $0x4] sm:$0x1]
      %v2308 = vsel %vm2306, %v2224, %v2307
      %2309 = vst [vmem:[%s2297 + $0x4] sm:$0x1] %v2308
      %v2310 = vld [vmem:[%s2297 + $0x8] sm:$0xf]
      %v2311 = vsel %vm2300, %v2231, %v2310
      %2312 = vst [vmem:[%s2297 + $0x8] sm:$0xf] %v2311
      %v2313 = vld [vmem:[%s2297 + $0xc] sm:$0x1]
      %v2314 = vsel %vm2306, %v2232, %v2313
      %2315 = vst [vmem:[%s2297 + $0xc] sm:$0x1] %v2314
      %v2316 = vld [vmem:[%s2297 + $0x10] sm:$0xf]
      %v2317 = vsel %vm2300, %v2239, %v2316
      %2318 = vst [vmem:[%s2297 + $0x10] sm:$0xf] %v2317
      %v2319 = vld [vmem:[%s2297 + $0x14] sm:$0x1]
      %v2320 = vsel %vm2306, %v2240, %v2319
      %2321 = vst [vmem:[%s2297 + $0x14] sm:$0x1] %v2320
      %v2322 = vld [vmem:[%s2297 + $0x18] sm:$0xf]
      %v2323 = vsel %vm2300, %v2247, %v2322
      %2324 = vst [vmem:[%s2297 + $0x18] sm:$0xf] %v2323
      %v2325 = vld [vmem:[%s2297 + $0x1c] sm:$0x1]
      %v2326 = vsel %vm2306, %v2248, %v2325
      %2327 = vst [vmem:[%s2297 + $0x1c] sm:$0x1] %v2326
      %v2328 = vld [vmem:[%s2297 + $0x20] sm:$0xf]
      %v2329 = vsel %vm2300, %v2255, %v2328
      %2330 = vst [vmem:[%s2297 + $0x20] sm:$0xf] %v2329
      %v2331 = vld [vmem:[%s2297 + $0x24] sm:$0x1]
      %v2332 = vsel %vm2306, %v2256, %v2331
      %2333 = vst [vmem:[%s2297 + $0x24] sm:$0x1] %v2332
      %v2334 = vld [vmem:[%s2297 + $0x28] sm:$0xf]
      %v2335 = vsel %vm2300, %v2263, %v2334
      %2336 = vst [vmem:[%s2297 + $0x28] sm:$0xf] %v2335
      %v2337 = vld [vmem:[%s2297 + $0x2c] sm:$0x1]
      %v2338 = vsel %vm2306, %v2264, %v2337
      %2339 = vst [vmem:[%s2297 + $0x2c] sm:$0x1] %v2338
      %v2340 = vld [vmem:[%s2297 + $0x30] sm:$0xf]
      %v2341 = vsel %vm2300, %v2271, %v2340
      %2342 = vst [vmem:[%s2297 + $0x30] sm:$0xf] %v2341
      %v2343 = vld [vmem:[%s2297 + $0x34] sm:$0x1]
      %v2344 = vsel %vm2306, %v2272, %v2343
      %2345 = vst [vmem:[%s2297 + $0x34] sm:$0x1] %v2344
      %v2346 = vld [vmem:[%s2297 + $0x38] sm:$0xf]
      %v2347 = vsel %vm2300, %v2279, %v2346
      %2348 = vst [vmem:[%s2297 + $0x38] sm:$0xf] %v2347
      %v2349 = vld [vmem:[%s2297 + $0x3c] sm:$0x1]
      %v2350 = vsel %vm2306, %v2280, %v2349
      %2351 = vst [vmem:[%s2297 + $0x3c] sm:$0x1] %v2350
      %v2352 = vld [vmem:[#allocation2] sm:$0xf]
      %v2353 = vld [vmem:[#allocation2 + $0x8] sm:$0xf]
      %v2354 = vld [vmem:[#allocation2 + $0x10] sm:$0xf]
      %v2355 = vld [vmem:[#allocation2 + $0x18] sm:$0xf]
      %v2356 = vld [vmem:[#allocation2 + $0x20] sm:$0xf]
      %v2357 = vld [vmem:[#allocation2 + $0x28] sm:$0xf]
      %v2358 = vld [vmem:[#allocation2 + $0x30] sm:$0xf]
      %v2359 = vld [vmem:[#allocation2 + $0x38] sm:$0xf]
      %v2360 = vld [vmem:[%s3] sm:$0xf]
      %v2361 = vld [vmem:[%s3 + $0x4] sm:$0xf]
      %v2362 = vld [vmem:[%s3 + $0x8] sm:$0xf]
      %v2363 = vld [vmem:[%s3 + $0xc] sm:$0xf]
      %v2364 = vld [vmem:[%s3 + $0x10] sm:$0xf]
      %v2365 = vld [vmem:[%s3 + $0x14] sm:$0xf]
      %v2366 = vld [vmem:[%s3 + $0x18] sm:$0xf]
      %v2367 = vld [vmem:[%s3 + $0x1c] sm:$0xf]
      %v2368 = vld [vmem:[%s3 + $0x20] sm:$0xf]
      %v2369 = vld [vmem:[%s3 + $0x24] sm:$0xf]
      %v2370 = vld [vmem:[%s3 + $0x28] sm:$0xf]
      %v2371 = vld [vmem:[%s3 + $0x2c] sm:$0xf]
      %v2372 = vld [vmem:[%s3 + $0x30] sm:$0xf]
      %v2373 = vld [vmem:[%s3 + $0x34] sm:$0xf]
      %v2374 = vld [vmem:[%s3 + $0x38] sm:$0xf]
      %v2375 = vld [vmem:[%s3 + $0x3c] sm:$0xf]
      %v2376 = vld [vmem:[#allocation2 + $0x4] sm:$0x1]
      %v2377 = vld [vmem:[#allocation2 + $0xc] sm:$0x1]
      %v2378 = vld [vmem:[#allocation2 + $0x14] sm:$0x1]
      %v2379 = vld [vmem:[#allocation2 + $0x1c] sm:$0x1]
      %v2380 = vld [vmem:[#allocation2 + $0x24] sm:$0x1]
      %v2381 = vld [vmem:[#allocation2 + $0x2c] sm:$0x1]
      %v2382 = vld [vmem:[#allocation2 + $0x34] sm:$0x1]
      %v2383 = vld [vmem:[#allocation2 + $0x3c] sm:$0x1]
      %v2385 = vshrl.u32 %v2352, 16
      %v2387 = vrot.slane %v2385, 4
      %v2388 = vshll.u32 %v2352, 16
      %v2390 = vrot.slane %v2388, 5
      %v2391 = vor.u32 %v2387, %v2390
      %v2392 = vrot.slane %v2391, 4
      %v2394 = vshll.u32 %v2376, 16
      %v2396 = vrot.slane %v2394, 5
      %v2397 = vsel %vm627, %v2392, %v2396
      %v2399 = vshrl.u32 %v2353, 16
      %v2401 = vrot.slane %v2399, 4
      %v2402 = vshll.u32 %v2353, 16
      %v2404 = vrot.slane %v2402, 5
      %v2405 = vor.u32 %v2401, %v2404
      %v2406 = vrot.slane %v2405, 4
      %v2408 = vshll.u32 %v2377, 16
      %v2410 = vrot.slane %v2408, 5
      %v2411 = vsel %vm627, %v2406, %v2410
      %v2413 = vshrl.u32 %v2354, 16
      %v2415 = vrot.slane %v2413, 4
      %v2416 = vshll.u32 %v2354, 16
      %v2418 = vrot.slane %v2416, 5
      %v2419 = vor.u32 %v2415, %v2418
      %v2420 = vrot.slane %v2419, 4
      %v2422 = vshll.u32 %v2378, 16
      %v2424 = vrot.slane %v2422, 5
      %v2425 = vsel %vm627, %v2420, %v2424
      %v2427 = vshrl.u32 %v2355, 16
      %v2429 = vrot.slane %v2427, 4
      %v2430 = vshll.u32 %v2355, 16
      %v2432 = vrot.slane %v2430, 5
      %v2433 = vor.u32 %v2429, %v2432
      %v2434 = vrot.slane %v2433, 4
      %v2436 = vshll.u32 %v2379, 16
      %v2438 = vrot.slane %v2436, 5
      %v2439 = vsel %vm627, %v2434, %v2438
      %v2441 = vshrl.u32 %v2356, 16
      %v2443 = vrot.slane %v2441, 4
      %v2444 = vshll.u32 %v2356, 16
      %v2446 = vrot.slane %v2444, 5
      %v2447 = vor.u32 %v2443, %v2446
      %v2448 = vrot.slane %v2447, 4
      %v2450 = vshll.u32 %v2380, 16
      %v2452 = vrot.slane %v2450, 5
      %v2453 = vsel %vm627, %v2448, %v2452
      %v2455 = vshrl.u32 %v2357, 16
      %v2457 = vrot.slane %v2455, 4
      %v2458 = vshll.u32 %v2357, 16
      %v2460 = vrot.slane %v2458, 5
      %v2461 = vor.u32 %v2457, %v2460
      %v2462 = vrot.slane %v2461, 4
      %v2464 = vshll.u32 %v2381, 16
      %v2466 = vrot.slane %v2464, 5
      %v2467 = vsel %vm627, %v2462, %v2466
      %v2469 = vshrl.u32 %v2358, 16
      %v2471 = vrot.slane %v2469, 4
      %v2472 = vshll.u32 %v2358, 16
      %v2474 = vrot.slane %v2472, 5
      %v2475 = vor.u32 %v2471, %v2474
      %v2476 = vrot.slane %v2475, 4
      %v2478 = vshll.u32 %v2382, 16
      %v2480 = vrot.slane %v2478, 5
      %v2481 = vsel %vm627, %v2476, %v2480
      %v2483 = vshrl.u32 %v2359, 16
      %v2485 = vrot.slane %v2483, 4
      %v2486 = vshll.u32 %v2359, 16
      %v2488 = vrot.slane %v2486, 5
      %v2489 = vor.u32 %v2485, %v2488
      %v2490 = vrot.slane %v2489, 4
      %v2492 = vshll.u32 %v2383, 16
      %v2494 = vrot.slane %v2492, 5
      %v2495 = vsel %vm627, %v2490, %v2494
      %s2496 = scalar_lea.vmem %s3, 64
      %v2497 = vld [vmem:[%s2496] sm:$0xf]
      %v2498 = vld [vmem:[%s2496 + $0x4] sm:$0xf]
      %v2499 = vld [vmem:[%s2496 + $0x8] sm:$0xf]
      %v2500 = vld [vmem:[%s2496 + $0xc] sm:$0xf]
      %v2501 = vld [vmem:[%s2496 + $0x10] sm:$0xf]
      %v2502 = vld [vmem:[%s2496 + $0x14] sm:$0xf]
      %v2503 = vld [vmem:[%s2496 + $0x18] sm:$0xf]
      %v2504 = vld [vmem:[%s2496 + $0x1c] sm:$0xf]
      %v2505 = vld [vmem:[%s2496 + $0x20] sm:$0xf]
      %v2506 = vld [vmem:[%s2496 + $0x24] sm:$0xf]
      %v2507 = vld [vmem:[%s2496 + $0x28] sm:$0xf]
      %v2508 = vld [vmem:[%s2496 + $0x2c] sm:$0xf]
      %v2509 = vld [vmem:[%s2496 + $0x30] sm:$0xf]
      %v2510 = vld [vmem:[%s2496 + $0x34] sm:$0xf]
      %v2511 = vld [vmem:[%s2496 + $0x38] sm:$0xf]
      %v2512 = vld [vmem:[%s2496 + $0x3c] sm:$0xf]
      %v2513 = vunpack.c.l.b16 %v2397
      %v2514 = vunpack.c.l.b16 %v2411
      %v2515 = vunpack.c.l.b16 %v2425
      %v2516 = vunpack.c.l.b16 %v2439
      %v2517 = vunpack.c.l.b16 %v2453
      %v2518 = vunpack.c.l.b16 %v2467
      %v2519 = vunpack.c.l.b16 %v2481
      %v2520 = vunpack.c.l.b16 %v2495
      %v2521 = vpack.c.b16 %v2514, %v2513
      %v2522 = vpack.c.b16 %v2516, %v2515
      %v2523 = vpack.c.b16 %v2518, %v2517
      %v2524 = vpack.c.b16 %v2520, %v2519
      %v2545 = vunpack.c.l.b16 %v2497
      %v2546 = vunpack.c.l.b16 %v2498
      %v2547 = vunpack.c.l.b16 %v2499
      %v2548 = vunpack.c.l.b16 %v2500
      %v2549 = vunpack.c.l.b16 %v2501
      %v2550 = vunpack.c.l.b16 %v2502
      %v2551 = vunpack.c.l.b16 %v2503
      %v2552 = vunpack.c.l.b16 %v2504
      %v2553 = vunpack.c.l.b16 %v2505
      %v2554 = vunpack.c.l.b16 %v2506
      %v2555 = vunpack.c.l.b16 %v2507
      %v2556 = vunpack.c.l.b16 %v2508
      %v2557 = vunpack.c.l.b16 %v2509
      %v2558 = vunpack.c.l.b16 %v2510
      %v2559 = vunpack.c.l.b16 %v2511
      %v2560 = vunpack.c.l.b16 %v2512
      %v2561 = vpack.c.b16 %v2546, %v2545
      %v2562 = vpack.c.b16 %v2548, %v2547
      %v2563 = vpack.c.b16 %v2550, %v2549
      %v2564 = vpack.c.b16 %v2552, %v2551
      %v2565 = vpack.c.b16 %v2554, %v2553
      %v2566 = vpack.c.b16 %v2556, %v2555
      %v2567 = vpack.c.b16 %v2558, %v2557
      %v2568 = vpack.c.b16 %v2560, %v2559
      %2577 = vmatprep.subr.bf16.mxu0 0
      %2578 = vmatpush1.bf16.msra.mxu0 %v2561
      %2579 = vmatprep.subr.bf16.mxu0 0
      %2580 = vmatpush1.bf16.msra.mxu0 %v2562
      %2581 = vmatprep.subr.bf16.mxu0 0
      %2582 = vmatpush1.bf16.msra.mxu0 %v2563
      %2583 = vmatprep.subr.bf16.mxu0 0
      %2584 = vmatpush1.bf16.msra.mxu0 %v2564
      %2585 = vmatprep.subr.bf16.mxu0 0
      %2586 = vmatpush1.bf16.msra.mxu0 %v2565
      %2587 = vmatprep.subr.bf16.mxu0 0
      %2588 = vmatpush1.bf16.msra.mxu0 %v2566
      %2589 = vmatprep.subr.bf16.mxu0 0
      %2590 = vmatpush1.bf16.msra.mxu0 %v2567
      %2591 = vmatprep.subr.bf16.mxu0 0
      %2592 = vmatpush1.bf16.msra.mxu0 %v2568
      %2593 = vmatprep.subr.bf16.mxu0 0
      %2594 = vmatpush1.bf16.msra.mxu0 0
      %2595 = vmatprep.subr.bf16.mxu0 0
      %2596 = vmatpush1.bf16.msra.mxu0 0
      %2597 = vmatprep.subr.bf16.mxu0 0
      %2598 = vmatpush1.bf16.msra.mxu0 0
      %2599 = vmatprep.subr.bf16.mxu0 0
      %2600 = vmatpush1.bf16.msra.mxu0 0
      %2601 = vmatprep.subr.bf16.mxu0 0
      %2602 = vmatpush1.bf16.msra.mxu0 0
      %2603 = vmatprep.subr.bf16.mxu0 0
      %2604 = vmatpush1.bf16.msra.mxu0 0
      %2605 = vmatprep.subr.bf16.mxu0 0
      %2606 = vmatpush1.bf16.msra.mxu0 0
      %2607 = vmatprep.subr.bf16.mxu0 0
      %2608 = vmatpush1.bf16.msra.mxu0 0
      %2609 = vmatprep.mubr.bf16.mxu0 0
      %2610 = vmatmul.mubr.bf16.gmra.mrb[0].mxu0 %v2521
      %v2611 = vpop.f32.mrb[0].mxu0
      %v2612 = vadd.f32 0.0, %v2611
      %v2613 = vpop.f32.mrb[0].mxu0
      %v2614 = vpop.f32.mrb[0].mxu0
      %v2615 = vadd.f32 0.0, %v2614
      %v2616 = vpop.f32.mrb[0].mxu0
      %2617 = vmatprep.mubr.bf16.mxu0 0
      %2618 = vmatmul.mubr.bf16.gmra.mrb[0].mxu0 %v2522
      %v2619 = vpop.f32.mrb[0].mxu0
      %v2620 = vadd.f32 0.0, %v2619
      %v2621 = vpop.f32.mrb[0].mxu0
      %v2622 = vpop.f32.mrb[0].mxu0
      %v2623 = vadd.f32 0.0, %v2622
      %v2624 = vpop.f32.mrb[0].mxu0
      %2625 = vmatprep.mubr.bf16.mxu0 0
      %2626 = vmatmul.mubr.bf16.gmra.mrb[0].mxu0 %v2523
      %v2627 = vpop.f32.mrb[0].mxu0
      %v2628 = vadd.f32 0.0, %v2627
      %v2629 = vpop.f32.mrb[0].mxu0
      %v2630 = vpop.f32.mrb[0].mxu0
      %v2631 = vadd.f32 0.0, %v2630
      %v2632 = vpop.f32.mrb[0].mxu0
      %2633 = vmatprep.mubr.bf16.mxu0 0
      %2634 = vmatmul.mubr.bf16.gmra.mrb[0].mxu0 %v2524
      %v2635 = vpop.f32.mrb[0].mxu0
      %v2636 = vadd.f32 0.0, %v2635
      %v2637 = vpop.f32.mrb[0].mxu0
      %v2638 = vpop.f32.mrb[0].mxu0
      %v2639 = vadd.f32 0.0, %v2638
      %v2640 = vpop.f32.mrb[0].mxu0
      %2641 = vdwg.mxu0
      %v2650 = vunpack.c.l.b16 %v2352
      %v2651 = vunpack.c.l.b16 %v2353
      %v2652 = vunpack.c.l.b16 %v2354
      %v2653 = vunpack.c.l.b16 %v2355
      %v2654 = vunpack.c.l.b16 %v2356
      %v2655 = vunpack.c.l.b16 %v2357
      %v2656 = vunpack.c.l.b16 %v2358
      %v2657 = vunpack.c.l.b16 %v2359
      %v2658 = vpack.c.b16 %v2651, %v2650
      %v2659 = vpack.c.b16 %v2653, %v2652
      %v2660 = vpack.c.b16 %v2655, %v2654
      %v2661 = vpack.c.b16 %v2657, %v2656
      %v2682 = vunpack.c.l.b16 %v2360
      %v2683 = vunpack.c.l.b16 %v2361
      %v2684 = vunpack.c.l.b16 %v2362
      %v2685 = vunpack.c.l.b16 %v2363
      %v2686 = vunpack.c.l.b16 %v2364
      %v2687 = vunpack.c.l.b16 %v2365
      %v2688 = vunpack.c.l.b16 %v2366
      %v2689 = vunpack.c.l.b16 %v2367
      %v2690 = vunpack.c.l.b16 %v2368
      %v2691 = vunpack.c.l.b16 %v2369
      %v2692 = vunpack.c.l.b16 %v2370
      %v2693 = vunpack.c.l.b16 %v2371
      %v2694 = vunpack.c.l.b16 %v2372
      %v2695 = vunpack.c.l.b16 %v2373
      %v2696 = vunpack.c.l.b16 %v2374
      %v2697 = vunpack.c.l.b16 %v2375
      %v2698 = vpack.c.b16 %v2683, %v2682
      %v2699 = vpack.c.b16 %v2685, %v2684
      %v2700 = vpack.c.b16 %v2687, %v2686
      %v2701 = vpack.c.b16 %v2689, %v2688
      %v2702 = vpack.c.b16 %v2691, %v2690
      %v2703 = vpack.c.b16 %v2693, %v2692
      %v2704 = vpack.c.b16 %v2695, %v2694
      %v2705 = vpack.c.b16 %v2697, %v2696
      %2714 = vmatprep.subr.bf16.mxu0 0
      %2715 = vmatpush1.bf16.msra.mxu0 %v2698
      %2716 = vmatprep.subr.bf16.mxu0 0
      %2717 = vmatpush1.bf16.msra.mxu0 %v2699
      %2718 = vmatprep.subr.bf16.mxu0 0
      %2719 = vmatpush1.bf16.msra.mxu0 %v2700
      %2720 = vmatprep.subr.bf16.mxu0 0
      %2721 = vmatpush1.bf16.msra.mxu0 %v2701
      %2722 = vmatprep.subr.bf16.mxu0 0
      %2723 = vmatpush1.bf16.msra.mxu0 %v2702
      %2724 = vmatprep.subr.bf16.mxu0 0
      %2725 = vmatpush1.bf16.msra.mxu0 %v2703
      %2726 = vmatprep.subr.bf16.mxu0 0
      %2727 = vmatpush1.bf16.msra.mxu0 %v2704
      %2728 = vmatprep.subr.bf16.mxu0 0
      %2729 = vmatpush1.bf16.msra.mxu0 %v2705
      %2730 = vmatprep.subr.bf16.mxu0 0
      %2731 = vmatpush1.bf16.msra.mxu0 0
      %2732 = vmatprep.subr.bf16.mxu0 0
      %2733 = vmatpush1.bf16.msra.mxu0 0
      %2734 = vmatprep.subr.bf16.mxu0 0
      %2735 = vmatpush1.bf16.msra.mxu0 0
      %2736 = vmatprep.subr.bf16.mxu0 0
      %2737 = vmatpush1.bf16.msra.mxu0 0
      %2738 = vmatprep.subr.bf16.mxu0 0
      %2739 = vmatpush1.bf16.msra.mxu0 0
      %2740 = vmatprep.subr.bf16.mxu0 0
      %2741 = vmatpush1.bf16.msra.mxu0 0
      %2742 = vmatprep.subr.bf16.mxu0 0
      %2743 = vmatpush1.bf16.msra.mxu0 0
      %2744 = vmatprep.subr.bf16.mxu0 0
      %2745 = vmatpush1.bf16.msra.mxu0 0
      %2746 = vmatprep.mubr.bf16.mxu0 0
      %2747 = vmatmul.mubr.bf16.gmra.mrb[0].mxu0 %v2658
      %v2748 = vpop.f32.mrb[0].mxu0
      %v2749 = vadd.f32 %v2612, %v2748
      %v2750 = vpop.f32.mrb[0].mxu0
      %v2751 = vpop.f32.mrb[0].mxu0
      %v2752 = vadd.f32 %v2615, %v2751
      %v2753 = vpop.f32.mrb[0].mxu0
      %2754 = vmatprep.mubr.bf16.mxu0 0
      %2755 = vmatmul.mubr.bf16.gmra.mrb[0].mxu0 %v2659
      %v2756 = vpop.f32.mrb[0].mxu0
      %v2757 = vadd.f32 %v2620, %v2756
      %v2758 = vpop.f32.mrb[0].mxu0
      %v2759 = vpop.f32.mrb[0].mxu0
      %v2760 = vadd.f32 %v2623, %v2759
      %v2761 = vpop.f32.mrb[0].mxu0
      %2762 = vmatprep.mubr.bf16.mxu0 0
      %2763 = vmatmul.mubr.bf16.gmra.mrb[0].mxu0 %v2660
      %v2764 = vpop.f32.mrb[0].mxu0
      %v2765 = vadd.f32 %v2628, %v2764
      %v2766 = vpop.f32.mrb[0].mxu0
      %v2767 = vpop.f32.mrb[0].mxu0
      %v2768 = vadd.f32 %v2631, %v2767
      %v2769 = vpop.f32.mrb[0].mxu0
      %2770 = vmatprep.mubr.bf16.mxu0 0
      %2771 = vmatmul.mubr.bf16.gmra.mrb[0].mxu0 %v2661
      %v2772 = vpop.f32.mrb[0].mxu0
      %v2773 = vadd.f32 %v2636, %v2772
      %v2774 = vpop.f32.mrb[0].mxu0
      %v2775 = vpop.f32.mrb[0].mxu0
      %v2776 = vadd.f32 %v2639, %v2775
      %v2777 = vpop.f32.mrb[0].mxu0
      %2778 = vdwg.mxu0
      %v2779 = vld [vmem:[#allocation2] sm:$0xe]
      %v2780 = vld [vmem:[#allocation2 + $0x8] sm:$0xe]
      %v2781 = vld [vmem:[#allocation2 + $0x10] sm:$0xe]
      %v2782 = vld [vmem:[#allocation2 + $0x18] sm:$0xe]
      %v2783 = vld [vmem:[#allocation2 + $0x20] sm:$0xe]
      %v2784 = vld [vmem:[#allocation2 + $0x28] sm:$0xe]
      %v2785 = vld [vmem:[#allocation2 + $0x30] sm:$0xe]
      %v2786 = vld [vmem:[#allocation2 + $0x38] sm:$0xe]
      %vm2803 = vcmask 1042432
      %vm2804 = vcmask 1046532
      %vm2805 = vmor %vm2803, %vm2804
      %v2806 = vrot.slane %v2779, 5
      %v2807 = vrot.slane %v2806, 4
      %v2808 = vrot.slane %v2376, 5
      %v2809 = vsel %vm2805, %v2807, %v2808
      %v2810 = vrot.slane %v2780, 5
      %v2811 = vrot.slane %v2810, 4
      %v2812 = vrot.slane %v2377, 5
      %v2813 = vsel %vm2805, %v2811, %v2812
      %v2814 = vrot.slane %v2781, 5
      %v2815 = vrot.slane %v2814, 4
      %v2816 = vrot.slane %v2378, 5
      %v2817 = vsel %vm2805, %v2815, %v2816
      %v2818 = vrot.slane %v2782, 5
      %v2819 = vrot.slane %v2818, 4
      %v2820 = vrot.slane %v2379, 5
      %v2821 = vsel %vm2805, %v2819, %v2820
      %v2822 = vrot.slane %v2783, 5
      %v2823 = vrot.slane %v2822, 4
      %v2824 = vrot.slane %v2380, 5
      %v2825 = vsel %vm2805, %v2823, %v2824
      %v2826 = vrot.slane %v2784, 5
      %v2827 = vrot.slane %v2826, 4
      %v2828 = vrot.slane %v2381, 5
      %v2829 = vsel %vm2805, %v2827, %v2828
      %v2830 = vrot.slane %v2785, 5
      %v2831 = vrot.slane %v2830, 4
      %v2832 = vrot.slane %v2382, 5
      %v2833 = vsel %vm2805, %v2831, %v2832
      %v2834 = vrot.slane %v2786, 5
      %v2835 = vrot.slane %v2834, 4
      %v2836 = vrot.slane %v2383, 5
      %v2837 = vsel %vm2805, %v2835, %v2836
      %s2838 = scalar_lea.vmem %s3, 128
      %v2839 = vld [vmem:[%s2838] sm:$0xf]
      %v2840 = vld [vmem:[%s2838 + $0x4] sm:$0xf]
      %v2841 = vld [vmem:[%s2838 + $0x8] sm:$0xf]
      %v2842 = vld [vmem:[%s2838 + $0xc] sm:$0xf]
      %v2843 = vld [vmem:[%s2838 + $0x10] sm:$0xf]
      %v2844 = vld [vmem:[%s2838 + $0x14] sm:$0xf]
      %v2845 = vld [vmem:[%s2838 + $0x18] sm:$0xf]
      %v2846 = vld [vmem:[%s2838 + $0x1c] sm:$0xf]
      %v2847 = vld [vmem:[%s2838 + $0x20] sm:$0xf]
      %v2848 = vld [vmem:[%s2838 + $0x24] sm:$0xf]
      %v2849 = vld [vmem:[%s2838 + $0x28] sm:$0xf]
      %v2850 = vld [vmem:[%s2838 + $0x2c] sm:$0xf]
      %v2851 = vld [vmem:[%s2838 + $0x30] sm:$0xf]
      %v2852 = vld [vmem:[%s2838 + $0x34] sm:$0xf]
      %v2853 = vld [vmem:[%s2838 + $0x38] sm:$0xf]
      %v2854 = vld [vmem:[%s2838 + $0x3c] sm:$0xf]
      %v2855 = vunpack.c.l.b16 %v2809
      %v2856 = vunpack.c.l.b16 %v2813
      %v2857 = vunpack.c.l.b16 %v2817
      %v2858 = vunpack.c.l.b16 %v2821
      %v2859 = vunpack.c.l.b16 %v2825
      %v2860 = vunpack.c.l.b16 %v2829
      %v2861 = vunpack.c.l.b16 %v2833
      %v2862 = vunpack.c.l.b16 %v2837
      %v2863 = vpack.c.b16 %v2856, %v2855
      %v2864 = vpack.c.b16 %v2858, %v2857
      %v2865 = vpack.c.b16 %v2860, %v2859
      %v2866 = vpack.c.b16 %v2862, %v2861
      %v2887 = vunpack.c.l.b16 %v2839
      %v2888 = vunpack.c.l.b16 %v2840
      %v2889 = vunpack.c.l.b16 %v2841
      %v2890 = vunpack.c.l.b16 %v2842
      %v2891 = vunpack.c.l.b16 %v2843
      %v2892 = vunpack.c.l.b16 %v2844
      %v2893 = vunpack.c.l.b16 %v2845
      %v2894 = vunpack.c.l.b16 %v2846
      %v2895 = vunpack.c.l.b16 %v2847
      %v2896 = vunpack.c.l.b16 %v2848
      %v2897 = vunpack.c.l.b16 %v2849
      %v2898 = vunpack.c.l.b16 %v2850
      %v2899 = vunpack.c.l.b16 %v2851
      %v2900 = vunpack.c.l.b16 %v2852
      %v2901 = vunpack.c.l.b16 %v2853
      %v2902 = vunpack.c.l.b16 %v2854
      %v2903 = vpack.c.b16 %v2888, %v2887
      %v2904 = vpack.c.b16 %v2890, %v2889
      %v2905 = vpack.c.b16 %v2892, %v2891
      %v2906 = vpack.c.b16 %v2894, %v2893
      %v2907 = vpack.c.b16 %v2896, %v2895
      %v2908 = vpack.c.b16 %v2898, %v2897
      %v2909 = vpack.c.b16 %v2900, %v2899
      %v2910 = vpack.c.b16 %v2902, %v2901
      %2919 = vmatprep.subr.bf16.mxu0 0
      %2920 = vmatpush1.bf16.msra.mxu0 %v2903
      %2921 = vmatprep.subr.bf16.mxu0 0
      %2922 = vmatpush1.bf16.msra.mxu0 %v2904
      %2923 = vmatprep.subr.bf16.mxu0 0
      %2924 = vmatpush1.bf16.msra.mxu0 %v2905
      %2925 = vmatprep.subr.bf16.mxu0 0
      %2926 = vmatpush1.bf16.msra.mxu0 %v2906
      %2927 = vmatprep.subr.bf16.mxu0 0
      %2928 = vmatpush1.bf16.msra.mxu0 %v2907
      %2929 = vmatprep.subr.bf16.mxu0 0
      %2930 = vmatpush1.bf16.msra.mxu0 %v2908
      %2931 = vmatprep.subr.bf16.mxu0 0
      %2932 = vmatpush1.bf16.msra.mxu0 %v2909
      %2933 = vmatprep.subr.bf16.mxu0 0
      %2934 = vmatpush1.bf16.msra.mxu0 %v2910
      %2935 = vmatprep.subr.bf16.mxu0 0
      %2936 = vmatpush1.bf16.msra.mxu0 0
      %2937 = vmatprep.subr.bf16.mxu0 0
      %2938 = vmatpush1.bf16.msra.mxu0 0
      %2939 = vmatprep.subr.bf16.mxu0 0
      %2940 = vmatpush1.bf16.msra.mxu0 0
      %2941 = vmatprep.subr.bf16.mxu0 0
      %2942 = vmatpush1.bf16.msra.mxu0 0
      %2943 = vmatprep.subr.bf16.mxu0 0
      %2944 = vmatpush1.bf16.msra.mxu0 0
      %2945 = vmatprep.subr.bf16.mxu0 0
      %2946 = vmatpush1.bf16.msra.mxu0 0
      %2947 = vmatprep.subr.bf16.mxu0 0
      %2948 = vmatpush1.bf16.msra.mxu0 0
      %2949 = vmatprep.subr.bf16.mxu0 0
      %2950 = vmatpush1.bf16.msra.mxu0 0
      %2951 = vmatprep.mubr.bf16.mxu0 0
      %2952 = vmatmul.mubr.bf16.gmra.mrb[0].mxu0 %v2863
      %v2953 = vpop.f32.mrb[0].mxu0
      %v2954 = vadd.f32 0.0, %v2953
      %v2955 = vpop.f32.mrb[0].mxu0
      %v2956 = vpop.f32.mrb[0].mxu0
      %v2957 = vadd.f32 0.0, %v2956
      %v2958 = vpop.f32.mrb[0].mxu0
      %2959 = vmatprep.mubr.bf16.mxu0 0
      %2960 = vmatmul.mubr.bf16.gmra.mrb[0].mxu0 %v2864
      %v2961 = vpop.f32.mrb[0].mxu0
      %v2962 = vadd.f32 0.0, %v2961
      %v2963 = vpop.f32.mrb[0].mxu0
      %v2964 = vpop.f32.mrb[0].mxu0
      %v2965 = vadd.f32 0.0, %v2964
      %v2966 = vpop.f32.mrb[0].mxu0
      %2967 = vmatprep.mubr.bf16.mxu0 0
      %2968 = vmatmul.mubr.bf16.gmra.mrb[0].mxu0 %v2865
      %v2969 = vpop.f32.mrb[0].mxu0
      %v2970 = vadd.f32 0.0, %v2969
      %v2971 = vpop.f32.mrb[0].mxu0
      %v2972 = vpop.f32.mrb[0].mxu0
      %v2973 = vadd.f32 0.0, %v2972
      %v2974 = vpop.f32.mrb[0].mxu0
      %2975 = vmatprep.mubr.bf16.mxu0 0
      %2976 = vmatmul.mubr.bf16.gmra.mrb[0].mxu0 %v2866
      %v2977 = vpop.f32.mrb[0].mxu0
      %v2978 = vadd.f32 0.0, %v2977
      %v2979 = vpop.f32.mrb[0].mxu0
      %v2980 = vpop.f32.mrb[0].mxu0
      %v2981 = vadd.f32 0.0, %v2980
      %v2982 = vpop.f32.mrb[0].mxu0
      %2983 = vdwg.mxu0
      %v2984 = vadd.f32 %v2749, %v2954
      %v2985 = vadd.f32 %v2752, %v2957
      %v2986 = vadd.f32 %v2757, %v2962
      %v2987 = vadd.f32 %v2760, %v2965
      %v2988 = vadd.f32 %v2765, %v2970
      %v2989 = vadd.f32 %v2768, %v2973
      %v2990 = vadd.f32 %v2773, %v2978
      %v2991 = vadd.f32 %v2776, %v2981
      %v2992 = vld [vmem:[%s2297] sm:$0xf]
      %v2993 = vld [vmem:[%s2297 + $0x8] sm:$0xf]
      %v2994 = vld [vmem:[%s2297 + $0x10] sm:$0xf]
      %v2995 = vld [vmem:[%s2297 + $0x18] sm:$0xf]
      %v2996 = vld [vmem:[%s2297 + $0x20] sm:$0xf]
      %v2997 = vld [vmem:[%s2297 + $0x28] sm:$0xf]
      %v2998 = vld [vmem:[%s2297 + $0x30] sm:$0xf]
      %v2999 = vld [vmem:[%s2297 + $0x38] sm:$0xf]
      %s3000 = scalar_lea.vmem %s3, 192
      %v3001 = vld [vmem:[%s3000] sm:$0xf]
      %v3002 = vld [vmem:[%s3000 + $0x4] sm:$0xf]
      %v3003 = vld [vmem:[%s3000 + $0x8] sm:$0xf]
      %v3004 = vld [vmem:[%s3000 + $0xc] sm:$0xf]
      %v3005 = vld [vmem:[%s3000 + $0x10] sm:$0xf]
      %v3006 = vld [vmem:[%s3000 + $0x14] sm:$0xf]
      %v3007 = vld [vmem:[%s3000 + $0x18] sm:$0xf]
      %v3008 = vld [vmem:[%s3000 + $0x1c] sm:$0xf]
      %v3009 = vld [vmem:[%s3000 + $0x20] sm:$0xf]
      %v3010 = vld [vmem:[%s3000 + $0x24] sm:$0xf]
      %v3011 = vld [vmem:[%s3000 + $0x28] sm:$0xf]
      %v3012 = vld [vmem:[%s3000 + $0x2c] sm:$0xf]
      %v3013 = vld [vmem:[%s3000 + $0x30] sm:$0xf]
      %v3014 = vld [vmem:[%s3000 + $0x34] sm:$0xf]
      %v3015 = vld [vmem:[%s3000 + $0x38] sm:$0xf]
      %v3016 = vld [vmem:[%s3000 + $0x3c] sm:$0xf]
      %v3025 = vunpack.c.l.b16 %v2992
      %v3026 = vunpack.c.l.b16 %v2993
      %v3027 = vunpack.c.l.b16 %v2994
      %v3028 = vunpack.c.l.b16 %v2995
      %v3029 = vunpack.c.l.b16 %v2996
      %v3030 = vunpack.c.l.b16 %v2997
      %v3031 = vunpack.c.l.b16 %v2998
      %v3032 = vunpack.c.l.b16 %v2999
      %v3033 = vpack.c.b16 %v3026, %v3025
      %v3034 = vpack.c.b16 %v3028, %v3027
      %v3035 = vpack.c.b16 %v3030, %v3029
      %v3036 = vpack.c.b16 %v3032, %v3031
      %v3057 = vunpack.c.l.b16 %v3001
      %v3058 = vunpack.c.l.b16 %v3002
      %v3059 = vunpack.c.l.b16 %v3003
      %v3060 = vunpack.c.l.b16 %v3004
      %v3061 = vunpack.c.l.b16 %v3005
      %v3062 = vunpack.c.l.b16 %v3006
      %v3063 = vunpack.c.l.b16 %v3007
      %v3064 = vunpack.c.l.b16 %v3008
      %v3065 = vunpack.c.l.b16 %v3009
      %v3066 = vunpack.c.l.b16 %v3010
      %v3067 = vunpack.c.l.b16 %v3011
      %v3068 = vunpack.c.l.b16 %v3012
      %v3069 = vunpack.c.l.b16 %v3013
      %v3070 = vunpack.c.l.b16 %v3014
      %v3071 = vunpack.c.l.b16 %v3015
      %v3072 = vunpack.c.l.b16 %v3016
      %v3073 = vpack.c.b16 %v3058, %v3057
      %v3074 = vpack.c.b16 %v3060, %v3059
      %v3075 = vpack.c.b16 %v3062, %v3061
      %v3076 = vpack.c.b16 %v3064, %v3063
      %v3077 = vpack.c.b16 %v3066, %v3065
      %v3078 = vpack.c.b16 %v3068, %v3067
      %v3079 = vpack.c.b16 %v3070, %v3069
      %v3080 = vpack.c.b16 %v3072, %v3071
      %3089 = vmatprep.subr.bf16.mxu0 0
      %3090 = vmatpush1.bf16.msra.mxu0 %v3073
      %3091 = vmatprep.subr.bf16.mxu0 0
      %3092 = vmatpush1.bf16.msra.mxu0 %v3074
      %3093 = vmatprep.subr.bf16.mxu0 0
      %3094 = vmatpush1.bf16.msra.mxu0 %v3075
      %3095 = vmatprep.subr.bf16.mxu0 0
      %3096 = vmatpush1.bf16.msra.mxu0 %v3076
      %3097 = vmatprep.subr.bf16.mxu0 0
      %3098 = vmatpush1.bf16.msra.mxu0 %v3077
      %3099 = vmatprep.subr.bf16.mxu0 0
      %3100 = vmatpush1.bf16.msra.mxu0 %v3078
      %3101 = vmatprep.subr.bf16.mxu0 0
      %3102 = vmatpush1.bf16.msra.mxu0 %v3079
      %3103 = vmatprep.subr.bf16.mxu0 0
      %3104 = vmatpush1.bf16.msra.mxu0 %v3080
      %3105 = vmatprep.subr.bf16.mxu0 0
      %3106 = vmatpush1.bf16.msra.mxu0 0
      %3107 = vmatprep.subr.bf16.mxu0 0
      %3108 = vmatpush1.bf16.msra.mxu0 0
      %3109 = vmatprep.subr.bf16.mxu0 0
      %3110 = vmatpush1.bf16.msra.mxu0 0
      %3111 = vmatprep.subr.bf16.mxu0 0
      %3112 = vmatpush1.bf16.msra.mxu0 0
      %3113 = vmatprep.subr.bf16.mxu0 0
      %3114 = vmatpush1.bf16.msra.mxu0 0
      %3115 = vmatprep.subr.bf16.mxu0 0
      %3116 = vmatpush1.bf16.msra.mxu0 0
      %3117 = vmatprep.subr.bf16.mxu0 0
      %3118 = vmatpush1.bf16.msra.mxu0 0
      %3119 = vmatprep.subr.bf16.mxu0 0
      %3120 = vmatpush1.bf16.msra.mxu0 0
      %3121 = vmatprep.mubr.bf16.mxu0 0
      %3122 = vmatmul.mubr.bf16.gmra.mrb[0].mxu0 %v3033
      %v3123 = vpop.f32.mrb[0].mxu0
      %v3124 = vadd.f32 0.0, %v3123
      %v3125 = vpop.f32.mrb[0].mxu0
      %v3126 = vpop.f32.mrb[0].mxu0
      %v3127 = vadd.f32 0.0, %v3126
      %v3128 = vpop.f32.mrb[0].mxu0
      %3129 = vmatprep.mubr.bf16.mxu0 0
      %3130 = vmatmul.mubr.bf16.gmra.mrb[0].mxu0 %v3034
      %v3131 = vpop.f32.mrb[0].mxu0
      %v3132 = vadd.f32 0.0, %v3131
      %v3133 = vpop.f32.mrb[0].mxu0
      %v3134 = vpop.f32.mrb[0].mxu0
      %v3135 = vadd.f32 0.0, %v3134
      %v3136 = vpop.f32.mrb[0].mxu0
      %3137 = vmatprep.mubr.bf16.mxu0 0
      %3138 = vmatmul.mubr.bf16.gmra.mrb[0].mxu0 %v3035
      %v3139 = vpop.f32.mrb[0].mxu0
      %v3140 = vadd.f32 0.0, %v3139
      %v3141 = vpop.f32.mrb[0].mxu0
      %v3142 = vpop.f32.mrb[0].mxu0
      %v3143 = vadd.f32 0.0, %v3142
      %v3144 = vpop.f32.mrb[0].mxu0
      %3145 = vmatprep.mubr.bf16.mxu0 0
      %3146 = vmatmul.mubr.bf16.gmra.mrb[0].mxu0 %v3036
      %v3147 = vpop.f32.mrb[0].mxu0
      %v3148 = vadd.f32 0.0, %v3147
      %v3149 = vpop.f32.mrb[0].mxu0
      %v3150 = vpop.f32.mrb[0].mxu0
      %v3151 = vadd.f32 0.0, %v3150
      %v3152 = vpop.f32.mrb[0].mxu0
      %3153 = vdwg.mxu0
      %v3154 = vadd.f32 %v2984, %v3124
      %v3155 = vadd.f32 %v2985, %v3127
      %v3156 = vadd.f32 %v2986, %v3132
      %v3157 = vadd.f32 %v2987, %v3135
      %v3158 = vadd.f32 %v2988, %v3140
      %v3159 = vadd.f32 %v2989, %v3143
      %v3160 = vadd.f32 %v2990, %v3148
      %v3161 = vadd.f32 %v2991, %v3151
      %v3162 = vld [vmem:[%s2297] sm:$0xf]
      %v3163 = vld [vmem:[%s2297 + $0x4] sm:$0x1]
      %v3164 = vld [vmem:[%s2297 + $0x8] sm:$0xf]
      %v3165 = vld [vmem:[%s2297 + $0xc] sm:$0x1]
      %v3166 = vld [vmem:[%s2297 + $0x10] sm:$0xf]
      %v3167 = vld [vmem:[%s2297 + $0x14] sm:$0x1]
      %v3168 = vld [vmem:[%s2297 + $0x18] sm:$0xf]
      %v3169 = vld [vmem:[%s2297 + $0x1c] sm:$0x1]
      %v3170 = vld [vmem:[%s2297 + $0x20] sm:$0xf]
      %v3171 = vld [vmem:[%s2297 + $0x24] sm:$0x1]
      %v3172 = vld [vmem:[%s2297 + $0x28] sm:$0xf]
      %v3173 = vld [vmem:[%s2297 + $0x2c] sm:$0x1]
      %v3174 = vld [vmem:[%s2297 + $0x30] sm:$0xf]
      %v3175 = vld [vmem:[%s2297 + $0x34] sm:$0x1]
      %v3176 = vld [vmem:[%s2297 + $0x38] sm:$0xf]
      %v3177 = vld [vmem:[%s2297 + $0x3c] sm:$0x1]
      %v3179 = vshrl.u32 %v3162, 16
      %v3181 = vrot.slane %v3179, 4
      %v3182 = vshll.u32 %v3162, 16
      %v3184 = vrot.slane %v3182, 5
      %v3185 = vor.u32 %v3181, %v3184
      %v3186 = vrot.slane %v3185, 4
      %v3188 = vshll.u32 %v3163, 16
      %v3190 = vrot.slane %v3188, 5
      %v3191 = vsel %vm627, %v3186, %v3190
      %v3193 = vshrl.u32 %v3164, 16
      %v3195 = vrot.slane %v3193, 4
      %v3196 = vshll.u32 %v3164, 16
      %v3198 = vrot.slane %v3196, 5
      %v3199 = vor.u32 %v3195, %v3198
      %v3200 = vrot.slane %v3199, 4
      %v3202 = vshll.u32 %v3165, 16
      %v3204 = vrot.slane %v3202, 5
      %v3205 = vsel %vm627, %v3200, %v3204
      %v3207 = vshrl.u32 %v3166, 16
      %v3209 = vrot.slane %v3207, 4
      %v3210 = vshll.u32 %v3166, 16
      %v3212 = vrot.slane %v3210, 5
      %v3213 = vor.u32 %v3209, %v3212
      %v3214 = vrot.slane %v3213, 4
      %v3216 = vshll.u32 %v3167, 16
      %v3218 = vrot.slane %v3216, 5
      %v3219 = vsel %vm627, %v3214, %v3218
      %v3221 = vshrl.u32 %v3168, 16
      %v3223 = vrot.slane %v3221, 4
      %v3224 = vshll.u32 %v3168, 16
      %v3226 = vrot.slane %v3224, 5
      %v3227 = vor.u32 %v3223, %v3226
      %v3228 = vrot.slane %v3227, 4
      %v3230 = vshll.u32 %v3169, 16
      %v3232 = vrot.slane %v3230, 5
      %v3233 = vsel %vm627, %v3228, %v3232
      %v3235 = vshrl.u32 %v3170, 16
      %v3237 = vrot.slane %v3235, 4
      %v3238 = vshll.u32 %v3170, 16
      %v3240 = vrot.slane %v3238, 5
      %v3241 = vor.u32 %v3237, %v3240
      %v3242 = vrot.slane %v3241, 4
      %v3244 = vshll.u32 %v3171, 16
      %v3246 = vrot.slane %v3244, 5
      %v3247 = vsel %vm627, %v3242, %v3246
      %v3249 = vshrl.u32 %v3172, 16
      %v3251 = vrot.slane %v3249, 4
      %v3252 = vshll.u32 %v3172, 16
      %v3254 = vrot.slane %v3252, 5
      %v3255 = vor.u32 %v3251, %v3254
      %v3256 = vrot.slane %v3255, 4
      %v3258 = vshll.u32 %v3173, 16
      %v3260 = vrot.slane %v3258, 5
      %v3261 = vsel %vm627, %v3256, %v3260
      %v3263 = vshrl.u32 %v3174, 16
      %v3265 = vrot.slane %v3263, 4
      %v3266 = vshll.u32 %v3174, 16
      %v3268 = vrot.slane %v3266, 5
      %v3269 = vor.u32 %v3265, %v3268
      %v3270 = vrot.slane %v3269, 4
      %v3272 = vshll.u32 %v3175, 16
      %v3274 = vrot.slane %v3272, 5
      %v3275 = vsel %vm627, %v3270, %v3274
      %v3277 = vshrl.u32 %v3176, 16
      %v3279 = vrot.slane %v3277, 4
      %v3280 = vshll.u32 %v3176, 16
      %v3282 = vrot.slane %v3280, 5
      %v3283 = vor.u32 %v3279, %v3282
      %v3284 = vrot.slane %v3283, 4
      %v3286 = vshll.u32 %v3177, 16
      %v3288 = vrot.slane %v3286, 5
      %v3289 = vsel %vm627, %v3284, %v3288
      %s3290 = scalar_lea.vmem %s3, 256
      %v3291 = vld [vmem:[%s3290] sm:$0xf]
      %v3292 = vld [vmem:[%s3290 + $0x4] sm:$0xf]
      %v3293 = vld [vmem:[%s3290 + $0x8] sm:$0xf]
      %v3294 = vld [vmem:[%s3290 + $0xc] sm:$0xf]
      %v3295 = vld [vmem:[%s3290 + $0x10] sm:$0xf]
      %v3296 = vld [vmem:[%s3290 + $0x14] sm:$0xf]
      %v3297 = vld [vmem:[%s3290 + $0x18] sm:$0xf]
      %v3298 = vld [vmem:[%s3290 + $0x1c] sm:$0xf]
      %v3299 = vld [vmem:[%s3290 + $0x20] sm:$0xf]
      %v3300 = vld [vmem:[%s3290 + $0x24] sm:$0xf]
      %v3301 = vld [vmem:[%s3290 + $0x28] sm:$0xf]
      %v3302 = vld [vmem:[%s3290 + $0x2c] sm:$0xf]
      %v3303 = vld [vmem:[%s3290 + $0x30] sm:$0xf]
      %v3304 = vld [vmem:[%s3290 + $0x34] sm:$0xf]
      %v3305 = vld [vmem:[%s3290 + $0x38] sm:$0xf]
      %v3306 = vld [vmem:[%s3290 + $0x3c] sm:$0xf]
      %v3307 = vunpack.c.l.b16 %v3191
      %v3308 = vunpack.c.l.b16 %v3205
      %v3309 = vunpack.c.l.b16 %v3219
      %v3310 = vunpack.c.l.b16 %v3233
      %v3311 = vunpack.c.l.b16 %v3247
      %v3312 = vunpack.c.l.b16 %v3261
      %v3313 = vunpack.c.l.b16 %v3275
      %v3314 = vunpack.c.l.b16 %v3289
      %v3315 = vpack.c.b16 %v3308, %v3307
      %v3316 = vpack.c.b16 %v3310, %v3309
      %v3317 = vpack.c.b16 %v3312, %v3311
      %v3318 = vpack.c.b16 %v3314, %v3313
      %v3339 = vunpack.c.l.b16 %v3291
      %v3340 = vunpack.c.l.b16 %v3292
      %v3341 = vunpack.c.l.b16 %v3293
      %v3342 = vunpack.c.l.b16 %v3294
      %v3343 = vunpack.c.l.b16 %v3295
      %v3344 = vunpack.c.l.b16 %v3296
      %v3345 = vunpack.c.l.b16 %v3297
      %v3346 = vunpack.c.l.b16 %v3298
      %v3347 = vunpack.c.l.b16 %v3299
      %v3348 = vunpack.c.l.b16 %v3300
      %v3349 = vunpack.c.l.b16 %v3301
      %v3350 = vunpack.c.l.b16 %v3302
      %v3351 = vunpack.c.l.b16 %v3303
      %v3352 = vunpack.c.l.b16 %v3304
      %v3353 = vunpack.c.l.b16 %v3305
      %v3354 = vunpack.c.l.b16 %v3306
      %v3355 = vpack.c.b16 %v3340, %v3339
      %v3356 = vpack.c.b16 %v3342, %v3341
      %v3357 = vpack.c.b16 %v3344, %v3343
      %v3358 = vpack.c.b16 %v3346, %v3345
      %v3359 = vpack.c.b16 %v3348, %v3347
      %v3360 = vpack.c.b16 %v3350, %v3349
      %v3361 = vpack.c.b16 %v3352, %v3351
      %v3362 = vpack.c.b16 %v3354, %v3353
      %3371 = vmatprep.subr.bf16.mxu0 0
      %3372 = vmatpush1.bf16.msra.mxu0 %v3355
      %3373 = vmatprep.subr.bf16.mxu0 0
      %3374 = vmatpush1.bf16.msra.mxu0 %v3356
      %3375 = vmatprep.subr.bf16.mxu0 0
      %3376 = vmatpush1.bf16.msra.mxu0 %v3357
      %3377 = vmatprep.subr.bf16.mxu0 0
      %3378 = vmatpush1.bf16.msra.mxu0 %v3358
      %3379 = vmatprep.subr.bf16.mxu0 0
      %3380 = vmatpush1.bf16.msra.mxu0 %v3359
      %3381 = vmatprep.subr.bf16.mxu0 0
      %3382 = vmatpush1.bf16.msra.mxu0 %v3360
      %3383 = vmatprep.subr.bf16.mxu0 0
      %3384 = vmatpush1.bf16.msra.mxu0 %v3361
      %3385 = vmatprep.subr.bf16.mxu0 0
      %3386 = vmatpush1.bf16.msra.mxu0 %v3362
      %3387 = vmatprep.subr.bf16.mxu0 0
      %3388 = vmatpush1.bf16.msra.mxu0 0
      %3389 = vmatprep.subr.bf16.mxu0 0
      %3390 = vmatpush1.bf16.msra.mxu0 0
      %3391 = vmatprep.subr.bf16.mxu0 0
      %3392 = vmatpush1.bf16.msra.mxu0 0
      %3393 = vmatprep.subr.bf16.mxu0 0
      %3394 = vmatpush1.bf16.msra.mxu0 0
      %3395 = vmatprep.subr.bf16.mxu0 0
      %3396 = vmatpush1.bf16.msra.mxu0 0
      %3397 = vmatprep.subr.bf16.mxu0 0
      %3398 = vmatpush1.bf16.msra.mxu0 0
      %3399 = vmatprep.subr.bf16.mxu0 0
      %3400 = vmatpush1.bf16.msra.mxu0 0
      %3401 = vmatprep.subr.bf16.mxu0 0
      %3402 = vmatpush1.bf16.msra.mxu0 0
      %3403 = vmatprep.mubr.bf16.mxu0 0
      %3404 = vmatmul.mubr.bf16.gmra.mrb[0].mxu0 %v3315
      %v3405 = vpop.f32.mrb[0].mxu0
      %v3406 = vadd.f32 0.0, %v3405
      %v3407 = vpop.f32.mrb[0].mxu0
      %v3408 = vpop.f32.mrb[0].mxu0
      %v3409 = vadd.f32 0.0, %v3408
      %v3410 = vpop.f32.mrb[0].mxu0
      %3411 = vmatprep.mubr.bf16.mxu0 0
      %3412 = vmatmul.mubr.bf16.gmra.mrb[0].mxu0 %v3316
      %v3413 = vpop.f32.mrb[0].mxu0
      %v3414 = vadd.f32 0.0, %v3413
      %v3415 = vpop.f32.mrb[0].mxu0
      %v3416 = vpop.f32.mrb[0].mxu0
      %v3417 = vadd.f32 0.0, %v3416
      %v3418 = vpop.f32.mrb[0].mxu0
      %3419 = vmatprep.mubr.bf16.mxu0 0
      %3420 = vmatmul.mubr.bf16.gmra.mrb[0].mxu0 %v3317
      %v3421 = vpop.f32.mrb[0].mxu0
      %v3422 = vadd.f32 0.0, %v3421
      %v3423 = vpop.f32.mrb[0].mxu0
      %v3424 = vpop.f32.mrb[0].mxu0
      %v3425 = vadd.f32 0.0, %v3424
      %v3426 = vpop.f32.mrb[0].mxu0
      %3427 = vmatprep.mubr.bf16.mxu0 0
      %3428 = vmatmul.mubr.bf16.gmra.mrb[0].mxu0 %v3318
      %v3429 = vpop.f32.mrb[0].mxu0
      %v3430 = vadd.f32 0.0, %v3429
      %v3431 = vpop.f32.mrb[0].mxu0
      %v3432 = vpop.f32.mrb[0].mxu0
      %v3433 = vadd.f32 0.0, %v3432
      %v3434 = vpop.f32.mrb[0].mxu0
      %3435 = vdwg.mxu0
      %v3436 = vadd.f32 %v3154, %v3406
      %v3437 = vadd.f32 %v3155, %v3409
      %v3438 = vadd.f32 %v3156, %v3414
      %v3439 = vadd.f32 %v3157, %v3417
      %v3440 = vadd.f32 %v3158, %v3422
      %v3441 = vadd.f32 %v3159, %v3425
      %v3442 = vadd.f32 %v3160, %v3430
      %v3443 = vadd.f32 %v3161, %v3433
      %v3444 = vld [vmem:[%s2297] sm:$0xe]
      %v3445 = vld [vmem:[%s2297 + $0x8] sm:$0xe]
      %v3446 = vld [vmem:[%s2297 + $0x10] sm:$0xe]
      %v3447 = vld [vmem:[%s2297 + $0x18] sm:$0xe]
      %v3448 = vld [vmem:[%s2297 + $0x20] sm:$0xe]
      %v3449 = vld [vmem:[%s2297 + $0x28] sm:$0xe]
      %v3450 = vld [vmem:[%s2297 + $0x30] sm:$0xe]
      %v3451 = vld [vmem:[%s2297 + $0x38] sm:$0xe]
      %v3468 = vrot.slane %v3444, 5
      %v3469 = vrot.slane %v3468, 4
      %v3470 = vrot.slane %v3163, 5
      %v3471 = vsel %vm2805, %v3469, %v3470
      %v3472 = vrot.slane %v3445, 5
      %v3473 = vrot.slane %v3472, 4
      %v3474 = vrot.slane %v3165, 5
      %v3475 = vsel %vm2805, %v3473, %v3474
      %v3476 = vrot.slane %v3446, 5
      %v3477 = vrot.slane %v3476, 4
      %v3478 = vrot.slane %v3167, 5
      %v3479 = vsel %vm2805, %v3477, %v3478
      %v3480 = vrot.slane %v3447, 5
      %v3481 = vrot.slane %v3480, 4
      %v3482 = vrot.slane %v3169, 5
      %v3483 = vsel %vm2805, %v3481, %v3482
      %v3484 = vrot.slane %v3448, 5
      %v3485 = vrot.slane %v3484, 4
      %v3486 = vrot.slane %v3171, 5
      %v3487 = vsel %vm2805, %v3485, %v3486
      %v3488 = vrot.slane %v3449, 5
      %v3489 = vrot.slane %v3488, 4
      %v3490 = vrot.slane %v3173, 5
      %v3491 = vsel %vm2805, %v3489, %v3490
      %v3492 = vrot.slane %v3450, 5
      %v3493 = vrot.slane %v3492, 4
      %v3494 = vrot.slane %v3175, 5
      %v3495 = vsel %vm2805, %v3493, %v3494
      %v3496 = vrot.slane %v3451, 5
      %v3497 = vrot.slane %v3496, 4
      %v3498 = vrot.slane %v3177, 5
      %v3499 = vsel %vm2805, %v3497, %v3498
      %s3500 = scalar_lea.vmem %s3, 320
      %v3501 = vld [vmem:[%s3500] sm:$0xf]
      %v3502 = vld [vmem:[%s3500 + $0x4] sm:$0xf]
      %v3503 = vld [vmem:[%s3500 + $0x8] sm:$0xf]
      %v3504 = vld [vmem:[%s3500 + $0xc] sm:$0xf]
      %v3505 = vld [vmem:[%s3500 + $0x10] sm:$0xf]
      %v3506 = vld [vmem:[%s3500 + $0x14] sm:$0xf]
      %v3507 = vld [vmem:[%s3500 + $0x18] sm:$0xf]
      %v3508 = vld [vmem:[%s3500 + $0x1c] sm:$0xf]
      %v3509 = vld [vmem:[%s3500 + $0x20] sm:$0xf]
      %v3510 = vld [vmem:[%s3500 + $0x24] sm:$0xf]
      %v3511 = vld [vmem:[%s3500 + $0x28] sm:$0xf]
      %v3512 = vld [vmem:[%s3500 + $0x2c] sm:$0xf]
      %v3513 = vld [vmem:[%s3500 + $0x30] sm:$0xf]
      %v3514 = vld [vmem:[%s3500 + $0x34] sm:$0xf]
      %v3515 = vld [vmem:[%s3500 + $0x38] sm:$0xf]
      %v3516 = vld [vmem:[%s3500 + $0x3c] sm:$0xf]
      %v3517 = vunpack.c.l.b16 %v3471
      %v3518 = vunpack.c.l.b16 %v3475
      %v3519 = vunpack.c.l.b16 %v3479
      %v3520 = vunpack.c.l.b16 %v3483
      %v3521 = vunpack.c.l.b16 %v3487
      %v3522 = vunpack.c.l.b16 %v3491
      %v3523 = vunpack.c.l.b16 %v3495
      %v3524 = vunpack.c.l.b16 %v3499
      %v3525 = vpack.c.b16 %v3518, %v3517
      %v3526 = vpack.c.b16 %v3520, %v3519
      %v3527 = vpack.c.b16 %v3522, %v3521
      %v3528 = vpack.c.b16 %v3524, %v3523
      %v3549 = vunpack.c.l.b16 %v3501
      %v3550 = vunpack.c.l.b16 %v3502
      %v3551 = vunpack.c.l.b16 %v3503
      %v3552 = vunpack.c.l.b16 %v3504
      %v3553 = vunpack.c.l.b16 %v3505
      %v3554 = vunpack.c.l.b16 %v3506
      %v3555 = vunpack.c.l.b16 %v3507
      %v3556 = vunpack.c.l.b16 %v3508
      %v3557 = vunpack.c.l.b16 %v3509
      %v3558 = vunpack.c.l.b16 %v3510
      %v3559 = vunpack.c.l.b16 %v3511
      %v3560 = vunpack.c.l.b16 %v3512
      %v3561 = vunpack.c.l.b16 %v3513
      %v3562 = vunpack.c.l.b16 %v3514
      %v3563 = vunpack.c.l.b16 %v3515
      %v3564 = vunpack.c.l.b16 %v3516
      %v3565 = vpack.c.b16 %v3550, %v3549
      %v3566 = vpack.c.b16 %v3552, %v3551
      %v3567 = vpack.c.b16 %v3554, %v3553
      %v3568 = vpack.c.b16 %v3556, %v3555
      %v3569 = vpack.c.b16 %v3558, %v3557
      %v3570 = vpack.c.b16 %v3560, %v3559
      %v3571 = vpack.c.b16 %v3562, %v3561
      %v3572 = vpack.c.b16 %v3564, %v3563
      %3581 = vmatprep.subr.bf16.mxu0 0
      %3582 = vmatpush1.bf16.msra.mxu0 %v3565
      %3583 = vmatprep.subr.bf16.mxu0 0
      %3584 = vmatpush1.bf16.msra.mxu0 %v3566
      %3585 = vmatprep.subr.bf16.mxu0 0
      %3586 = vmatpush1.bf16.msra.mxu0 %v3567
      %3587 = vmatprep.subr.bf16.mxu0 0
      %3588 = vmatpush1.bf16.msra.mxu0 %v3568
      %3589 = vmatprep.subr.bf16.mxu0 0
      %3590 = vmatpush1.bf16.msra.mxu0 %v3569
      %3591 = vmatprep.subr.bf16.mxu0 0
      %3592 = vmatpush1.bf16.msra.mxu0 %v3570
      %3593 = vmatprep.subr.bf16.mxu0 0
      %3594 = vmatpush1.bf16.msra.mxu0 %v3571
      %3595 = vmatprep.subr.bf16.mxu0 0
      %3596 = vmatpush1.bf16.msra.mxu0 %v3572
      %3597 = vmatprep.subr.bf16.mxu0 0
      %3598 = vmatpush1.bf16.msra.mxu0 0
      %3599 = vmatprep.subr.bf16.mxu0 0
      %3600 = vmatpush1.bf16.msra.mxu0 0
      %3601 = vmatprep.subr.bf16.mxu0 0
      %3602 = vmatpush1.bf16.msra.mxu0 0
      %3603 = vmatprep.subr.bf16.mxu0 0
      %3604 = vmatpush1.bf16.msra.mxu0 0
      %3605 = vmatprep.subr.bf16.mxu0 0
      %3606 = vmatpush1.bf16.msra.mxu0 0
      %3607 = vmatprep.subr.bf16.mxu0 0
      %3608 = vmatpush1.bf16.msra.mxu0 0
      %3609 = vmatprep.subr.bf16.mxu0 0
      %3610 = vmatpush1.bf16.msra.mxu0 0
      %3611 = vmatprep.subr.bf16.mxu0 0
      %3612 = vmatpush1.bf16.msra.mxu0 0
      %3613 = vmatprep.mubr.bf16.mxu0 0
      %3614 = vmatmul.mubr.bf16.gmra.mrb[0].mxu0 %v3525
      %v3615 = vpop.f32.mrb[0].mxu0
      %v3616 = vadd.f32 0.0, %v3615
      %v3617 = vpop.f32.mrb[0].mxu0
      %v3618 = vpop.f32.mrb[0].mxu0
      %v3619 = vadd.f32 0.0, %v3618
      %v3620 = vpop.f32.mrb[0].mxu0
      %3621 = vmatprep.mubr.bf16.mxu0 0
      %3622 = vmatmul.mubr.bf16.gmra.mrb[0].mxu0 %v3526
      %v3623 = vpop.f32.mrb[0].mxu0
      %v3624 = vadd.f32 0.0, %v3623
      %v3625 = vpop.f32.mrb[0].mxu0
      %v3626 = vpop.f32.mrb[0].mxu0
      %v3627 = vadd.f32 0.0, %v3626
      %v3628 = vpop.f32.mrb[0].mxu0
      %3629 = vmatprep.mubr.bf16.mxu0 0
      %3630 = vmatmul.mubr.bf16.gmra.mrb[0].mxu0 %v3527
      %v3631 = vpop.f32.mrb[0].mxu0
      %v3632 = vadd.f32 0.0, %v3631
      %v3633 = vpop.f32.mrb[0].mxu0
      %v3634 = vpop.f32.mrb[0].mxu0
      %v3635 = vadd.f32 0.0, %v3634
      %v3636 = vpop.f32.mrb[0].mxu0
      %3637 = vmatprep.mubr.bf16.mxu0 0
      %3638 = vmatmul.mubr.bf16.gmra.mrb[0].mxu0 %v3528
      %v3639 = vpop.f32.mrb[0].mxu0
      %v3640 = vadd.f32 0.0, %v3639
      %v3641 = vpop.f32.mrb[0].mxu0
      %v3642 = vpop.f32.mrb[0].mxu0
      %v3643 = vadd.f32 0.0, %v3642
      %v3644 = vpop.f32.mrb[0].mxu0
      %3645 = vdwg.mxu0
      %v3646 = vadd.f32 %v3436, %v3616
      %v3647 = vadd.f32 %v3437, %v3619
      %v3648 = vadd.f32 %v3438, %v3624
      %v3649 = vadd.f32 %v3439, %v3627
      %v3650 = vadd.f32 %v3440, %v3632
      %v3651 = vadd.f32 %v3441, %v3635
      %v3652 = vadd.f32 %v3442, %v3640
      %v3653 = vadd.f32 %v3443, %v3643
      %s3654 = scalar_lea.vmem [#allocation2], 16
      %v3655 = vld [vmem:[%s3654] sm:$0xf]
      %v3656 = vld [vmem:[%s3654 + $0x8] sm:$0xf]
      %v3657 = vld [vmem:[%s3654 + $0x10] sm:$0xf]
      %v3658 = vld [vmem:[%s3654 + $0x18] sm:$0xf]
      %v3659 = vld [vmem:[%s3654 + $0x20] sm:$0xf]
      %v3660 = vld [vmem:[%s3654 + $0x28] sm:$0xf]
      %v3661 = vld [vmem:[%s3654 + $0x30] sm:$0xf]
      %v3662 = vld [vmem:[%s3654 + $0x38] sm:$0xf]
      %s3663 = scalar_lea.vmem %s3, 384
      %v3664 = vld [vmem:[%s3663] sm:$0xf]
      %v3665 = vld [vmem:[%s3663 + $0x4] sm:$0xf]
      %v3666 = vld [vmem:[%s3663 + $0x8] sm:$0xf]
      %v3667 = vld [vmem:[%s3663 + $0xc] sm:$0xf]
      %v3668 = vld [vmem:[%s3663 + $0x10] sm:$0xf]
      %v3669 = vld [vmem:[%s3663 + $0x14] sm:$0xf]
      %v3670 = vld [vmem:[%s3663 + $0x18] sm:$0xf]
      %v3671 = vld [vmem:[%s3663 + $0x1c] sm:$0xf]
      %v3672 = vld [vmem:[%s3663 + $0x20] sm:$0xf]
      %v3673 = vld [vmem:[%s3663 + $0x24] sm:$0xf]
      %v3674 = vld [vmem:[%s3663 + $0x28] sm:$0xf]
      %v3675 = vld [vmem:[%s3663 + $0x2c] sm:$0xf]
      %v3676 = vld [vmem:[%s3663 + $0x30] sm:$0xf]
      %v3677 = vld [vmem:[%s3663 + $0x34] sm:$0xf]
      %v3678 = vld [vmem:[%s3663 + $0x38] sm:$0xf]
      %v3679 = vld [vmem:[%s3663 + $0x3c] sm:$0xf]
      %v3688 = vunpack.c.l.b16 %v3655
      %v3689 = vunpack.c.l.b16 %v3656
      %v3690 = vunpack.c.l.b16 %v3657
      %v3691 = vunpack.c.l.b16 %v3658
      %v3692 = vunpack.c.l.b16 %v3659
      %v3693 = vunpack.c.l.b16 %v3660
      %v3694 = vunpack.c.l.b16 %v3661
      %v3695 = vunpack.c.l.b16 %v3662
      %v3696 = vpack.c.b16 %v3689, %v3688
      %v3697 = vpack.c.b16 %v3691, %v3690
      %v3698 = vpack.c.b16 %v3693, %v3692
      %v3699 = vpack.c.b16 %v3695, %v3694
      %v3720 = vunpack.c.l.b16 %v3664
      %v3721 = vunpack.c.l.b16 %v3665
      %v3722 = vunpack.c.l.b16 %v3666
      %v3723 = vunpack.c.l.b16 %v3667
      %v3724 = vunpack.c.l.b16 %v3668
      %v3725 = vunpack.c.l.b16 %v3669
      %v3726 = vunpack.c.l.b16 %v3670
      %v3727 = vunpack.c.l.b16 %v3671
      %v3728 = vunpack.c.l.b16 %v3672
      %v3729 = vunpack.c.l.b16 %v3673
      %v3730 = vunpack.c.l.b16 %v3674
      %v3731 = vunpack.c.l.b16 %v3675
      %v3732 = vunpack.c.l.b16 %v3676
      %v3733 = vunpack.c.l.b16 %v3677
      %v3734 = vunpack.c.l.b16 %v3678
      %v3735 = vunpack.c.l.b16 %v3679
      %v3736 = vpack.c.b16 %v3721, %v3720
      %v3737 = vpack.c.b16 %v3723, %v3722
      %v3738 = vpack.c.b16 %v3725, %v3724
      %v3739 = vpack.c.b16 %v3727, %v3726
      %v3740 = vpack.c.b16 %v3729, %v3728
      %v3741 = vpack.c.b16 %v3731, %v3730
      %v3742 = vpack.c.b16 %v3733, %v3732
      %v3743 = vpack.c.b16 %v3735, %v3734
      %3752 = vmatprep.subr.bf16.mxu0 0
      %3753 = vmatpush1.bf16.msra.mxu0 %v3736
      %3754 = vmatprep.subr.bf16.mxu0 0
      %3755 = vmatpush1.bf16.msra.mxu0 %v3737
      %3756 = vmatprep.subr.bf16.mxu0 0
      %3757 = vmatpush1.bf16.msra.mxu0 %v3738
      %3758 = vmatprep.subr.bf16.mxu0 0
      %3759 = vmatpush1.bf16.msra.mxu0 %v3739
      %3760 = vmatprep.subr.bf16.mxu0 0
      %3761 = vmatpush1.bf16.msra.mxu0 %v3740
      %3762 = vmatprep.subr.bf16.mxu0 0
      %3763 = vmatpush1.bf16.msra.mxu0 %v3741
      %3764 = vmatprep.subr.bf16.mxu0 0
      %3765 = vmatpush1.bf16.msra.mxu0 %v3742
      %3766 = vmatprep.subr.bf16.mxu0 0
      %3767 = vmatpush1.bf16.msra.mxu0 %v3743
      %3768 = vmatprep.subr.bf16.mxu0 0
      %3769 = vmatpush1.bf16.msra.mxu0 0
      %3770 = vmatprep.subr.bf16.mxu0 0
      %3771 = vmatpush1.bf16.msra.mxu0 0
      %3772 = vmatprep.subr.bf16.mxu0 0
      %3773 = vmatpush1.bf16.msra.mxu0 0
      %3774 = vmatprep.subr.bf16.mxu0 0
      %3775 = vmatpush1.bf16.msra.mxu0 0
      %3776 = vmatprep.subr.bf16.mxu0 0
      %3777 = vmatpush1.bf16.msra.mxu0 0
      %3778 = vmatprep.subr.bf16.mxu0 0
      %3779 = vmatpush1.bf16.msra.mxu0 0
      %3780 = vmatprep.subr.bf16.mxu0 0
      %3781 = vmatpush1.bf16.msra.mxu0 0
      %3782 = vmatprep.subr.bf16.mxu0 0
      %3783 = vmatpush1.bf16.msra.mxu0 0
      %3784 = vmatprep.mubr.bf16.mxu0 0
      %3785 = vmatmul.mubr.bf16.gmra.mrb[0].mxu0 %v3696
      %v3786 = vpop.f32.mrb[0].mxu0
      %v3787 = vadd.f32 0.0, %v3786
      %v3788 = vpop.f32.mrb[0].mxu0
      %v3789 = vpop.f32.mrb[0].mxu0
      %v3790 = vadd.f32 0.0, %v3789
      %v3791 = vpop.f32.mrb[0].mxu0
      %3792 = vmatprep.mubr.bf16.mxu0 0
      %3793 = vmatmul.mubr.bf16.gmra.mrb[0].mxu0 %v3697
      %v3794 = vpop.f32.mrb[0].mxu0
      %v3795 = vadd.f32 0.0, %v3794
      %v3796 = vpop.f32.mrb[0].mxu0
      %v3797 = vpop.f32.mrb[0].mxu0
      %v3798 = vadd.f32 0.0, %v3797
      %v3799 = vpop.f32.mrb[0].mxu0
      %3800 = vmatprep.mubr.bf16.mxu0 0
      %3801 = vmatmul.mubr.bf16.gmra.mrb[0].mxu0 %v3698
      %v3802 = vpop.f32.mrb[0].mxu0
      %v3803 = vadd.f32 0.0, %v3802
      %v3804 = vpop.f32.mrb[0].mxu0
      %v3805 = vpop.f32.mrb[0].mxu0
      %v3806 = vadd.f32 0.0, %v3805
      %v3807 = vpop.f32.mrb[0].mxu0
      %3808 = vmatprep.mubr.bf16.mxu0 0
      %3809 = vmatmul.mubr.bf16.gmra.mrb[0].mxu0 %v3699
      %v3810 = vpop.f32.mrb[0].mxu0
      %v3811 = vadd.f32 0.0, %v3810
      %v3812 = vpop.f32.mrb[0].mxu0
      %v3813 = vpop.f32.mrb[0].mxu0
      %v3814 = vadd.f32 0.0, %v3813
      %v3815 = vpop.f32.mrb[0].mxu0
      %3816 = vdwg.mxu0
      %v3817 = vadd.f32 %v3646, %v3787
      %v3818 = vadd.f32 %v3647, %v3790
      %v3819 = vadd.f32 %v3648, %v3795
      %v3820 = vadd.f32 %v3649, %v3798
      %v3821 = vadd.f32 %v3650, %v3803
      %v3822 = vadd.f32 %v3651, %v3806
      %v3823 = vadd.f32 %v3652, %v3811
      %v3824 = vadd.f32 %v3653, %v3814
      %v3825 = vld [vmem:[%s3654] sm:$0xf]
      %v3826 = vld [vmem:[%s3654 + $0x4] sm:$0x1]
      %v3827 = vld [vmem:[%s3654 + $0x8] sm:$0xf]
      %v3828 = vld [vmem:[%s3654 + $0xc] sm:$0x1]
      %v3829 = vld [vmem:[%s3654 + $0x10] sm:$0xf]
      %v3830 = vld [vmem:[%s3654 + $0x14] sm:$0x1]
      %v3831 = vld [vmem:[%s3654 + $0x18] sm:$0xf]
      %v3832 = vld [vmem:[%s3654 + $0x1c] sm:$0x1]
      %v3833 = vld [vmem:[%s3654 + $0x20] sm:$0xf]
      %v3834 = vld [vmem:[%s3654 + $0x24] sm:$0x1]
      %v3835 = vld [vmem:[%s3654 + $0x28] sm:$0xf]
      %v3836 = vld [vmem:[%s3654 + $0x2c] sm:$0x1]
      %v3837 = vld [vmem:[%s3654 + $0x30] sm:$0xf]
      %v3838 = vld [vmem:[%s3654 + $0x34] sm:$0x1]
      %v3839 = vld [vmem:[%s3654 + $0x38] sm:$0xf]
      %v3840 = vld [vmem:[%s3654 + $0x3c] sm:$0x1]
      %v3842 = vshrl.u32 %v3825, 16
      %v3844 = vrot.slane %v3842, 4
      %v3845 = vshll.u32 %v3825, 16
      %v3847 = vrot.slane %v3845, 5
      %v3848 = vor.u32 %v3844, %v3847
      %v3849 = vrot.slane %v3848, 4
      %v3851 = vshll.u32 %v3826, 16
      %v3853 = vrot.slane %v3851, 5
      %v3854 = vsel %vm627, %v3849, %v3853
      %v3856 = vshrl.u32 %v3827, 16
      %v3858 = vrot.slane %v3856, 4
      %v3859 = vshll.u32 %v3827, 16
      %v3861 = vrot.slane %v3859, 5
      %v3862 = vor.u32 %v3858, %v3861
      %v3863 = vrot.slane %v3862, 4
      %v3865 = vshll.u32 %v3828, 16
      %v3867 = vrot.slane %v3865, 5
      %v3868 = vsel %vm627, %v3863, %v3867
      %v3870 = vshrl.u32 %v3829, 16
      %v3872 = vrot.slane %v3870, 4
      %v3873 = vshll.u32 %v3829, 16
      %v3875 = vrot.slane %v3873, 5
      %v3876 = vor.u32 %v3872, %v3875
      %v3877 = vrot.slane %v3876, 4
      %v3879 = vshll.u32 %v3830, 16
      %v3881 = vrot.slane %v3879, 5
      %v3882 = vsel %vm627, %v3877, %v3881
      %v3884 = vshrl.u32 %v3831, 16
      %v3886 = vrot.slane %v3884, 4
      %v3887 = vshll.u32 %v3831, 16
      %v3889 = vrot.slane %v3887, 5
      %v3890 = vor.u32 %v3886, %v3889
      %v3891 = vrot.slane %v3890, 4
      %v3893 = vshll.u32 %v3832, 16
      %v3895 = vrot.slane %v3893, 5
      %v3896 = vsel %vm627, %v3891, %v3895
      %v3898 = vshrl.u32 %v3833, 16
      %v3900 = vrot.slane %v3898, 4
      %v3901 = vshll.u32 %v3833, 16
      %v3903 = vrot.slane %v3901, 5
      %v3904 = vor.u32 %v3900, %v3903
      %v3905 = vrot.slane %v3904, 4
      %v3907 = vshll.u32 %v3834, 16
      %v3909 = vrot.slane %v3907, 5
      %v3910 = vsel %vm627, %v3905, %v3909
      %v3912 = vshrl.u32 %v3835, 16
      %v3914 = vrot.slane %v3912, 4
      %v3915 = vshll.u32 %v3835, 16
      %v3917 = vrot.slane %v3915, 5
      %v3918 = vor.u32 %v3914, %v3917
      %v3919 = vrot.slane %v3918, 4
      %v3921 = vshll.u32 %v3836, 16
      %v3923 = vrot.slane %v3921, 5
      %v3924 = vsel %vm627, %v3919, %v3923
      %v3926 = vshrl.u32 %v3837, 16
      %v3928 = vrot.slane %v3926, 4
      %v3929 = vshll.u32 %v3837, 16
      %v3931 = vrot.slane %v3929, 5
      %v3932 = vor.u32 %v3928, %v3931
      %v3933 = vrot.slane %v3932, 4
      %v3935 = vshll.u32 %v3838, 16
      %v3937 = vrot.slane %v3935, 5
      %v3938 = vsel %vm627, %v3933, %v3937
      %v3940 = vshrl.u32 %v3839, 16
      %v3942 = vrot.slane %v3940, 4
      %v3943 = vshll.u32 %v3839, 16
      %v3945 = vrot.slane %v3943, 5
      %v3946 = vor.u32 %v3942, %v3945
      %v3947 = vrot.slane %v3946, 4
      %v3949 = vshll.u32 %v3840, 16
      %v3951 = vrot.slane %v3949, 5
      %v3952 = vsel %vm627, %v3947, %v3951
      %s3953 = scalar_lea.vmem %s3, 448
      %v3954 = vld [vmem:[%s3953] sm:$0xf]
      %v3955 = vld [vmem:[%s3953 + $0x4] sm:$0xf]
      %v3956 = vld [vmem:[%s3953 + $0x8] sm:$0xf]
      %v3957 = vld [vmem:[%s3953 + $0xc] sm:$0xf]
      %v3958 = vld [vmem:[%s3953 + $0x10] sm:$0xf]
      %v3959 = vld [vmem:[%s3953 + $0x14] sm:$0xf]
      %v3960 = vld [vmem:[%s3953 + $0x18] sm:$0xf]
      %v3961 = vld [vmem:[%s3953 + $0x1c] sm:$0xf]
      %v3962 = vld [vmem:[%s3953 + $0x20] sm:$0xf]
      %v3963 = vld [vmem:[%s3953 + $0x24] sm:$0xf]
      %v3964 = vld [vmem:[%s3953 + $0x28] sm:$0xf]
      %v3965 = vld [vmem:[%s3953 + $0x2c] sm:$0xf]
      %v3966 = vld [vmem:[%s3953 + $0x30] sm:$0xf]
      %v3967 = vld [vmem:[%s3953 + $0x34] sm:$0xf]
      %v3968 = vld [vmem:[%s3953 + $0x38] sm:$0xf]
      %v3969 = vld [vmem:[%s3953 + $0x3c] sm:$0xf]
      %v3970 = vunpack.c.l.b16 %v3854
      %v3971 = vunpack.c.l.b16 %v3868
      %v3972 = vunpack.c.l.b16 %v3882
      %v3973 = vunpack.c.l.b16 %v3896
      %v3974 = vunpack.c.l.b16 %v3910
      %v3975 = vunpack.c.l.b16 %v3924
      %v3976 = vunpack.c.l.b16 %v3938
      %v3977 = vunpack.c.l.b16 %v3952
      %v3978 = vpack.c.b16 %v3971, %v3970
      %v3979 = vpack.c.b16 %v3973, %v3972
      %v3980 = vpack.c.b16 %v3975, %v3974
      %v3981 = vpack.c.b16 %v3977, %v3976
      %v4002 = vunpack.c.l.b16 %v3954
      %v4003 = vunpack.c.l.b16 %v3955
      %v4004 = vunpack.c.l.b16 %v3956
      %v4005 = vunpack.c.l.b16 %v3957
      %v4006 = vunpack.c.l.b16 %v3958
      %v4007 = vunpack.c.l.b16 %v3959
      %v4008 = vunpack.c.l.b16 %v3960
      %v4009 = vunpack.c.l.b16 %v3961
      %v4010 = vunpack.c.l.b16 %v3962
      %v4011 = vunpack.c.l.b16 %v3963
      %v4012 = vunpack.c.l.b16 %v3964
      %v4013 = vunpack.c.l.b16 %v3965
      %v4014 = vunpack.c.l.b16 %v3966
      %v4015 = vunpack.c.l.b16 %v3967
      %v4016 = vunpack.c.l.b16 %v3968
      %v4017 = vunpack.c.l.b16 %v3969
      %v4018 = vpack.c.b16 %v4003, %v4002
      %v4019 = vpack.c.b16 %v4005, %v4004
      %v4020 = vpack.c.b16 %v4007, %v4006
      %v4021 = vpack.c.b16 %v4009, %v4008
      %v4022 = vpack.c.b16 %v4011, %v4010
      %v4023 = vpack.c.b16 %v4013, %v4012
      %v4024 = vpack.c.b16 %v4015, %v4014
      %v4025 = vpack.c.b16 %v4017, %v4016
      %4034 = vmatprep.subr.bf16.mxu0 0
      %4035 = vmatpush1.bf16.msra.mxu0 %v4018
      %4036 = vmatprep.subr.bf16.mxu0 0
      %4037 = vmatpush1.bf16.msra.mxu0 %v4019
      %4038 = vmatprep.subr.bf16.mxu0 0
      %4039 = vmatpush1.bf16.msra.mxu0 %v4020
      %4040 = vmatprep.subr.bf16.mxu0 0
      %4041 = vmatpush1.bf16.msra.mxu0 %v4021
      %4042 = vmatprep.subr.bf16.mxu0 0
      %4043 = vmatpush1.bf16.msra.mxu0 %v4022
      %4044 = vmatprep.subr.bf16.mxu0 0
      %4045 = vmatpush1.bf16.msra.mxu0 %v4023
      %4046 = vmatprep.subr.bf16.mxu0 0
      %4047 = vmatpush1.bf16.msra.mxu0 %v4024
      %4048 = vmatprep.subr.bf16.mxu0 0
      %4049 = vmatpush1.bf16.msra.mxu0 %v4025
      %4050 = vmatprep.subr.bf16.mxu0 0
      %4051 = vmatpush1.bf16.msra.mxu0 0
      %4052 = vmatprep.subr.bf16.mxu0 0
      %4053 = vmatpush1.bf16.msra.mxu0 0
      %4054 = vmatprep.subr.bf16.mxu0 0
      %4055 = vmatpush1.bf16.msra.mxu0 0
      %4056 = vmatprep.subr.bf16.mxu0 0
      %4057 = vmatpush1.bf16.msra.mxu0 0
      %4058 = vmatprep.subr.bf16.mxu0 0
      %4059 = vmatpush1.bf16.msra.mxu0 0
      %4060 = vmatprep.subr.bf16.mxu0 0
      %4061 = vmatpush1.bf16.msra.mxu0 0
      %4062 = vmatprep.subr.bf16.mxu0 0
      %4063 = vmatpush1.bf16.msra.mxu0 0
      %4064 = vmatprep.subr.bf16.mxu0 0
      %4065 = vmatpush1.bf16.msra.mxu0 0
      %4066 = vmatprep.mubr.bf16.mxu0 0
      %4067 = vmatmul.mubr.bf16.gmra.mrb[0].mxu0 %v3978
      %v4068 = vpop.f32.mrb[0].mxu0
      %v4069 = vadd.f32 0.0, %v4068
      %v4070 = vpop.f32.mrb[0].mxu0
      %v4071 = vpop.f32.mrb[0].mxu0
      %v4072 = vadd.f32 0.0, %v4071
      %v4073 = vpop.f32.mrb[0].mxu0
      %4074 = vmatprep.mubr.bf16.mxu0 0
      %4075 = vmatmul.mubr.bf16.gmra.mrb[0].mxu0 %v3979
      %v4076 = vpop.f32.mrb[0].mxu0
      %v4077 = vadd.f32 0.0, %v4076
      %v4078 = vpop.f32.mrb[0].mxu0
      %v4079 = vpop.f32.mrb[0].mxu0
      %v4080 = vadd.f32 0.0, %v4079
      %v4081 = vpop.f32.mrb[0].mxu0
      %4082 = vmatprep.mubr.bf16.mxu0 0
      %4083 = vmatmul.mubr.bf16.gmra.mrb[0].mxu0 %v3980
      %v4084 = vpop.f32.mrb[0].mxu0
      %v4085 = vadd.f32 0.0, %v4084
      %v4086 = vpop.f32.mrb[0].mxu0
      %v4087 = vpop.f32.mrb[0].mxu0
      %v4088 = vadd.f32 0.0, %v4087
      %v4089 = vpop.f32.mrb[0].mxu0
      %4090 = vmatprep.mubr.bf16.mxu0 0
      %4091 = vmatmul.mubr.bf16.gmra.mrb[0].mxu0 %v3981
      %v4092 = vpop.f32.mrb[0].mxu0
      %v4093 = vadd.f32 0.0, %v4092
      %v4094 = vpop.f32.mrb[0].mxu0
      %v4095 = vpop.f32.mrb[0].mxu0
      %v4096 = vadd.f32 0.0, %v4095
      %v4097 = vpop.f32.mrb[0].mxu0
      %4098 = vdwg.mxu0
      %v4099 = vadd.f32 %v3817, %v4069
      %v4100 = vadd.f32 %v3818, %v4072
      %v4101 = vadd.f32 %v3819, %v4077
      %v4102 = vadd.f32 %v3820, %v4080
      %v4103 = vadd.f32 %v3821, %v4085
      %v4104 = vadd.f32 %v3822, %v4088
      %v4105 = vadd.f32 %v3823, %v4093
      %v4106 = vadd.f32 %v3824, %v4096
      %v4107 = vld [vmem:[%s3654] sm:$0xe]
      %v4108 = vld [vmem:[%s3654 + $0x8] sm:$0xe]
      %v4109 = vld [vmem:[%s3654 + $0x10] sm:$0xe]
      %v4110 = vld [vmem:[%s3654 + $0x18] sm:$0xe]
      %v4111 = vld [vmem:[%s3654 + $0x20] sm:$0xe]
      %v4112 = vld [vmem:[%s3654 + $0x28] sm:$0xe]
      %v4113 = vld [vmem:[%s3654 + $0x30] sm:$0xe]
      %v4114 = vld [vmem:[%s3654 + $0x38] sm:$0xe]
      %v4131 = vrot.slane %v4107, 5
      %v4132 = vrot.slane %v4131, 4
      %v4133 = vrot.slane %v3826, 5
      %v4134 = vsel %vm2805, %v4132, %v4133
      %v4135 = vrot.slane %v4108, 5
      %v4136 = vrot.slane %v4135, 4
      %v4137 = vrot.slane %v3828, 5
      %v4138 = vsel %vm2805, %v4136, %v4137
      %v4139 = vrot.slane %v4109, 5
      %v4140 = vrot.slane %v4139, 4
      %v4141 = vrot.slane %v3830, 5
      %v4142 = vsel %vm2805, %v4140, %v4141
      %v4143 = vrot.slane %v4110, 5
      %v4144 = vrot.slane %v4143, 4
      %v4145 = vrot.slane %v3832, 5
      %v4146 = vsel %vm2805, %v4144, %v4145
      %v4147 = vrot.slane %v4111, 5
      %v4148 = vrot.slane %v4147, 4
      %v4149 = vrot.slane %v3834, 5
      %v4150 = vsel %vm2805, %v4148, %v4149
      %v4151 = vrot.slane %v4112, 5
      %v4152 = vrot.slane %v4151, 4
      %v4153 = vrot.slane %v3836, 5
      %v4154 = vsel %vm2805, %v4152, %v4153
      %v4155 = vrot.slane %v4113, 5
      %v4156 = vrot.slane %v4155, 4
      %v4157 = vrot.slane %v3838, 5
      %v4158 = vsel %vm2805, %v4156, %v4157
      %v4159 = vrot.slane %v4114, 5
      %v4160 = vrot.slane %v4159, 4
      %v4161 = vrot.slane %v3840, 5
      %v4162 = vsel %vm2805, %v4160, %v4161
      %s4163 = scalar_lea.vmem %s3, 512
      %v4164 = vld [vmem:[%s4163] sm:$0xf]
      %v4165 = vld [vmem:[%s4163 + $0x4] sm:$0xf]
      %v4166 = vld [vmem:[%s4163 + $0x8] sm:$0xf]
      %v4167 = vld [vmem:[%s4163 + $0xc] sm:$0xf]
      %v4168 = vld [vmem:[%s4163 + $0x10] sm:$0xf]
      %v4169 = vld [vmem:[%s4163 + $0x14] sm:$0xf]
      %v4170 = vld [vmem:[%s4163 + $0x18] sm:$0xf]
      %v4171 = vld [vmem:[%s4163 + $0x1c] sm:$0xf]
      %v4172 = vld [vmem:[%s4163 + $0x20] sm:$0xf]
      %v4173 = vld [vmem:[%s4163 + $0x24] sm:$0xf]
      %v4174 = vld [vmem:[%s4163 + $0x28] sm:$0xf]
      %v4175 = vld [vmem:[%s4163 + $0x2c] sm:$0xf]
      %v4176 = vld [vmem:[%s4163 + $0x30] sm:$0xf]
      %v4177 = vld [vmem:[%s4163 + $0x34] sm:$0xf]
      %v4178 = vld [vmem:[%s4163 + $0x38] sm:$0xf]
      %v4179 = vld [vmem:[%s4163 + $0x3c] sm:$0xf]
      %v4180 = vunpack.c.l.b16 %v4134
      %v4181 = vunpack.c.l.b16 %v4138
      %v4182 = vunpack.c.l.b16 %v4142
      %v4183 = vunpack.c.l.b16 %v4146
      %v4184 = vunpack.c.l.b16 %v4150
      %v4185 = vunpack.c.l.b16 %v4154
      %v4186 = vunpack.c.l.b16 %v4158
      %v4187 = vunpack.c.l.b16 %v4162
      %v4188 = vpack.c.b16 %v4181, %v4180
      %v4189 = vpack.c.b16 %v4183, %v4182
      %v4190 = vpack.c.b16 %v4185, %v4184
      %v4191 = vpack.c.b16 %v4187, %v4186
      %v4212 = vunpack.c.l.b16 %v4164
      %v4213 = vunpack.c.l.b16 %v4165
      %v4214 = vunpack.c.l.b16 %v4166
      %v4215 = vunpack.c.l.b16 %v4167
      %v4216 = vunpack.c.l.b16 %v4168
      %v4217 = vunpack.c.l.b16 %v4169
      %v4218 = vunpack.c.l.b16 %v4170
      %v4219 = vunpack.c.l.b16 %v4171
      %v4220 = vunpack.c.l.b16 %v4172
      %v4221 = vunpack.c.l.b16 %v4173
      %v4222 = vunpack.c.l.b16 %v4174
      %v4223 = vunpack.c.l.b16 %v4175
      %v4224 = vunpack.c.l.b16 %v4176
      %v4225 = vunpack.c.l.b16 %v4177
      %v4226 = vunpack.c.l.b16 %v4178
      %v4227 = vunpack.c.l.b16 %v4179
      %v4228 = vpack.c.b16 %v4213, %v4212
      %v4229 = vpack.c.b16 %v4215, %v4214
      %v4230 = vpack.c.b16 %v4217, %v4216
      %v4231 = vpack.c.b16 %v4219, %v4218
      %v4232 = vpack.c.b16 %v4221, %v4220
      %v4233 = vpack.c.b16 %v4223, %v4222
      %v4234 = vpack.c.b16 %v4225, %v4224
      %v4235 = vpack.c.b16 %v4227, %v4226
      %4244 = vmatprep.subr.bf16.mxu0 0
      %4245 = vmatpush1.bf16.msra.mxu0 %v4228
      %4246 = vmatprep.subr.bf16.mxu0 0
      %4247 = vmatpush1.bf16.msra.mxu0 %v4229
      %4248 = vmatprep.subr.bf16.mxu0 0
      %4249 = vmatpush1.bf16.msra.mxu0 %v4230
      %4250 = vmatprep.subr.bf16.mxu0 0
      %4251 = vmatpush1.bf16.msra.mxu0 %v4231
      %4252 = vmatprep.subr.bf16.mxu0 0
      %4253 = vmatpush1.bf16.msra.mxu0 %v4232
      %4254 = vmatprep.subr.bf16.mxu0 0
      %4255 = vmatpush1.bf16.msra.mxu0 %v4233
      %4256 = vmatprep.subr.bf16.mxu0 0
      %4257 = vmatpush1.bf16.msra.mxu0 %v4234
      %4258 = vmatprep.subr.bf16.mxu0 0
      %4259 = vmatpush1.bf16.msra.mxu0 %v4235
      %4260 = vmatprep.subr.bf16.mxu0 0
      %4261 = vmatpush1.bf16.msra.mxu0 0
      %4262 = vmatprep.subr.bf16.mxu0 0
      %4263 = vmatpush1.bf16.msra.mxu0 0
      %4264 = vmatprep.subr.bf16.mxu0 0
      %4265 = vmatpush1.bf16.msra.mxu0 0
      %4266 = vmatprep.subr.bf16.mxu0 0
      %4267 = vmatpush1.bf16.msra.mxu0 0
      %4268 = vmatprep.subr.bf16.mxu0 0
      %4269 = vmatpush1.bf16.msra.mxu0 0
      %4270 = vmatprep.subr.bf16.mxu0 0
      %4271 = vmatpush1.bf16.msra.mxu0 0
      %4272 = vmatprep.subr.bf16.mxu0 0
      %4273 = vmatpush1.bf16.msra.mxu0 0
      %4274 = vmatprep.subr.bf16.mxu0 0
      %4275 = vmatpush1.bf16.msra.mxu0 0
      %4276 = vmatprep.mubr.bf16.mxu0 0
      %4277 = vmatmul.mubr.bf16.gmra.mrb[0].mxu0 %v4188
      %v4278 = vpop.f32.mrb[0].mxu0
      %v4279 = vadd.f32 0.0, %v4278
      %v4280 = vpop.f32.mrb[0].mxu0
      %v4281 = vpop.f32.mrb[0].mxu0
      %v4282 = vadd.f32 0.0, %v4281
      %v4283 = vpop.f32.mrb[0].mxu0
      %4284 = vmatprep.mubr.bf16.mxu0 0
      %4285 = vmatmul.mubr.bf16.gmra.mrb[0].mxu0 %v4189
      %v4286 = vpop.f32.mrb[0].mxu0
      %v4287 = vadd.f32 0.0, %v4286
      %v4288 = vpop.f32.mrb[0].mxu0
      %v4289 = vpop.f32.mrb[0].mxu0
      %v4290 = vadd.f32 0.0, %v4289
      %v4291 = vpop.f32.mrb[0].mxu0
      %4292 = vmatprep.mubr.bf16.mxu0 0
      %4293 = vmatmul.mubr.bf16.gmra.mrb[0].mxu0 %v4190
      %v4294 = vpop.f32.mrb[0].mxu0
      %v4295 = vadd.f32 0.0, %v4294
      %v4296 = vpop.f32.mrb[0].mxu0
      %v4297 = vpop.f32.mrb[0].mxu0
      %v4298 = vadd.f32 0.0, %v4297
      %v4299 = vpop.f32.mrb[0].mxu0
      %4300 = vmatprep.mubr.bf16.mxu0 0
      %4301 = vmatmul.mubr.bf16.gmra.mrb[0].mxu0 %v4191
      %v4302 = vpop.f32.mrb[0].mxu0
      %v4303 = vadd.f32 0.0, %v4302
      %v4304 = vpop.f32.mrb[0].mxu0
      %v4305 = vpop.f32.mrb[0].mxu0
      %v4306 = vadd.f32 0.0, %v4305
      %v4307 = vpop.f32.mrb[0].mxu0
      %4308 = vdwg.mxu0
      %v4309 = vadd.f32 %v4099, %v4279
      %v4310 = vadd.f32 %v4100, %v4282
      %v4311 = vadd.f32 %v4101, %v4287
      %v4312 = vadd.f32 %v4102, %v4290
      %v4313 = vadd.f32 %v4103, %v4295
      %v4314 = vadd.f32 %v4104, %v4298
      %v4315 = vadd.f32 %v4105, %v4303
      %v4316 = vadd.f32 %v4106, %v4306
      %v4317 = vld [vmem:[%s4] sm:$0x1]
      %v4319 = vlaneseq
      %v4320 = vshrl.u32 %v4319, 7
      %v4321 = vsub.s32 0, %v4320
      %v4322 = vrot.slane %v4317, %v4321
      %v4324 = vadd.f32 %v4309, %v4322
      %v4325 = vadd.f32 %v4310, %v4322
      %v4326 = vadd.f32 %v4311, %v4322
      %v4327 = vadd.f32 %v4312, %v4322
      %v4328 = vadd.f32 %v4313, %v4322
      %v4329 = vadd.f32 %v4314, %v4322
      %v4330 = vadd.f32 %v4315, %v4322
      %v4331 = vadd.f32 %v4316, %v4322
      %v4332 = vld [vmem:[%s1065] sm:$0xf]
      %v4333 = vld [vmem:[%s1065 + $0x8] sm:$0xf]
      %v4334 = vld [vmem:[%s1065 + $0x10] sm:$0xf]
      %v4335 = vld [vmem:[%s1065 + $0x18] sm:$0xf]
      %v4336 = vld [vmem:[%s1065 + $0x20] sm:$0xf]
      %v4337 = vld [vmem:[%s1065 + $0x28] sm:$0xf]
      %v4338 = vld [vmem:[%s1065 + $0x30] sm:$0xf]
      %v4339 = vld [vmem:[%s1065 + $0x38] sm:$0xf]
      %v4340 = vld [vmem:[%s5] sm:$0xf]
      %v4341 = vld [vmem:[%s5 + $0x4] sm:$0xf]
      %v4342 = vld [vmem:[%s5 + $0x8] sm:$0xf]
      %v4343 = vld [vmem:[%s5 + $0xc] sm:$0xf]
      %v4344 = vld [vmem:[%s5 + $0x10] sm:$0xf]
      %v4345 = vld [vmem:[%s5 + $0x14] sm:$0xf]
      %v4346 = vld [vmem:[%s5 + $0x18] sm:$0xf]
      %v4347 = vld [vmem:[%s5 + $0x1c] sm:$0xf]
      %v4348 = vld [vmem:[%s5 + $0x20] sm:$0xf]
      %v4349 = vld [vmem:[%s5 + $0x24] sm:$0xf]
      %v4350 = vld [vmem:[%s5 + $0x28] sm:$0xf]
      %v4351 = vld [vmem:[%s5 + $0x2c] sm:$0xf]
      %v4352 = vld [vmem:[%s5 + $0x30] sm:$0xf]
      %v4353 = vld [vmem:[%s5 + $0x34] sm:$0xf]
      %v4354 = vld [vmem:[%s5 + $0x38] sm:$0xf]
      %v4355 = vld [vmem:[%s5 + $0x3c] sm:$0xf]
      %v4364 = vunpack.c.l.b16 %v4332
      %v4365 = vunpack.c.l.b16 %v4333
      %v4366 = vunpack.c.l.b16 %v4334
      %v4367 = vunpack.c.l.b16 %v4335
      %v4368 = vunpack.c.l.b16 %v4336
      %v4369 = vunpack.c.l.b16 %v4337
      %v4370 = vunpack.c.l.b16 %v4338
      %v4371 = vunpack.c.l.b16 %v4339
      %v4372 = vpack.c.b16 %v4365, %v4364
      %v4373 = vpack.c.b16 %v4367, %v4366
      %v4374 = vpack.c.b16 %v4369, %v4368
      %v4375 = vpack.c.b16 %v4371, %v4370
      %v4396 = vunpack.c.l.b16 %v4340
      %v4397 = vunpack.c.l.b16 %v4341
      %v4398 = vunpack.c.l.b16 %v4342
      %v4399 = vunpack.c.l.b16 %v4343
      %v4400 = vunpack.c.l.b16 %v4344
      %v4401 = vunpack.c.l.b16 %v4345
      %v4402 = vunpack.c.l.b16 %v4346
      %v4403 = vunpack.c.l.b16 %v4347
      %v4404 = vunpack.c.l.b16 %v4348
      %v4405 = vunpack.c.l.b16 %v4349
      %v4406 = vunpack.c.l.b16 %v4350
      %v4407 = vunpack.c.l.b16 %v4351
      %v4408 = vunpack.c.l.b16 %v4352
      %v4409 = vunpack.c.l.b16 %v4353
      %v4410 = vunpack.c.l.b16 %v4354
      %v4411 = vunpack.c.l.b16 %v4355
      %v4412 = vpack.c.b16 %v4397, %v4396
      %v4413 = vpack.c.b16 %v4399, %v4398
      %v4414 = vpack.c.b16 %v4401, %v4400
      %v4415 = vpack.c.b16 %v4403, %v4402
      %v4416 = vpack.c.b16 %v4405, %v4404
      %v4417 = vpack.c.b16 %v4407, %v4406
      %v4418 = vpack.c.b16 %v4409, %v4408
      %v4419 = vpack.c.b16 %v4411, %v4410
      %4428 = vmatprep.subr.bf16.mxu0 0
      %4429 = vmatpush1.bf16.msra.mxu0 %v4412
      %4430 = vmatprep.subr.bf16.mxu0 0
      %4431 = vmatpush1.bf16.msra.mxu0 %v4413
      %4432 = vmatprep.subr.bf16.mxu0 0
      %4433 = vmatpush1.bf16.msra.mxu0 %v4414
      %4434 = vmatprep.subr.bf16.mxu0 0
      %4435 = vmatpush1.bf16.msra.mxu0 %v4415
      %4436 = vmatprep.subr.bf16.mxu0 0
      %4437 = vmatpush1.bf16.msra.mxu0 %v4416
      %4438 = vmatprep.subr.bf16.mxu0 0
      %4439 = vmatpush1.bf16.msra.mxu0 %v4417
      %4440 = vmatprep.subr.bf16.mxu0 0
      %4441 = vmatpush1.bf16.msra.mxu0 %v4418
      %4442 = vmatprep.subr.bf16.mxu0 0
      %4443 = vmatpush1.bf16.msra.mxu0 %v4419
      %4444 = vmatprep.subr.bf16.mxu0 0
      %4445 = vmatpush1.bf16.msra.mxu0 0
      %4446 = vmatprep.subr.bf16.mxu0 0
      %4447 = vmatpush1.bf16.msra.mxu0 0
      %4448 = vmatprep.subr.bf16.mxu0 0
      %4449 = vmatpush1.bf16.msra.mxu0 0
      %4450 = vmatprep.subr.bf16.mxu0 0
      %4451 = vmatpush1.bf16.msra.mxu0 0
      %4452 = vmatprep.subr.bf16.mxu0 0
      %4453 = vmatpush1.bf16.msra.mxu0 0
      %4454 = vmatprep.subr.bf16.mxu0 0
      %4455 = vmatpush1.bf16.msra.mxu0 0
      %4456 = vmatprep.subr.bf16.mxu0 0
      %4457 = vmatpush1.bf16.msra.mxu0 0
      %4458 = vmatprep.subr.bf16.mxu0 0
      %4459 = vmatpush1.bf16.msra.mxu0 0
      %4460 = vmatprep.mubr.bf16.mxu0 0
      %4461 = vmatmul.mubr.bf16.gmra.mrb[0].mxu0 %v4372
      %v4462 = vpop.f32.mrb[0].mxu0
      %v4463 = vadd.f32 0.0, %v4462
      %v4464 = vpop.f32.mrb[0].mxu0
      %v4465 = vpop.f32.mrb[0].mxu0
      %v4466 = vadd.f32 0.0, %v4465
      %v4467 = vpop.f32.mrb[0].mxu0
      %4468 = vmatprep.mubr.bf16.mxu0 0
      %4469 = vmatmul.mubr.bf16.gmra.mrb[0].mxu0 %v4373
      %v4470 = vpop.f32.mrb[0].mxu0
      %v4471 = vadd.f32 0.0, %v4470
      %v4472 = vpop.f32.mrb[0].mxu0
      %v4473 = vpop.f32.mrb[0].mxu0
      %v4474 = vadd.f32 0.0, %v4473
      %v4475 = vpop.f32.mrb[0].mxu0
      %4476 = vmatprep.mubr.bf16.mxu0 0
      %4477 = vmatmul.mubr.bf16.gmra.mrb[0].mxu0 %v4374
      %v4478 = vpop.f32.mrb[0].mxu0
      %v4479 = vadd.f32 0.0, %v4478
      %v4480 = vpop.f32.mrb[0].mxu0
      %v4481 = vpop.f32.mrb[0].mxu0
      %v4482 = vadd.f32 0.0, %v4481
      %v4483 = vpop.f32.mrb[0].mxu0
      %4484 = vmatprep.mubr.bf16.mxu0 0
      %4485 = vmatmul.mubr.bf16.gmra.mrb[0].mxu0 %v4375
      %v4486 = vpop.f32.mrb[0].mxu0
      %v4487 = vadd.f32 0.0, %v4486
      %v4488 = vpop.f32.mrb[0].mxu0
      %v4489 = vpop.f32.mrb[0].mxu0
      %v4490 = vadd.f32 0.0, %v4489
      %v4491 = vpop.f32.mrb[0].mxu0
      %4492 = vdwg.mxu0
      %v4493 = vadd.f32 %v4324, %v4463
      %v4494 = vadd.f32 %v4325, %v4466
      %v4495 = vadd.f32 %v4326, %v4471
      %v4496 = vadd.f32 %v4327, %v4474
      %v4497 = vadd.f32 %v4328, %v4479
      %v4498 = vadd.f32 %v4329, %v4482
      %v4499 = vadd.f32 %v4330, %v4487
      %v4500 = vadd.f32 %v4331, %v4490
      %v4501 = vld [vmem:[%s6] sm:$0x1]
      %v4503 = vlaneseq
      %v4504 = vshrl.u32 %v4503, 7
      %v4505 = vsub.s32 0, %v4504
      %v4506 = vrot.slane %v4501, %v4505
      %v4508 = vadd.f32 %v4493, %v4506
      %v4509 = vadd.f32 %v4494, %v4506
      %v4510 = vadd.f32 %v4495, %v4506
      %v4511 = vadd.f32 %v4496, %v4506
      %v4512 = vadd.f32 %v4497, %v4506
      %v4513 = vadd.f32 %v4498, %v4506
      %v4514 = vadd.f32 %v4499, %v4506
      %v4515 = vadd.f32 %v4500, %v4506
      %v4516 = vmax.f32 %v4508, 0.0
      %v4517 = vmax.f32 %v4509, 0.0
      %v4518 = vmax.f32 %v4510, 0.0
      %v4519 = vmax.f32 %v4511, 0.0
      %v4520 = vmax.f32 %v4512, 0.0
      %v4521 = vmax.f32 %v4513, 0.0
      %v4522 = vmax.f32 %v4514, 0.0
      %v4523 = vmax.f32 %v4515, 0.0
      %4524 = vst [vmem:[%s283] sm:$0xff] %v4516
      %4525 = vst [vmem:[%s283 + $0x8] sm:$0xff] %v4517
      %4526 = vst [vmem:[%s283 + $0x10] sm:$0xff] %v4518
      %4527 = vst [vmem:[%s283 + $0x18] sm:$0xff] %v4519
      %4528 = vst [vmem:[%s283 + $0x20] sm:$0xff] %v4520
      %4529 = vst [vmem:[%s283 + $0x28] sm:$0xff] %v4521
      %4530 = vst [vmem:[%s283 + $0x30] sm:$0xff] %v4522
      %4531 = vst [vmem:[%s283 + $0x38] sm:$0xff] %v4523
      %p4532 = scmp.lt.s32.totalorder %s18, 1
      %s4533 = scalar_select %p4532, %s18, 1
      %s4534 = smul.addr %s4533, 8
      %s4535 = smul.addr %s4534, 8
      %s4536 = scalar_lea.vmem %s7, %s4535
      // Predicated region
      $region49: #{basic_block_forward.1} parent=47 // pred_check
        %p4537 = pneg %p188
      $region50: #{basic_block_forward.1} parent=47 // pred_check_branch
        %4539 = sbr.rel (%p4537) target = $region52
      $region51: #{basic_block_forward.1} parent=47 // pred_region
        _
      $region52: #{basic_block_forward.1} parent=47 // pred_fallthru
        _
    $region48: #{basic_block_forward.1} parent=5 // pred_fallthru
      _
    %p4540 = scmp.le.s32.totalorder 2, %s13
    // Predicated region
    $region53: #{basic_block_forward.1} parent=5 // pred_check
      %p4541 = pneg %p4540
    $region54: #{basic_block_forward.1} parent=5 // pred_check_branch
      %4543 = sbr.rel (%p4541) target = $region56
    $region55: #{basic_block_forward.1} parent=5 // pred_region
      %s4544 = ssub.s32 %s13, 2
      // Predicated region
      $region57: #{basic_block_forward.1} parent=55 // pred_check
        %p4545 = pneg %p194
      $region58: #{basic_block_forward.1} parent=55 // pred_check_branch
        %4547 = sbr.rel (%p4545) target = $region60
      $region59: #{basic_block_forward.1} parent=55 // pred_region
        %p4548 = scmp.lt.s32.totalorder %s19, 1
        %s4549 = scalar_select %p4548, %s19, 1
        %s4550 = smul.addr %s4549, 8
        %s4551 = smul.addr %s4550, 8
        %s4552 = scalar_lea.vmem %s7, %s4551
      $region60: #{basic_block_forward.1} parent=55 // pred_fallthru
        _
    $region56: #{basic_block_forward.1} parent=5 // pred_fallthru
      _
  $region6: #{basic_block_forward.1} parent=0 // loop_footer
    %s17 = sadd.s32 1, %s13
  $region7: #{basic_block_forward.1} parent=0 // loop_footer_branch
    %12 = sbr.rel target = $region3
  $region8: #{basic_block_forward.1} parent=0 // loop_exit
    _

</llo_original>
